<compile_context>
chip_gen: v5e
topology: v5e:2x2
jax: 0.10.0
libtpu: 0.0.40
codegen_flags: <defaults>
</compile_context>

<pallas_src>
import jax
import jax.numpy as jnp
import numpy as np
from jax.experimental import pallas as pl
from jax.experimental.pallas import tpu as pltpu

PATCH_SIZE = 64
HIDDEN_DIM = 256
NUM_CLASSES = 2
HEAD_PAD = 128  # lane-dense classification head width


def _make_kernel(T, TC, B, H, pad_time, unroll):
    """Fused LSTM + classification kernel for static (T, TC, B, H)."""

    def kernel(x_ref, wih_ref, whh_ref, b_ref, wc_ref, bc_ref, out_ref,
               xg_sc, h_sc, c_sc):
        ci = pl.program_id(0)

        # ---- Init persistent state on first chunk ----
        @pl.when(ci == 0)
        def _():
            h_sc[...] = jnp.zeros_like(h_sc)
            c_sc[...] = jnp.zeros_like(c_sc)

        # ---- Per-chunk input projection: one MXU pass for TC timesteps ----
        # (TC*B, P) bf16 @ (P, 4H) bf16 -> f32, bias added once, stored bf16.
        xg_sc[...] = (
            jnp.dot(x_ref[...], wih_ref[...],
                    preferred_element_type=jnp.float32) + b_ref[...]
        ).astype(jnp.bfloat16)

        def sigm(g):
            # tanh-form sigmoid: single EUP op instead of exp + reciprocal.
            return 0.5 * jnp.tanh(0.5 * g) + 0.5

        # ---- Sequential recurrence within the chunk ----
        def step(t, carry):
            h, c = carry                              # h: bf16, c: f32
            base = pl.multiple_of(t * B, 8)           # sublane-aligned rows
            g_x = xg_sc[pl.ds(base, B), :].astype(jnp.float32)
            gates = g_x + jnp.dot(h, whh_ref[...],
                                  preferred_element_type=jnp.float32)
            i_g = sigm(gates[:, 0 * H:1 * H])
            f_g = sigm(gates[:, 1 * H:2 * H])
            g_g = jnp.tanh(gates[:, 2 * H:3 * H])
            o_g = sigm(gates[:, 3 * H:4 * H])
            c_new = f_g * c + i_g * g_g
            h_new = (o_g * jnp.tanh(c_new)).astype(jnp.bfloat16)
            if pad_time:
                # Freeze h/c on zero-padded tail timesteps.
                valid = (ci * TC + t) < T
                h_new = jnp.where(valid, h_new, h)
                c_new = jnp.where(valid, c_new, c)
            return (h_new, c_new)

        h, c = jax.lax.fori_loop(0, TC, step, (h_sc[...], c_sc[...]),
                                 unroll=unroll)
        h_sc[...] = h
        c_sc[...] = c

        # ---- Classification head on the last chunk (lane-dense output) ----
        @pl.when(ci == pl.num_programs(0) - 1)
        def _():
            out_ref[...] = (
                jnp.dot(h_sc[...], wc_ref[...],
                        preferred_element_type=jnp.float32) + bc_ref[...]
            )

    return kernel


def _vmem_limit_bytes(TC, B, P, H, C_pad):
    x_blk = TC * B * P * 2                                   # bf16 x block
    wts = (P * 4 * H + H * 4 * H + H * C_pad) * 2 + (4 * H + C_pad) * 4
    scratch = TC * B * 4 * H * 2 + B * H * (2 + 4)           # xg + h + c
    out = B * C_pad * 4
    total = 2 * (x_blk + wts + out) + scratch                # double-buffering
    total += 4 << 20                                         # headroom
    return int(min(max(total, 16 << 20), 64 << 20))          # v7x-safe ceiling


@jax.jit
def jcs_lite_forward(x_btp, wih_t, whh_t, b, wc_t, bc):
    """x_btp: (batch, seq, patch_size) f32 -> logits (batch, NUM_CLASSES) f32."""
    B0, T, P = x_btp.shape
    H = whh_t.shape[0]
    C_pad = wc_t.shape[1]

    # Pad batch to a multiple of 8 sublanes (min 8).
    B = max(8, ((B0 + 7) // 8) * 8)

    # Time-chunk size: aim for <=64 steps per chunk, multiple of 8.
    n_chunks = max(1, -(-T // 64))
    TC = -(-T // n_chunks)
    TC = max(8, ((TC + 7) // 8) * 8)
    n_chunks = -(-T // TC)
    T_pad = n_chunks * TC
    pad_time = T_pad != T
    unroll = min(TC, 8)

    # bf16 BEFORE the transpose (halves the HBM-bound data movement pass).
    x_b16 = x_btp.astype(jnp.bfloat16)
    x_pad = jnp.pad(x_b16, ((0, B - B0), (0, T_pad - T), (0, 0)))
    x_flat = jnp.transpose(x_pad, (1, 0, 2)).reshape(T_pad * B, P)

    def full(shape):
        n = len(shape)
        return pl.BlockSpec(shape, lambda ci: (0,) * n)

    out = pl.pallas_call(
        _make_kernel(T, TC, B, H, pad_time, unroll),
        out_shape=jax.ShapeDtypeStruct((B, C_pad), jnp.float32),
        grid=(n_chunks,),
        in_specs=[
            pl.BlockSpec((TC * B, P), lambda ci: (ci, 0)),   # streamed x chunk
            full((P, 4 * H)),                                # W_ih^T
            full((H, 4 * H)),                                # W_hh^T
            full((1, 4 * H)),                                # b_ih + b_hh
            full((H, C_pad)),                                # head weight
            full((1, C_pad)),                                # head bias
        ],
        out_specs=pl.BlockSpec((B, C_pad), lambda ci: (0, 0)),
        scratch_shapes=[
            pltpu.VMEM((TC * B, 4 * H), jnp.bfloat16),       # per-chunk x-gates
            pltpu.VMEM((B, H), jnp.bfloat16),                # h (persists)
            pltpu.VMEM((B, H), jnp.float32),                 # c (persists)
        ],
        compiler_params=pltpu.CompilerParams(
            dimension_semantics=("arbitrary",),
            vmem_limit_bytes=_vmem_limit_bytes(TC, B, P, H, C_pad)),
    )(x_flat, wih_t, whh_t, b, wc_t, bc)

    return out[:B0, :NUM_CLASSES]


def init_params(key, patch_size=PATCH_SIZE, hidden=HIDDEN_DIM,
                num_classes=NUM_CLASSES):
    """Deterministic init matching PyTorch's uniform(-1/sqrt(H), 1/sqrt(H))."""
    ks = jax.random.split(key, 6)
    lim = 1.0 / np.sqrt(hidden)
    u = lambda k, shape: jax.random.uniform(
        k, shape, jnp.float32, minval=-lim, maxval=lim)
    w_ih = u(ks[0], (4 * hidden, patch_size))    # torch layout (4H, P)
    w_hh = u(ks[1], (4 * hidden, hidden))        # torch layout (4H, H)
    b_ih = u(ks[2], (4 * hidden,))
    b_hh = u(ks[3], (4 * hidden,))
    w_c = u(ks[4], (num_classes, hidden))        # torch layout (C, H)
    b_c = u(ks[5], (num_classes,))

    # Lane-dense (zero-padded) classification head.
    wc_t_pad = jnp.zeros((hidden, HEAD_PAD), jnp.float32)
    wc_t_pad = wc_t_pad.at[:, :num_classes].set(w_c.T)
    bc_pad = jnp.zeros((1, HEAD_PAD), jnp.float32)
    bc_pad = bc_pad.at[:, :num_classes].set(b_c)

    # Pre-transpose; matmul operands in bf16, biases / state in f32.
    return dict(
        wih_t=w_ih.T.astype(jnp.bfloat16),            # (P, 4H)
        whh_t=w_hh.T.astype(jnp.bfloat16),            # (H, 4H)
        b=(b_ih + b_hh).reshape(1, 4 * hidden),       # (1, 4H) f32
        wc_t=wc_t_pad.astype(jnp.bfloat16),           # (H, 128)
        bc=bc_pad,                                    # (1, 128) f32
    )


def reference_forward(x_btp, p, num_classes=NUM_CLASSES):
    """Pure-JAX reference (torch.nn.LSTM semantics), bf16 matmul operands with
    f32 accumulation, f32 gate math."""
    B, T, _ = x_btp.shape
    H = p["whh_t"].shape[0]
    x_tbp = jnp.transpose(x_btp, (1, 0, 2)).astype(jnp.bfloat16)  # (T, B, P)

    def step(carry, x_t):
        h, c = carry
        gates = (
            jnp.dot(x_t, p["wih_t"], preferred_element_type=jnp.float32)
            + jnp.dot(h.astype(jnp.bfloat16), p["whh_t"],
                      preferred_element_type=jnp.float32)
            + p["b"]
        )
        i = jax.nn.sigmoid(gates[:, 0 * H:1 * H])
        f = jax.nn.sigmoid(gates[:, 1 * H:2 * H])
        g = jnp.tanh(gates[:, 2 * H:3 * H])
        o = jax.nn.sigmoid(gates[:, 3 * H:4 * H])
        c = f * c + i * g
        h = o * jnp.tanh(c)
        return (h, c), None

    h0 = jnp.zeros((B, H), jnp.float32)
    c0 = jnp.zeros((B, H), jnp.float32)
    (h_last, _), _ = jax.lax.scan(step, (h0, c0), x_tbp)
    logits = (jnp.dot(h_last.astype(jnp.bfloat16), p["wc_t"],
                      preferred_element_type=jnp.float32) + p["bc"])
    return logits[:, :num_classes]


if __name__ == "__main__":
    key = jax.random.PRNGKey(0)
    k_p, k1, k2, k3 = jax.random.split(key, 4)
    params = init_params(k_p)

    # (batch, seq): covers single-chunk, tail-masked, and multi-chunk paths.
    test_cases = [(k1, 2, 8), (k2, 3, 20), (k3, 2, 80)]
    for kx, batch, seq in test_cases:
        x = jax.random.normal(kx, (batch, seq, PATCH_SIZE), jnp.float32)
        logits = jcs_lite_forward(x, params["wih_t"], params["whh_t"],
                                  params["b"], params["wc_t"], params["bc"])
        logits = jax.block_until_ready(logits)
        ref = reference_forward(x, params)
        np.testing.assert_allclose(np.asarray(logits), np.asarray(ref),
                                   rtol=1e-2, atol=1e-2)
        assert logits.shape == (batch, NUM_CLASSES)

    print("KERNEL_OK")
</pallas_src>

<mosaic_0001>
module attributes {stable_mosaic.version = 11 : i64} {
  func.func @kernel(%arg0: i32, %arg1: memref<64x64xbf16, #tpu.memory_space<vmem>>, %arg2: memref<64x1024xbf16, #tpu.memory_space<vmem>>, %arg3: memref<256x1024xbf16, #tpu.memory_space<vmem>>, %arg4: memref<1x1024xf32, #tpu.memory_space<vmem>>, %arg5: memref<256x128xbf16, #tpu.memory_space<vmem>>, %arg6: memref<1x128xf32, #tpu.memory_space<vmem>>, %arg7: memref<8x128xf32, #tpu.memory_space<vmem>>, %arg8: memref<64x1024xbf16, #tpu.memory_space<vmem>>, %arg9: memref<8x256xbf16, #tpu.memory_space<vmem>>, %arg10: memref<8x256xf32, #tpu.memory_space<vmem>>) attributes {dimension_semantics = [#tpu.dimension_semantics<arbitrary>], iteration_bounds = array<i64: 1>, scalar_prefetch = 0 : i64, scratch_operands = 3 : i64, tpu.core_type = #tpu.core_type<tc>, window_params = [{transform_indices = @transform_0, window_bounds = array<i64: 64, 64>}, {pipeline_mode = #tpu.pipeline_mode<synchronous>, transform_indices = @transform_1, window_bounds = array<i64: 64, 1024>}, {pipeline_mode = #tpu.pipeline_mode<synchronous>, transform_indices = @transform_2, window_bounds = array<i64: 256, 1024>}, {pipeline_mode = #tpu.pipeline_mode<synchronous>, transform_indices = @transform_3, window_bounds = array<i64: 1, 1024>}, {pipeline_mode = #tpu.pipeline_mode<synchronous>, transform_indices = @transform_4, window_bounds = array<i64: 256, 128>}, {pipeline_mode = #tpu.pipeline_mode<synchronous>, transform_indices = @transform_5, window_bounds = array<i64: 1, 128>}, {pipeline_mode = #tpu.pipeline_mode<synchronous>, transform_indices = @transform_6, window_bounds = array<i64: 8, 128>}]} {
    %c0_i32 = arith.constant 0 : i32
    %0 = arith.cmpi eq, %arg0, %c0_i32 : i32
    %1 = arith.extui %0 : i1 to i32
    %c0_i32_0 = arith.constant 0 : i32
    %2 = arith.cmpi ne, %1, %c0_i32_0 : i32
    scf.if %2 {
      %cst_131 = arith.constant 0.000000e+00 : bf16
      %338 = vector.broadcast %cst_131 : bf16 to vector<8x256xbf16>
      %c0_132 = arith.constant 0 : index
      %c0_133 = arith.constant 0 : index
      %339 = vector.load %arg9[%c0_132, %c0_133] : memref<8x256xbf16, #tpu.memory_space<vmem>>, vector<8x256xbf16>
      tpu.vector_store %arg9[%c0_132, %c0_133], %338 {strides = array<i32>} : memref<8x256xbf16, #tpu.memory_space<vmem>>, vector<8x256xbf16>,
      %cst_134 = arith.constant 0.000000e+00 : f32
      %340 = vector.broadcast %cst_134 : f32 to vector<8x256xf32>
      %c0_135 = arith.constant 0 : index
      %c0_136 = arith.constant 0 : index
      %341 = vector.load %arg10[%c0_135, %c0_136] : memref<8x256xf32, #tpu.memory_space<vmem>>, vector<8x256xf32>
      tpu.vector_store %arg10[%c0_135, %c0_136], %340 {strides = array<i32>} : memref<8x256xf32, #tpu.memory_space<vmem>>, vector<8x256xf32>,
    } else {
    }
    %c0 = arith.constant 0 : index
    %c0_1 = arith.constant 0 : index
    %3 = vector.load %arg1[%c0, %c0_1] : memref<64x64xbf16, #tpu.memory_space<vmem>>, vector<64x64xbf16>
    %c0_2 = arith.constant 0 : index
    %c0_3 = arith.constant 0 : index
    %4 = vector.load %arg2[%c0_2, %c0_3] : memref<64x1024xbf16, #tpu.memory_space<vmem>>, vector<64x1024xbf16>
    %cst = arith.constant dense<0.000000e+00> : vector<64x1024xf32>
    %5 = tpu.matmul %3, %4, %cst {dimension_numbers = #tpu.dot_dimension_numbers<[1], [0], [0], [1], [0, 0, 1, 1], [], []>} : vector<64x64xbf16>, vector<64x1024xbf16>, vector<64x1024xf32> -> vector<64x1024xf32>
    %c0_4 = arith.constant 0 : index
    %c0_5 = arith.constant 0 : index
    %6 = vector.load %arg4[%c0_4, %c0_5] : memref<1x1024xf32, #tpu.memory_space<vmem>>, vector<1x1024xf32>
    %7 = vector.broadcast %6 : vector<1x1024xf32> to vector<64x1024xf32>
    %8 = arith.addf %5, %7 : vector<64x1024xf32>
    %9 = arith.truncf %8 : vector<64x1024xf32> to vector<64x1024xbf16>
    %c0_6 = arith.constant 0 : index
    %c0_7 = arith.constant 0 : index
    %10 = vector.load %arg8[%c0_6, %c0_7] : memref<64x1024xbf16, #tpu.memory_space<vmem>>, vector<64x1024xbf16>
    tpu.vector_store %arg8[%c0_6, %c0_7], %9 {strides = array<i32>} : memref<64x1024xbf16, #tpu.memory_space<vmem>>, vector<64x1024xbf16>,
    %c0_8 = arith.constant 0 : index
    %c0_9 = arith.constant 0 : index
    %11 = vector.load %arg9[%c0_8, %c0_9] : memref<8x256xbf16, #tpu.memory_space<vmem>>, vector<8x256xbf16>
    %c0_10 = arith.constant 0 : index
    %c0_11 = arith.constant 0 : index
    %12 = vector.load %arg10[%c0_10, %c0_11] : memref<8x256xf32, #tpu.memory_space<vmem>>, vector<8x256xf32>
    %c0_i32_12 = arith.constant 0 : i32
    %c8_i32 = arith.constant 8 : i32
    %13 = arith.muli %c0_i32_12, %c8_i32 : i32
    %14 = tpu.assume_multiple %13, 8 : i32
    %15 = arith.index_cast %14 : i32 to index
    %c0_13 = arith.constant 0 : index
    %16 = vector.load %arg8[%15, %c0_13] : memref<64x1024xbf16, #tpu.memory_space<vmem>>, vector<8x1024xbf16>
    %17 = arith.extf %16 : vector<8x1024xbf16> to vector<8x1024xf32>
    %c0_14 = arith.constant 0 : index
    %c0_15 = arith.constant 0 : index
    %18 = vector.load %arg3[%c0_14, %c0_15] : memref<256x1024xbf16, #tpu.memory_space<vmem>>, vector<256x1024xbf16>
    %cst_16 = arith.constant dense<0.000000e+00> : vector<8x1024xf32>
    %19 = tpu.matmul %11, %18, %cst_16 {dimension_numbers = #tpu.dot_dimension_numbers<[1], [0], [0], [1], [0, 0, 1, 1], [], []>} : vector<8x256xbf16>, vector<256x1024xbf16>, vector<8x1024xf32> -> vector<8x1024xf32>
    %20 = arith.addf %17, %19 : vector<8x1024xf32>
    %21 = vector.extract_strided_slice %20 {offsets = [0, 0], sizes = [8, 256], strides = [1, 1]} : vector<8x1024xf32> to vector<8x256xf32>
    %cst_17 = arith.constant 5.000000e-01 : f32
    %22 = vector.broadcast %cst_17 : f32 to vector<8x256xf32>
    %23 = arith.mulf %22, %21 : vector<8x256xf32>
    %24 = math.tanh %23 : vector<8x256xf32>
    %cst_18 = arith.constant 5.000000e-01 : f32
    %25 = vector.broadcast %cst_18 : f32 to vector<8x256xf32>
    %26 = arith.mulf %25, %24 : vector<8x256xf32>
    %cst_19 = arith.constant 5.000000e-01 : f32
    %27 = vector.broadcast %cst_19 : f32 to vector<8x256xf32>
    %28 = arith.addf %26, %27 : vector<8x256xf32>
    %29 = vector.extract_strided_slice %20 {offsets = [0, 256], sizes = [8, 256], strides = [1, 1]} : vector<8x1024xf32> to vector<8x256xf32>
    %cst_20 = arith.constant 5.000000e-01 : f32
    %30 = vector.broadcast %cst_20 : f32 to vector<8x256xf32>
    %31 = arith.mulf %30, %29 : vector<8x256xf32>
    %32 = math.tanh %31 : vector<8x256xf32>
    %cst_21 = arith.constant 5.000000e-01 : f32
    %33 = vector.broadcast %cst_21 : f32 to vector<8x256xf32>
    %34 = arith.mulf %33, %32 : vector<8x256xf32>
    %cst_22 = arith.constant 5.000000e-01 : f32
    %35 = vector.broadcast %cst_22 : f32 to vector<8x256xf32>
    %36 = arith.addf %34, %35 : vector<8x256xf32>
    %37 = vector.extract_strided_slice %20 {offsets = [0, 512], sizes = [8, 256], strides = [1, 1]} : vector<8x1024xf32> to vector<8x256xf32>
    %38 = math.tanh %37 : vector<8x256xf32>
    %39 = vector.extract_strided_slice %20 {offsets = [0, 768], sizes = [8, 256], strides = [1, 1]} : vector<8x1024xf32> to vector<8x256xf32>
    %cst_23 = arith.constant 5.000000e-01 : f32
    %40 = vector.broadcast %cst_23 : f32 to vector<8x256xf32>
    %41 = arith.mulf %40, %39 : vector<8x256xf32>
    %42 = math.tanh %41 : vector<8x256xf32>
    %cst_24 = arith.constant 5.000000e-01 : f32
    %43 = vector.broadcast %cst_24 : f32 to vector<8x256xf32>
    %44 = arith.mulf %43, %42 : vector<8x256xf32>
    %cst_25 = arith.constant 5.000000e-01 : f32
    %45 = vector.broadcast %cst_25 : f32 to vector<8x256xf32>
    %46 = arith.addf %44, %45 : vector<8x256xf32>
    %47 = arith.mulf %36, %12 : vector<8x256xf32>
    %48 = arith.mulf %28, %38 : vector<8x256xf32>
    %49 = arith.addf %47, %48 : vector<8x256xf32>
    %50 = math.tanh %49 : vector<8x256xf32>
    %51 = arith.mulf %46, %50 : vector<8x256xf32>
    %52 = arith.truncf %51 : vector<8x256xf32> to vector<8x256xbf16>
    %c1_i32 = arith.constant 1 : i32
    %c8_i32_26 = arith.constant 8 : i32
    %53 = arith.muli %c1_i32, %c8_i32_26 : i32
    %54 = tpu.assume_multiple %53, 8 : i32
    %55 = arith.index_cast %54 : i32 to index
    %c0_27 = arith.constant 0 : index
    %56 = vector.load %arg8[%55, %c0_27] : memref<64x1024xbf16, #tpu.memory_space<vmem>>, vector<8x1024xbf16>
    %57 = arith.extf %56 : vector<8x1024xbf16> to vector<8x1024xf32>
    %c0_28 = arith.constant 0 : index
    %c0_29 = arith.constant 0 : index
    %58 = vector.load %arg3[%c0_28, %c0_29] : memref<256x1024xbf16, #tpu.memory_space<vmem>>, vector<256x1024xbf16>
    %cst_30 = arith.constant dense<0.000000e+00> : vector<8x1024xf32>
    %59 = tpu.matmul %52, %58, %cst_30 {dimension_numbers = #tpu.dot_dimension_numbers<[1], [0], [0], [1], [0, 0, 1, 1], [], []>} : vector<8x256xbf16>, vector<256x1024xbf16>, vector<8x1024xf32> -> vector<8x1024xf32>
    %60 = arith.addf %57, %59 : vector<8x1024xf32>
    %61 = vector.extract_strided_slice %60 {offsets = [0, 0], sizes = [8, 256], strides = [1, 1]} : vector<8x1024xf32> to vector<8x256xf32>
    %cst_31 = arith.constant 5.000000e-01 : f32
    %62 = vector.broadcast %cst_31 : f32 to vector<8x256xf32>
    %63 = arith.mulf %62, %61 : vector<8x256xf32>
    %64 = math.tanh %63 : vector<8x256xf32>
    %cst_32 = arith.constant 5.000000e-01 : f32
    %65 = vector.broadcast %cst_32 : f32 to vector<8x256xf32>
    %66 = arith.mulf %65, %64 : vector<8x256xf32>
    %cst_33 = arith.constant 5.000000e-01 : f32
    %67 = vector.broadcast %cst_33 : f32 to vector<8x256xf32>
    %68 = arith.addf %66, %67 : vector<8x256xf32>
    %69 = vector.extract_strided_slice %60 {offsets = [0, 256], sizes = [8, 256], strides = [1, 1]} : vector<8x1024xf32> to vector<8x256xf32>
    %cst_34 = arith.constant 5.000000e-01 : f32
    %70 = vector.broadcast %cst_34 : f32 to vector<8x256xf32>
    %71 = arith.mulf %70, %69 : vector<8x256xf32>
    %72 = math.tanh %71 : vector<8x256xf32>
    %cst_35 = arith.constant 5.000000e-01 : f32
    %73 = vector.broadcast %cst_35 : f32 to vector<8x256xf32>
    %74 = arith.mulf %73, %72 : vector<8x256xf32>
    %cst_36 = arith.constant 5.000000e-01 : f32
    %75 = vector.broadcast %cst_36 : f32 to vector<8x256xf32>
    %76 = arith.addf %74, %75 : vector<8x256xf32>
    %77 = vector.extract_strided_slice %60 {offsets = [0, 512], sizes = [8, 256], strides = [1, 1]} : vector<8x1024xf32> to vector<8x256xf32>
    %78 = math.tanh %77 : vector<8x256xf32>
    %79 = vector.extract_strided_slice %60 {offsets = [0, 768], sizes = [8, 256], strides = [1, 1]} : vector<8x1024xf32> to vector<8x256xf32>
    %cst_37 = arith.constant 5.000000e-01 : f32
    %80 = vector.broadcast %cst_37 : f32 to vector<8x256xf32>
    %81 = arith.mulf %80, %79 : vector<8x256xf32>
    %82 = math.tanh %81 : vector<8x256xf32>
    %cst_38 = arith.constant 5.000000e-01 : f32
    %83 = vector.broadcast %cst_38 : f32 to vector<8x256xf32>
    %84 = arith.mulf %83, %82 : vector<8x256xf32>
    %cst_39 = arith.constant 5.000000e-01 : f32
    %85 = vector.broadcast %cst_39 : f32 to vector<8x256xf32>
    %86 = arith.addf %84, %85 : vector<8x256xf32>
    %87 = arith.mulf %76, %49 : vector<8x256xf32>
    %88 = arith.mulf %68, %78 : vector<8x256xf32>
    %89 = arith.addf %87, %88 : vector<8x256xf32>
    %90 = math.tanh %89 : vector<8x256xf32>
    %91 = arith.mulf %86, %90 : vector<8x256xf32>
    %92 = arith.truncf %91 : vector<8x256xf32> to vector<8x256xbf16>
    %c2_i32 = arith.constant 2 : i32
    %c8_i32_40 = arith.constant 8 : i32
    %93 = arith.muli %c2_i32, %c8_i32_40 : i32
    %94 = tpu.assume_multiple %93, 8 : i32
    %95 = arith.index_cast %94 : i32 to index
    %c0_41 = arith.constant 0 : index
    %96 = vector.load %arg8[%95, %c0_41] : memref<64x1024xbf16, #tpu.memory_space<vmem>>, vector<8x1024xbf16>
    %97 = arith.extf %96 : vector<8x1024xbf16> to vector<8x1024xf32>
    %c0_42 = arith.constant 0 : index
    %c0_43 = arith.constant 0 : index
    %98 = vector.load %arg3[%c0_42, %c0_43] : memref<256x1024xbf16, #tpu.memory_space<vmem>>, vector<256x1024xbf16>
    %cst_44 = arith.constant dense<0.000000e+00> : vector<8x1024xf32>
    %99 = tpu.matmul %92, %98, %cst_44 {dimension_numbers = #tpu.dot_dimension_numbers<[1], [0], [0], [1], [0, 0, 1, 1], [], []>} : vector<8x256xbf16>, vector<256x1024xbf16>, vector<8x1024xf32> -> vector<8x1024xf32>
    %100 = arith.addf %97, %99 : vector<8x1024xf32>
    %101 = vector.extract_strided_slice %100 {offsets = [0, 0], sizes = [8, 256], strides = [1, 1]} : vector<8x1024xf32> to vector<8x256xf32>
    %cst_45 = arith.constant 5.000000e-01 : f32
    %102 = vector.broadcast %cst_45 : f32 to vector<8x256xf32>
    %103 = arith.mulf %102, %101 : vector<8x256xf32>
    %104 = math.tanh %103 : vector<8x256xf32>
    %cst_46 = arith.constant 5.000000e-01 : f32
    %105 = vector.broadcast %cst_46 : f32 to vector<8x256xf32>
    %106 = arith.mulf %105, %104 : vector<8x256xf32>
    %cst_47 = arith.constant 5.000000e-01 : f32
    %107 = vector.broadcast %cst_47 : f32 to vector<8x256xf32>
    %108 = arith.addf %106, %107 : vector<8x256xf32>
    %109 = vector.extract_strided_slice %100 {offsets = [0, 256], sizes = [8, 256], strides = [1, 1]} : vector<8x1024xf32> to vector<8x256xf32>
    %cst_48 = arith.constant 5.000000e-01 : f32
    %110 = vector.broadcast %cst_48 : f32 to vector<8x256xf32>
    %111 = arith.mulf %110, %109 : vector<8x256xf32>
    %112 = math.tanh %111 : vector<8x256xf32>
    %cst_49 = arith.constant 5.000000e-01 : f32
    %113 = vector.broadcast %cst_49 : f32 to vector<8x256xf32>
    %114 = arith.mulf %113, %112 : vector<8x256xf32>
    %cst_50 = arith.constant 5.000000e-01 : f32
    %115 = vector.broadcast %cst_50 : f32 to vector<8x256xf32>
    %116 = arith.addf %114, %115 : vector<8x256xf32>
    %117 = vector.extract_strided_slice %100 {offsets = [0, 512], sizes = [8, 256], strides = [1, 1]} : vector<8x1024xf32> to vector<8x256xf32>
    %118 = math.tanh %117 : vector<8x256xf32>
    %119 = vector.extract_strided_slice %100 {offsets = [0, 768], sizes = [8, 256], strides = [1, 1]} : vector<8x1024xf32> to vector<8x256xf32>
    %cst_51 = arith.constant 5.000000e-01 : f32
    %120 = vector.broadcast %cst_51 : f32 to vector<8x256xf32>
    %121 = arith.mulf %120, %119 : vector<8x256xf32>
    %122 = math.tanh %121 : vector<8x256xf32>
    %cst_52 = arith.constant 5.000000e-01 : f32
    %123 = vector.broadcast %cst_52 : f32 to vector<8x256xf32>
    %124 = arith.mulf %123, %122 : vector<8x256xf32>
    %cst_53 = arith.constant 5.000000e-01 : f32
    %125 = vector.broadcast %cst_53 : f32 to vector<8x256xf32>
    %126 = arith.addf %124, %125 : vector<8x256xf32>
    %127 = arith.mulf %116, %89 : vector<8x256xf32>
    %128 = arith.mulf %108, %118 : vector<8x256xf32>
    %129 = arith.addf %127, %128 : vector<8x256xf32>
    %130 = math.tanh %129 : vector<8x256xf32>
    %131 = arith.mulf %126, %130 : vector<8x256xf32>
    %132 = arith.truncf %131 : vector<8x256xf32> to vector<8x256xbf16>
    %c3_i32 = arith.constant 3 : i32
    %c8_i32_54 = arith.constant 8 : i32
    %133 = arith.muli %c3_i32, %c8_i32_54 : i32
    %134 = tpu.assume_multiple %133, 8 : i32
    %135 = arith.index_cast %134 : i32 to index
    %c0_55 = arith.constant 0 : index
    %136 = vector.load %arg8[%135, %c0_55] : memref<64x1024xbf16, #tpu.memory_space<vmem>>, vector<8x1024xbf16>
    %137 = arith.extf %136 : vector<8x1024xbf16> to vector<8x1024xf32>
    %c0_56 = arith.constant 0 : index
    %c0_57 = arith.constant 0 : index
    %138 = vector.load %arg3[%c0_56, %c0_57] : memref<256x1024xbf16, #tpu.memory_space<vmem>>, vector<256x1024xbf16>
    %cst_58 = arith.constant dense<0.000000e+00> : vector<8x1024xf32>
    %139 = tpu.matmul %132, %138, %cst_58 {dimension_numbers = #tpu.dot_dimension_numbers<[1], [0], [0], [1], [0, 0, 1, 1], [], []>} : vector<8x256xbf16>, vector<256x1024xbf16>, vector<8x1024xf32> -> vector<8x1024xf32>
    %140 = arith.addf %137, %139 : vector<8x1024xf32>
    %141 = vector.extract_strided_slice %140 {offsets = [0, 0], sizes = [8, 256], strides = [1, 1]} : vector<8x1024xf32> to vector<8x256xf32>
    %cst_59 = arith.constant 5.000000e-01 : f32
    %142 = vector.broadcast %cst_59 : f32 to vector<8x256xf32>
    %143 = arith.mulf %142, %141 : vector<8x256xf32>
    %144 = math.tanh %143 : vector<8x256xf32>
    %cst_60 = arith.constant 5.000000e-01 : f32
    %145 = vector.broadcast %cst_60 : f32 to vector<8x256xf32>
    %146 = arith.mulf %145, %144 : vector<8x256xf32>
    %cst_61 = arith.constant 5.000000e-01 : f32
    %147 = vector.broadcast %cst_61 : f32 to vector<8x256xf32>
    %148 = arith.addf %146, %147 : vector<8x256xf32>
    %149 = vector.extract_strided_slice %140 {offsets = [0, 256], sizes = [8, 256], strides = [1, 1]} : vector<8x1024xf32> to vector<8x256xf32>
    %cst_62 = arith.constant 5.000000e-01 : f32
    %150 = vector.broadcast %cst_62 : f32 to vector<8x256xf32>
    %151 = arith.mulf %150, %149 : vector<8x256xf32>
    %152 = math.tanh %151 : vector<8x256xf32>
    %cst_63 = arith.constant 5.000000e-01 : f32
    %153 = vector.broadcast %cst_63 : f32 to vector<8x256xf32>
    %154 = arith.mulf %153, %152 : vector<8x256xf32>
    %cst_64 = arith.constant 5.000000e-01 : f32
    %155 = vector.broadcast %cst_64 : f32 to vector<8x256xf32>
    %156 = arith.addf %154, %155 : vector<8x256xf32>
    %157 = vector.extract_strided_slice %140 {offsets = [0, 512], sizes = [8, 256], strides = [1, 1]} : vector<8x1024xf32> to vector<8x256xf32>
    %158 = math.tanh %157 : vector<8x256xf32>
    %159 = vector.extract_strided_slice %140 {offsets = [0, 768], sizes = [8, 256], strides = [1, 1]} : vector<8x1024xf32> to vector<8x256xf32>
    %cst_65 = arith.constant 5.000000e-01 : f32
    %160 = vector.broadcast %cst_65 : f32 to vector<8x256xf32>
    %161 = arith.mulf %160, %159 : vector<8x256xf32>
    %162 = math.tanh %161 : vector<8x256xf32>
    %cst_66 = arith.constant 5.000000e-01 : f32
    %163 = vector.broadcast %cst_66 : f32 to vector<8x256xf32>
    %164 = arith.mulf %163, %162 : vector<8x256xf32>
    %cst_67 = arith.constant 5.000000e-01 : f32
    %165 = vector.broadcast %cst_67 : f32 to vector<8x256xf32>
    %166 = arith.addf %164, %165 : vector<8x256xf32>
    %167 = arith.mulf %156, %129 : vector<8x256xf32>
    %168 = arith.mulf %148, %158 : vector<8x256xf32>
    %169 = arith.addf %167, %168 : vector<8x256xf32>
    %170 = math.tanh %169 : vector<8x256xf32>
    %171 = arith.mulf %166, %170 : vector<8x256xf32>
    %172 = arith.truncf %171 : vector<8x256xf32> to vector<8x256xbf16>
    %c4_i32 = arith.constant 4 : i32
    %c8_i32_68 = arith.constant 8 : i32
    %173 = arith.muli %c4_i32, %c8_i32_68 : i32
    %174 = tpu.assume_multiple %173, 8 : i32
    %175 = arith.index_cast %174 : i32 to index
    %c0_69 = arith.constant 0 : index
    %176 = vector.load %arg8[%175, %c0_69] : memref<64x1024xbf16, #tpu.memory_space<vmem>>, vector<8x1024xbf16>
    %177 = arith.extf %176 : vector<8x1024xbf16> to vector<8x1024xf32>
    %c0_70 = arith.constant 0 : index
    %c0_71 = arith.constant 0 : index
    %178 = vector.load %arg3[%c0_70, %c0_71] : memref<256x1024xbf16, #tpu.memory_space<vmem>>, vector<256x1024xbf16>
    %cst_72 = arith.constant dense<0.000000e+00> : vector<8x1024xf32>
    %179 = tpu.matmul %172, %178, %cst_72 {dimension_numbers = #tpu.dot_dimension_numbers<[1], [0], [0], [1], [0, 0, 1, 1], [], []>} : vector<8x256xbf16>, vector<256x1024xbf16>, vector<8x1024xf32> -> vector<8x1024xf32>
    %180 = arith.addf %177, %179 : vector<8x1024xf32>
    %181 = vector.extract_strided_slice %180 {offsets = [0, 0], sizes = [8, 256], strides = [1, 1]} : vector<8x1024xf32> to vector<8x256xf32>
    %cst_73 = arith.constant 5.000000e-01 : f32
    %182 = vector.broadcast %cst_73 : f32 to vector<8x256xf32>
    %183 = arith.mulf %182, %181 : vector<8x256xf32>
    %184 = math.tanh %183 : vector<8x256xf32>
    %cst_74 = arith.constant 5.000000e-01 : f32
    %185 = vector.broadcast %cst_74 : f32 to vector<8x256xf32>
    %186 = arith.mulf %185, %184 : vector<8x256xf32>
    %cst_75 = arith.constant 5.000000e-01 : f32
    %187 = vector.broadcast %cst_75 : f32 to vector<8x256xf32>
    %188 = arith.addf %186, %187 : vector<8x256xf32>
    %189 = vector.extract_strided_slice %180 {offsets = [0, 256], sizes = [8, 256], strides = [1, 1]} : vector<8x1024xf32> to vector<8x256xf32>
    %cst_76 = arith.constant 5.000000e-01 : f32
    %190 = vector.broadcast %cst_76 : f32 to vector<8x256xf32>
    %191 = arith.mulf %190, %189 : vector<8x256xf32>
    %192 = math.tanh %191 : vector<8x256xf32>
    %cst_77 = arith.constant 5.000000e-01 : f32
    %193 = vector.broadcast %cst_77 : f32 to vector<8x256xf32>
    %194 = arith.mulf %193, %192 : vector<8x256xf32>
    %cst_78 = arith.constant 5.000000e-01 : f32
    %195 = vector.broadcast %cst_78 : f32 to vector<8x256xf32>
    %196 = arith.addf %194, %195 : vector<8x256xf32>
    %197 = vector.extract_strided_slice %180 {offsets = [0, 512], sizes = [8, 256], strides = [1, 1]} : vector<8x1024xf32> to vector<8x256xf32>
    %198 = math.tanh %197 : vector<8x256xf32>
    %199 = vector.extract_strided_slice %180 {offsets = [0, 768], sizes = [8, 256], strides = [1, 1]} : vector<8x1024xf32> to vector<8x256xf32>
    %cst_79 = arith.constant 5.000000e-01 : f32
    %200 = vector.broadcast %cst_79 : f32 to vector<8x256xf32>
    %201 = arith.mulf %200, %199 : vector<8x256xf32>
    %202 = math.tanh %201 : vector<8x256xf32>
    %cst_80 = arith.constant 5.000000e-01 : f32
    %203 = vector.broadcast %cst_80 : f32 to vector<8x256xf32>
    %204 = arith.mulf %203, %202 : vector<8x256xf32>
    %cst_81 = arith.constant 5.000000e-01 : f32
    %205 = vector.broadcast %cst_81 : f32 to vector<8x256xf32>
    %206 = arith.addf %204, %205 : vector<8x256xf32>
    %207 = arith.mulf %196, %169 : vector<8x256xf32>
    %208 = arith.mulf %188, %198 : vector<8x256xf32>
    %209 = arith.addf %207, %208 : vector<8x256xf32>
    %210 = math.tanh %209 : vector<8x256xf32>
    %211 = arith.mulf %206, %210 : vector<8x256xf32>
    %212 = arith.truncf %211 : vector<8x256xf32> to vector<8x256xbf16>
    %c5_i32 = arith.constant 5 : i32
    %c8_i32_82 = arith.constant 8 : i32
    %213 = arith.muli %c5_i32, %c8_i32_82 : i32
    %214 = tpu.assume_multiple %213, 8 : i32
    %215 = arith.index_cast %214 : i32 to index
    %c0_83 = arith.constant 0 : index
    %216 = vector.load %arg8[%215, %c0_83] : memref<64x1024xbf16, #tpu.memory_space<vmem>>, vector<8x1024xbf16>
    %217 = arith.extf %216 : vector<8x1024xbf16> to vector<8x1024xf32>
    %c0_84 = arith.constant 0 : index
    %c0_85 = arith.constant 0 : index
    %218 = vector.load %arg3[%c0_84, %c0_85] : memref<256x1024xbf16, #tpu.memory_space<vmem>>, vector<256x1024xbf16>
    %cst_86 = arith.constant dense<0.000000e+00> : vector<8x1024xf32>
    %219 = tpu.matmul %212, %218, %cst_86 {dimension_numbers = #tpu.dot_dimension_numbers<[1], [0], [0], [1], [0, 0, 1, 1], [], []>} : vector<8x256xbf16>, vector<256x1024xbf16>, vector<8x1024xf32> -> vector<8x1024xf32>
    %220 = arith.addf %217, %219 : vector<8x1024xf32>
    %221 = vector.extract_strided_slice %220 {offsets = [0, 0], sizes = [8, 256], strides = [1, 1]} : vector<8x1024xf32> to vector<8x256xf32>
    %cst_87 = arith.constant 5.000000e-01 : f32
    %222 = vector.broadcast %cst_87 : f32 to vector<8x256xf32>
    %223 = arith.mulf %222, %221 : vector<8x256xf32>
    %224 = math.tanh %223 : vector<8x256xf32>
    %cst_88 = arith.constant 5.000000e-01 : f32
    %225 = vector.broadcast %cst_88 : f32 to vector<8x256xf32>
    %226 = arith.mulf %225, %224 : vector<8x256xf32>
    %cst_89 = arith.constant 5.000000e-01 : f32
    %227 = vector.broadcast %cst_89 : f32 to vector<8x256xf32>
    %228 = arith.addf %226, %227 : vector<8x256xf32>
    %229 = vector.extract_strided_slice %220 {offsets = [0, 256], sizes = [8, 256], strides = [1, 1]} : vector<8x1024xf32> to vector<8x256xf32>
    %cst_90 = arith.constant 5.000000e-01 : f32
    %230 = vector.broadcast %cst_90 : f32 to vector<8x256xf32>
    %231 = arith.mulf %230, %229 : vector<8x256xf32>
    %232 = math.tanh %231 : vector<8x256xf32>
    %cst_91 = arith.constant 5.000000e-01 : f32
    %233 = vector.broadcast %cst_91 : f32 to vector<8x256xf32>
    %234 = arith.mulf %233, %232 : vector<8x256xf32>
    %cst_92 = arith.constant 5.000000e-01 : f32
    %235 = vector.broadcast %cst_92 : f32 to vector<8x256xf32>
    %236 = arith.addf %234, %235 : vector<8x256xf32>
    %237 = vector.extract_strided_slice %220 {offsets = [0, 512], sizes = [8, 256], strides = [1, 1]} : vector<8x1024xf32> to vector<8x256xf32>
    %238 = math.tanh %237 : vector<8x256xf32>
    %239 = vector.extract_strided_slice %220 {offsets = [0, 768], sizes = [8, 256], strides = [1, 1]} : vector<8x1024xf32> to vector<8x256xf32>
    %cst_93 = arith.constant 5.000000e-01 : f32
    %240 = vector.broadcast %cst_93 : f32 to vector<8x256xf32>
    %241 = arith.mulf %240, %239 : vector<8x256xf32>
    %242 = math.tanh %241 : vector<8x256xf32>
    %cst_94 = arith.constant 5.000000e-01 : f32
    %243 = vector.broadcast %cst_94 : f32 to vector<8x256xf32>
    %244 = arith.mulf %243, %242 : vector<8x256xf32>
    %cst_95 = arith.constant 5.000000e-01 : f32
    %245 = vector.broadcast %cst_95 : f32 to vector<8x256xf32>
    %246 = arith.addf %244, %245 : vector<8x256xf32>
    %247 = arith.mulf %236, %209 : vector<8x256xf32>
    %248 = arith.mulf %228, %238 : vector<8x256xf32>
    %249 = arith.addf %247, %248 : vector<8x256xf32>
    %250 = math.tanh %249 : vector<8x256xf32>
    %251 = arith.mulf %246, %250 : vector<8x256xf32>
    %252 = arith.truncf %251 : vector<8x256xf32> to vector<8x256xbf16>
    %c6_i32 = arith.constant 6 : i32
    %c8_i32_96 = arith.constant 8 : i32
    %253 = arith.muli %c6_i32, %c8_i32_96 : i32
    %254 = tpu.assume_multiple %253, 8 : i32
    %255 = arith.index_cast %254 : i32 to index
    %c0_97 = arith.constant 0 : index
    %256 = vector.load %arg8[%255, %c0_97] : memref<64x1024xbf16, #tpu.memory_space<vmem>>, vector<8x1024xbf16>
    %257 = arith.extf %256 : vector<8x1024xbf16> to vector<8x1024xf32>
    %c0_98 = arith.constant 0 : index
    %c0_99 = arith.constant 0 : index
    %258 = vector.load %arg3[%c0_98, %c0_99] : memref<256x1024xbf16, #tpu.memory_space<vmem>>, vector<256x1024xbf16>
    %cst_100 = arith.constant dense<0.000000e+00> : vector<8x1024xf32>
    %259 = tpu.matmul %252, %258, %cst_100 {dimension_numbers = #tpu.dot_dimension_numbers<[1], [0], [0], [1], [0, 0, 1, 1], [], []>} : vector<8x256xbf16>, vector<256x1024xbf16>, vector<8x1024xf32> -> vector<8x1024xf32>
    %260 = arith.addf %257, %259 : vector<8x1024xf32>
    %261 = vector.extract_strided_slice %260 {offsets = [0, 0], sizes = [8, 256], strides = [1, 1]} : vector<8x1024xf32> to vector<8x256xf32>
    %cst_101 = arith.constant 5.000000e-01 : f32
    %262 = vector.broadcast %cst_101 : f32 to vector<8x256xf32>
    %263 = arith.mulf %262, %261 : vector<8x256xf32>
    %264 = math.tanh %263 : vector<8x256xf32>
    %cst_102 = arith.constant 5.000000e-01 : f32
    %265 = vector.broadcast %cst_102 : f32 to vector<8x256xf32>
    %266 = arith.mulf %265, %264 : vector<8x256xf32>
    %cst_103 = arith.constant 5.000000e-01 : f32
    %267 = vector.broadcast %cst_103 : f32 to vector<8x256xf32>
    %268 = arith.addf %266, %267 : vector<8x256xf32>
    %269 = vector.extract_strided_slice %260 {offsets = [0, 256], sizes = [8, 256], strides = [1, 1]} : vector<8x1024xf32> to vector<8x256xf32>
    %cst_104 = arith.constant 5.000000e-01 : f32
    %270 = vector.broadcast %cst_104 : f32 to vector<8x256xf32>
    %271 = arith.mulf %270, %269 : vector<8x256xf32>
    %272 = math.tanh %271 : vector<8x256xf32>
    %cst_105 = arith.constant 5.000000e-01 : f32
    %273 = vector.broadcast %cst_105 : f32 to vector<8x256xf32>
    %274 = arith.mulf %273, %272 : vector<8x256xf32>
    %cst_106 = arith.constant 5.000000e-01 : f32
    %275 = vector.broadcast %cst_106 : f32 to vector<8x256xf32>
    %276 = arith.addf %274, %275 : vector<8x256xf32>
    %277 = vector.extract_strided_slice %260 {offsets = [0, 512], sizes = [8, 256], strides = [1, 1]} : vector<8x1024xf32> to vector<8x256xf32>
    %278 = math.tanh %277 : vector<8x256xf32>
    %279 = vector.extract_strided_slice %260 {offsets = [0, 768], sizes = [8, 256], strides = [1, 1]} : vector<8x1024xf32> to vector<8x256xf32>
    %cst_107 = arith.constant 5.000000e-01 : f32
    %280 = vector.broadcast %cst_107 : f32 to vector<8x256xf32>
    %281 = arith.mulf %280, %279 : vector<8x256xf32>
    %282 = math.tanh %281 : vector<8x256xf32>
    %cst_108 = arith.constant 5.000000e-01 : f32
    %283 = vector.broadcast %cst_108 : f32 to vector<8x256xf32>
    %284 = arith.mulf %283, %282 : vector<8x256xf32>
    %cst_109 = arith.constant 5.000000e-01 : f32
    %285 = vector.broadcast %cst_109 : f32 to vector<8x256xf32>
    %286 = arith.addf %284, %285 : vector<8x256xf32>
    %287 = arith.mulf %276, %249 : vector<8x256xf32>
    %288 = arith.mulf %268, %278 : vector<8x256xf32>
    %289 = arith.addf %287, %288 : vector<8x256xf32>
    %290 = math.tanh %289 : vector<8x256xf32>
    %291 = arith.mulf %286, %290 : vector<8x256xf32>
    %292 = arith.truncf %291 : vector<8x256xf32> to vector<8x256xbf16>
    %c7_i32 = arith.constant 7 : i32
    %c8_i32_110 = arith.constant 8 : i32
    %293 = arith.muli %c7_i32, %c8_i32_110 : i32
    %294 = tpu.assume_multiple %293, 8 : i32
    %295 = arith.index_cast %294 : i32 to index
    %c0_111 = arith.constant 0 : index
    %296 = vector.load %arg8[%295, %c0_111] : memref<64x1024xbf16, #tpu.memory_space<vmem>>, vector<8x1024xbf16>
    %297 = arith.extf %296 : vector<8x1024xbf16> to vector<8x1024xf32>
    %c0_112 = arith.constant 0 : index
    %c0_113 = arith.constant 0 : index
    %298 = vector.load %arg3[%c0_112, %c0_113] : memref<256x1024xbf16, #tpu.memory_space<vmem>>, vector<256x1024xbf16>
    %cst_114 = arith.constant dense<0.000000e+00> : vector<8x1024xf32>
    %299 = tpu.matmul %292, %298, %cst_114 {dimension_numbers = #tpu.dot_dimension_numbers<[1], [0], [0], [1], [0, 0, 1, 1], [], []>} : vector<8x256xbf16>, vector<256x1024xbf16>, vector<8x1024xf32> -> vector<8x1024xf32>
    %300 = arith.addf %297, %299 : vector<8x1024xf32>
    %301 = vector.extract_strided_slice %300 {offsets = [0, 0], sizes = [8, 256], strides = [1, 1]} : vector<8x1024xf32> to vector<8x256xf32>
    %cst_115 = arith.constant 5.000000e-01 : f32
    %302 = vector.broadcast %cst_115 : f32 to vector<8x256xf32>
    %303 = arith.mulf %302, %301 : vector<8x256xf32>
    %304 = math.tanh %303 : vector<8x256xf32>
    %cst_116 = arith.constant 5.000000e-01 : f32
    %305 = vector.broadcast %cst_116 : f32 to vector<8x256xf32>
    %306 = arith.mulf %305, %304 : vector<8x256xf32>
    %cst_117 = arith.constant 5.000000e-01 : f32
    %307 = vector.broadcast %cst_117 : f32 to vector<8x256xf32>
    %308 = arith.addf %306, %307 : vector<8x256xf32>
    %309 = vector.extract_strided_slice %300 {offsets = [0, 256], sizes = [8, 256], strides = [1, 1]} : vector<8x1024xf32> to vector<8x256xf32>
    %cst_118 = arith.constant 5.000000e-01 : f32
    %310 = vector.broadcast %cst_118 : f32 to vector<8x256xf32>
    %311 = arith.mulf %310, %309 : vector<8x256xf32>
    %312 = math.tanh %311 : vector<8x256xf32>
    %cst_119 = arith.constant 5.000000e-01 : f32
    %313 = vector.broadcast %cst_119 : f32 to vector<8x256xf32>
    %314 = arith.mulf %313, %312 : vector<8x256xf32>
    %cst_120 = arith.constant 5.000000e-01 : f32
    %315 = vector.broadcast %cst_120 : f32 to vector<8x256xf32>
    %316 = arith.addf %314, %315 : vector<8x256xf32>
    %317 = vector.extract_strided_slice %300 {offsets = [0, 512], sizes = [8, 256], strides = [1, 1]} : vector<8x1024xf32> to vector<8x256xf32>
    %318 = math.tanh %317 : vector<8x256xf32>
    %319 = vector.extract_strided_slice %300 {offsets = [0, 768], sizes = [8, 256], strides = [1, 1]} : vector<8x1024xf32> to vector<8x256xf32>
    %cst_121 = arith.constant 5.000000e-01 : f32
    %320 = vector.broadcast %cst_121 : f32 to vector<8x256xf32>
    %321 = arith.mulf %320, %319 : vector<8x256xf32>
    %322 = math.tanh %321 : vector<8x256xf32>
    %cst_122 = arith.constant 5.000000e-01 : f32
    %323 = vector.broadcast %cst_122 : f32 to vector<8x256xf32>
    %324 = arith.mulf %323, %322 : vector<8x256xf32>
    %cst_123 = arith.constant 5.000000e-01 : f32
    %325 = vector.broadcast %cst_123 : f32 to vector<8x256xf32>
    %326 = arith.addf %324, %325 : vector<8x256xf32>
    %327 = arith.mulf %316, %289 : vector<8x256xf32>
    %328 = arith.mulf %308, %318 : vector<8x256xf32>
    %329 = arith.addf %327, %328 : vector<8x256xf32>
    %330 = math.tanh %329 : vector<8x256xf32>
    %331 = arith.mulf %326, %330 : vector<8x256xf32>
    %332 = arith.truncf %331 : vector<8x256xf32> to vector<8x256xbf16>
    %c8_i32_124 = arith.constant 8 : i32
    %c0_125 = arith.constant 0 : index
    %c0_126 = arith.constant 0 : index
    %333 = vector.load %arg9[%c0_125, %c0_126] : memref<8x256xbf16, #tpu.memory_space<vmem>>, vector<8x256xbf16>
    tpu.vector_store %arg9[%c0_125, %c0_126], %332 {strides = array<i32>} : memref<8x256xbf16, #tpu.memory_space<vmem>>, vector<8x256xbf16>,
    %c0_127 = arith.constant 0 : index
    %c0_128 = arith.constant 0 : index
    %334 = vector.load %arg10[%c0_127, %c0_128] : memref<8x256xf32, #tpu.memory_space<vmem>>, vector<8x256xf32>
    tpu.vector_store %arg10[%c0_127, %c0_128], %329 {strides = array<i32>} : memref<8x256xf32, #tpu.memory_space<vmem>>, vector<8x256xf32>,
    %c0_i32_129 = arith.constant 0 : i32
    %335 = arith.cmpi eq, %arg0, %c0_i32_129 : i32
    %336 = arith.extui %335 : i1 to i32
    %c0_i32_130 = arith.constant 0 : i32
    %337 = arith.cmpi ne, %336, %c0_i32_130 : i32
    scf.if %337 {
      %c0_131 = arith.constant 0 : index
      %c0_132 = arith.constant 0 : index
      %338 = vector.load %arg9[%c0_131, %c0_132] : memref<8x256xbf16, #tpu.memory_space<vmem>>, vector<8x256xbf16>
      %c0_133 = arith.constant 0 : index
      %c0_134 = arith.constant 0 : index
      %339 = vector.load %arg5[%c0_133, %c0_134] : memref<256x128xbf16, #tpu.memory_space<vmem>>, vector<256x128xbf16>
      %cst_135 = arith.constant dense<0.000000e+00> : vector<8x128xf32>
      %340 = tpu.matmul %338, %339, %cst_135 {dimension_numbers = #tpu.dot_dimension_numbers<[1], [0], [0], [1], [0, 0, 1, 1], [], []>} : vector<8x256xbf16>, vector<256x128xbf16>, vector<8x128xf32> -> vector<8x128xf32>
      %c0_136 = arith.constant 0 : index
      %c0_137 = arith.constant 0 : index
      %341 = vector.load %arg6[%c0_136, %c0_137] : memref<1x128xf32, #tpu.memory_space<vmem>>, vector<1x128xf32>
      %342 = vector.broadcast %341 : vector<1x128xf32> to vector<8x128xf32>
      %343 = arith.addf %340, %342 : vector<8x128xf32>
      %c0_138 = arith.constant 0 : index
      %c0_139 = arith.constant 0 : index
      %344 = vector.load %arg7[%c0_138, %c0_139] : memref<8x128xf32, #tpu.memory_space<vmem>>, vector<8x128xf32>
      tpu.vector_store %arg7[%c0_138, %c0_139], %343 {strides = array<i32>} : memref<8x128xf32, #tpu.memory_space<vmem>>, vector<8x128xf32>,
    } else {
    }
    return
  }
  func.func @transform_0(%arg0: i32) -> (i32, i32) {
    %c0_i32 = arith.constant 0 : i32
    %c0_i32_0 = arith.constant 0 : i32
    return %arg0, %c0_i32 : i32, i32
  }
  func.func @transform_1(%arg0: i32) -> (i32, i32) {
    %c0_i32 = arith.constant 0 : i32
    %c0_i32_0 = arith.constant 0 : i32
    %c0_i32_1 = arith.constant 0 : i32
    return %c0_i32, %c0_i32_0 : i32, i32
  }
  func.func @transform_2(%arg0: i32) -> (i32, i32) {
    %c0_i32 = arith.constant 0 : i32
    %c0_i32_0 = arith.constant 0 : i32
    %c0_i32_1 = arith.constant 0 : i32
    return %c0_i32, %c0_i32_0 : i32, i32
  }
  func.func @transform_3(%arg0: i32) -> (i32, i32) {
    %c0_i32 = arith.constant 0 : i32
    %c0_i32_0 = arith.constant 0 : i32
    %c0_i32_1 = arith.constant 0 : i32
    return %c0_i32, %c0_i32_0 : i32, i32
  }
  func.func @transform_4(%arg0: i32) -> (i32, i32) {
    %c0_i32 = arith.constant 0 : i32
    %c0_i32_0 = arith.constant 0 : i32
    %c0_i32_1 = arith.constant 0 : i32
    return %c0_i32, %c0_i32_0 : i32, i32
  }
  func.func @transform_5(%arg0: i32) -> (i32, i32) {
    %c0_i32 = arith.constant 0 : i32
    %c0_i32_0 = arith.constant 0 : i32
    %c0_i32_1 = arith.constant 0 : i32
    return %c0_i32, %c0_i32_0 : i32, i32
  }
  func.func @transform_6(%arg0: i32) -> (i32, i32) {
    %c0_i32 = arith.constant 0 : i32
    %c0_i32_0 = arith.constant 0 : i32
    %c0_i32_1 = arith.constant 0 : i32
    return %c0_i32, %c0_i32_0 : i32, i32
  }
}

</mosaic_0001>

<llo_original>
// kernel: jcs_lite_forward.1
$region0: #{jcs_lite_forward.1}
  #allocation0 [shape = 'u32[]', space=smem, size = 0x4, offset = 0x4, fixed_abs, tag = 'smem constant byte address 0x4 - core index']
  #allocation1 [shape = 'u32[72,128]{1,0:T(1,128)}', space=vmem, size = 0x9000, scoped, tag = 'internal scratch']
  #allocation2 [shape = 'bf16[64,1024]{1,0:T(8,128)(2,1)}', space=vmem, size = 0x20000, scoped, tag = 'scratch operand']
  #allocation3 [shape = 'bf16[8,256]{1,0:T(8,128)(2,1)}', space=vmem, size = 0x1000, scoped, tag = 'scratch operand']
  #allocation4 [shape = 'f32[8,256]{1,0:T(8,128)}', space=vmem, size = 0x2000, scoped, tag = 'scratch operand']
  %s0 = inlined_call_operand.vmem [shape: bf16[64,64], index: 0, kind: input, shape index: {}]
  %s1 = inlined_call_operand.hbm [shape: bf16[64,1024], index: 1, kind: input, shape index: {}]
  %s2 = inlined_call_operand.hbm [shape: bf16[256,1024], index: 2, kind: input, shape index: {}]
  %s3 = inlined_call_operand.hbm [shape: f32[1,1024], index: 3, kind: input, shape index: {}]
  %s4 = inlined_call_operand.vmem [shape: bf16[256,128], index: 4, kind: input, shape index: {}]
  %s5 = inlined_call_operand.vmem [shape: f32[1,128], index: 5, kind: input, shape index: {}]
  %s6 = inlined_call_operand.vmem [shape: f32[8,128], index: 6, kind: output, shape index: {}]
  %s7 = sld [smem:[#allocation0]]
  $region54: #{jcs_lite_forward.1} parent=0
    _
  %s9 = ssub.s32 1, %s7
  %s10 = scalar_select 0, %s9, %s7
  $region1: #{jcs_lite_forward.1} parent=0
    #allocation5 [shape = 'u8[131072]{0}', space=vmem, size = 0x20000, scoped, tag = 'input window, operand 1, single buffered']
    #allocation6 [shape = 's32[1]{0}', space=sflag, size = 0x4, scoped, tag = 'scoped memory for jcs_lite_forward.1']
    #allocation7 [shape = 'u8[524288]{0}', space=vmem, size = 0x80000, scoped, tag = 'input window, operand 2, single buffered']
    #allocation8 [shape = 's32[1]{0}', space=sflag, size = 0x4, scoped, tag = 'scoped memory for jcs_lite_forward.1']
    #allocation9 [shape = 'u8[4096]{0}', space=vmem, size = 0x1000, scoped, tag = 'input window, operand 3, single buffered']
    %11 = vsyncpa [#allocation6], 0
    %12 = vsyncpa [#allocation8], 0
    // Predicated region
    $region2: #{jcs_lite_forward.1} parent=1 // pred_check
      _
    $region3: #{jcs_lite_forward.1} parent=1 // pred_check_branch
      %14 = sbr.rel (0) target = $region5
    $region4: #{jcs_lite_forward.1} parent=1 // pred_region
      _
    $region5: #{jcs_lite_forward.1} parent=1 // pred_fallthru
      _
    // Predicated region
    $region6: #{jcs_lite_forward.1} parent=1 // pred_check
      _
    $region7: #{jcs_lite_forward.1} parent=1 // pred_check_branch
      %16 = sbr.rel (0) target = $region9
    $region8: #{jcs_lite_forward.1} parent=1 // pred_region
      %18 = vsyncadd [#allocation6], 0
      %s19 = sshll.u32 %s1, 4
      %s20 = int_to_ptr.hbm [resolvable:$true] %s19
      %s21 = sshll.u32 [#allocation5], 4
      %s22 = int_to_ptr.vmem [resolvable:$true] %s21
      %27 = dma.hbm_to_vmem [thread:$0]  %s20, 4096, %s22, [#allocation6], 512, 512, 32
    $region9: #{jcs_lite_forward.1} parent=1 // pred_fallthru
      _
    // Predicated region
    $region10: #{jcs_lite_forward.1} parent=1 // pred_check
      _
    $region11: #{jcs_lite_forward.1} parent=1 // pred_check_branch
      %29 = sbr.rel (0) target = $region13
    $region12: #{jcs_lite_forward.1} parent=1 // pred_region
      %31 = vsyncadd [#allocation8], 0
      %s32 = sshll.u32 %s2, 4
      %s33 = int_to_ptr.hbm [resolvable:$true] %s32
      %s34 = sshll.u32 [#allocation7], 4
      %s35 = int_to_ptr.vmem [resolvable:$true] %s34
      %40 = dma.hbm_to_vmem [thread:$0]  %s33, 16384, %s35, [#allocation8], 512, 512, 32
    $region13: #{jcs_lite_forward.1} parent=1 // pred_fallthru
      _
    // Predicated region
    $region14: #{jcs_lite_forward.1} parent=1 // pred_check
      _
    $region15: #{jcs_lite_forward.1} parent=1 // pred_check_branch
      %42 = sbr.rel (0) target = $region17
    $region16: #{jcs_lite_forward.1} parent=1 // pred_region
      %44 = vsyncadd [#allocation8], 0
      %s46 = sshll.u32 %s3, 4
      %s47 = int_to_ptr.hbm [resolvable:$true] %s46
      %s48 = sshll.u32 [#allocation9], 4
      %s49 = int_to_ptr.vmem [resolvable:$true] %s48
      %51 = dma.hbm_to_vmem [thread:$0]  %s47, 128, %s49, [#allocation8]
    $region17: #{jcs_lite_forward.1} parent=1 // pred_fallthru
      _
    // Predicated region
    $region18: #{jcs_lite_forward.1} parent=1 // pred_check
      _
    $region19: #{jcs_lite_forward.1} parent=1 // pred_check_branch
      %53 = sbr.rel (0) target = $region21
    $region20: #{jcs_lite_forward.1} parent=1 // pred_region
      _
    $region21: #{jcs_lite_forward.1} parent=1 // pred_fallthru
      _
    // Predicated region
    $region22: #{jcs_lite_forward.1} parent=1 // pred_check
      _
    $region23: #{jcs_lite_forward.1} parent=1 // pred_check_branch
      %55 = sbr.rel (0) target = $region25
    $region24: #{jcs_lite_forward.1} parent=1 // pred_region
      _
    $region25: #{jcs_lite_forward.1} parent=1 // pred_fallthru
      _
    // Predicated region
    $region26: #{jcs_lite_forward.1} parent=1 // pred_check
      _
    $region27: #{jcs_lite_forward.1} parent=1 // pred_check_branch
      %57 = sbr.rel (0) target = $region29
    $region28: #{jcs_lite_forward.1} parent=1 // pred_region
      %59 = dma.done [#allocation6], 4096
    $region29: #{jcs_lite_forward.1} parent=1 // pred_fallthru
      _
    // Predicated region
    $region30: #{jcs_lite_forward.1} parent=1 // pred_check
      _
    $region31: #{jcs_lite_forward.1} parent=1 // pred_check_branch
      %61 = sbr.rel (0) target = $region33
    $region32: #{jcs_lite_forward.1} parent=1 // pred_region
      %63 = dma.done [#allocation8], 16384
    $region33: #{jcs_lite_forward.1} parent=1 // pred_fallthru
      _
    // Predicated region
    $region34: #{jcs_lite_forward.1} parent=1 // pred_check
      _
    $region35: #{jcs_lite_forward.1} parent=1 // pred_check_branch
      %65 = sbr.rel (0) target = $region37
    $region36: #{jcs_lite_forward.1} parent=1 // pred_region
      %67 = dma.done [#allocation8], 128
    $region37: #{jcs_lite_forward.1} parent=1 // pred_fallthru
      _
    %p69 = scmp.eq.s32.totalorder 0, 0
    // Predicated region
    $region38: #{jcs_lite_forward.1} parent=1 // pred_check
      %p70 = pneg %p69
    $region39: #{jcs_lite_forward.1} parent=1 // pred_check_branch
      %72 = sbr.rel (%p70) target = $region41
    $region40: #{jcs_lite_forward.1} parent=1 // pred_region
      %73 = vst [vmem:[#allocation3] sm:$0xff] 0
      %74 = vst [vmem:[#allocation4] sm:$0xff] 0.0
      %75 = vst [vmem:[#allocation4 + $0x8] sm:$0xff] 0.0
    $region41: #{jcs_lite_forward.1} parent=1 // pred_fallthru
      _
    %v76 = vld [vmem:[%s0] sm:$0xf]
    %v77 = vld [vmem:[%s0 + $0x4] sm:$0xf]
    %v78 = vld [vmem:[%s0 + $0x8] sm:$0xf]
    %v79 = vld [vmem:[%s0 + $0xc] sm:$0xf]
    %v80 = vld [vmem:[%s0 + $0x10] sm:$0xf]
    %v81 = vld [vmem:[%s0 + $0x14] sm:$0xf]
    %v82 = vld [vmem:[%s0 + $0x18] sm:$0xf]
    %v83 = vld [vmem:[%s0 + $0x1c] sm:$0xf]
    %v84 = vld [vmem:[#allocation5] sm:$0xff]
    %v85 = vld [vmem:[#allocation5 + $0x8] sm:$0xff]
    %v86 = vld [vmem:[#allocation5 + $0x10] sm:$0xff]
    %v87 = vld [vmem:[#allocation5 + $0x18] sm:$0xff]
    %v88 = vld [vmem:[#allocation5 + $0x20] sm:$0xff]
    %v89 = vld [vmem:[#allocation5 + $0x28] sm:$0xff]
    %v90 = vld [vmem:[#allocation5 + $0x30] sm:$0xff]
    %v91 = vld [vmem:[#allocation5 + $0x38] sm:$0xff]
    %v92 = vld [vmem:[#allocation5 + $0x40] sm:$0xff]
    %v93 = vld [vmem:[#allocation5 + $0x48] sm:$0xff]
    %v94 = vld [vmem:[#allocation5 + $0x50] sm:$0xff]
    %v95 = vld [vmem:[#allocation5 + $0x58] sm:$0xff]
    %v96 = vld [vmem:[#allocation5 + $0x60] sm:$0xff]
    %v97 = vld [vmem:[#allocation5 + $0x68] sm:$0xff]
    %v98 = vld [vmem:[#allocation5 + $0x70] sm:$0xff]
    %v99 = vld [vmem:[#allocation5 + $0x78] sm:$0xff]
    %v100 = vld [vmem:[#allocation5 + $0x80] sm:$0xff]
    %v101 = vld [vmem:[#allocation5 + $0x88] sm:$0xff]
    %v102 = vld [vmem:[#allocation5 + $0x90] sm:$0xff]
    %v103 = vld [vmem:[#allocation5 + $0x98] sm:$0xff]
    %v104 = vld [vmem:[#allocation5 + $0xa0] sm:$0xff]
    %v105 = vld [vmem:[#allocation5 + $0xa8] sm:$0xff]
    %v106 = vld [vmem:[#allocation5 + $0xb0] sm:$0xff]
    %v107 = vld [vmem:[#allocation5 + $0xb8] sm:$0xff]
    %v108 = vld [vmem:[#allocation5 + $0xc0] sm:$0xff]
    %v109 = vld [vmem:[#allocation5 + $0xc8] sm:$0xff]
    %v110 = vld [vmem:[#allocation5 + $0xd0] sm:$0xff]
    %v111 = vld [vmem:[#allocation5 + $0xd8] sm:$0xff]
    %v112 = vld [vmem:[#allocation5 + $0xe0] sm:$0xff]
    %v113 = vld [vmem:[#allocation5 + $0xe8] sm:$0xff]
    %v114 = vld [vmem:[#allocation5 + $0xf0] sm:$0xff]
    %v115 = vld [vmem:[#allocation5 + $0xf8] sm:$0xff]
    %v116 = vld [vmem:[#allocation9] sm:$0xff]
    %v118 = vperm.slane %v116, 0
    %v119 = vperm.slane %v116, 1
    %v120 = vperm.slane %v116, 2
    %v121 = vperm.slane %v116, 3
    %v122 = vperm.slane %v116, 4
    %v123 = vperm.slane %v116, 5
    %v124 = vperm.slane %v116, 6
    %v125 = vperm.slane %v116, 7
    %v142 = vunpack.c.l.b16 %v76
    %v143 = vunpack.c.l.b16 %v77
    %v144 = vunpack.c.l.b16 %v78
    %v145 = vunpack.c.l.b16 %v79
    %v146 = vunpack.c.l.b16 %v80
    %v147 = vunpack.c.l.b16 %v81
    %v148 = vunpack.c.l.b16 %v82
    %v149 = vunpack.c.l.b16 %v83
    %v150 = vpack.c.b16 %v143, %v142
    %v151 = vpack.c.b16 %v145, %v144
    %v152 = vpack.c.b16 %v147, %v146
    %v153 = vpack.c.b16 %v149, %v148
    %v186 = vunpack.c.l.b16 %v84
    %v187 = vunpack.c.h.b16 %v84
    %v188 = vunpack.c.l.b16 %v85
    %v189 = vunpack.c.h.b16 %v85
    %v190 = vunpack.c.l.b16 %v86
    %v191 = vunpack.c.h.b16 %v86
    %v192 = vunpack.c.l.b16 %v87
    %v193 = vunpack.c.h.b16 %v87
    %v194 = vunpack.c.l.b16 %v88
    %v195 = vunpack.c.h.b16 %v88
    %v196 = vunpack.c.l.b16 %v89
    %v197 = vunpack.c.h.b16 %v89
    %v198 = vunpack.c.l.b16 %v90
    %v199 = vunpack.c.h.b16 %v90
    %v200 = vunpack.c.l.b16 %v91
    %v201 = vunpack.c.h.b16 %v91
    %v202 = vunpack.c.l.b16 %v92
    %v203 = vunpack.c.h.b16 %v92
    %v204 = vunpack.c.l.b16 %v93
    %v205 = vunpack.c.h.b16 %v93
    %v206 = vunpack.c.l.b16 %v94
    %v207 = vunpack.c.h.b16 %v94
    %v208 = vunpack.c.l.b16 %v95
    %v209 = vunpack.c.h.b16 %v95
    %v210 = vunpack.c.l.b16 %v96
    %v211 = vunpack.c.h.b16 %v96
    %v212 = vunpack.c.l.b16 %v97
    %v213 = vunpack.c.h.b16 %v97
    %v214 = vunpack.c.l.b16 %v98
    %v215 = vunpack.c.h.b16 %v98
    %v216 = vunpack.c.l.b16 %v99
    %v217 = vunpack.c.h.b16 %v99
    %v218 = vunpack.c.l.b16 %v100
    %v219 = vunpack.c.h.b16 %v100
    %v220 = vunpack.c.l.b16 %v101
    %v221 = vunpack.c.h.b16 %v101
    %v222 = vunpack.c.l.b16 %v102
    %v223 = vunpack.c.h.b16 %v102
    %v224 = vunpack.c.l.b16 %v103
    %v225 = vunpack.c.h.b16 %v103
    %v226 = vunpack.c.l.b16 %v104
    %v227 = vunpack.c.h.b16 %v104
    %v228 = vunpack.c.l.b16 %v105
    %v229 = vunpack.c.h.b16 %v105
    %v230 = vunpack.c.l.b16 %v106
    %v231 = vunpack.c.h.b16 %v106
    %v232 = vunpack.c.l.b16 %v107
    %v233 = vunpack.c.h.b16 %v107
    %v234 = vunpack.c.l.b16 %v108
    %v235 = vunpack.c.h.b16 %v108
    %v236 = vunpack.c.l.b16 %v109
    %v237 = vunpack.c.h.b16 %v109
    %v238 = vunpack.c.l.b16 %v110
    %v239 = vunpack.c.h.b16 %v110
    %v240 = vunpack.c.l.b16 %v111
    %v241 = vunpack.c.h.b16 %v111
    %v242 = vunpack.c.l.b16 %v112
    %v243 = vunpack.c.h.b16 %v112
    %v244 = vunpack.c.l.b16 %v113
    %v245 = vunpack.c.h.b16 %v113
    %v246 = vunpack.c.l.b16 %v114
    %v247 = vunpack.c.h.b16 %v114
    %v248 = vunpack.c.l.b16 %v115
    %v249 = vunpack.c.h.b16 %v115
    %v250 = vpack.c.b16 %v194, %v186
    %v251 = vpack.c.b16 %v195, %v187
    %v252 = vpack.c.b16 %v196, %v188
    %v253 = vpack.c.b16 %v197, %v189
    %v254 = vpack.c.b16 %v198, %v190
    %v255 = vpack.c.b16 %v199, %v191
    %v256 = vpack.c.b16 %v200, %v192
    %v257 = vpack.c.b16 %v201, %v193
    %v258 = vpack.c.b16 %v210, %v202
    %v259 = vpack.c.b16 %v211, %v203
    %v260 = vpack.c.b16 %v212, %v204
    %v261 = vpack.c.b16 %v213, %v205
    %v262 = vpack.c.b16 %v214, %v206
    %v263 = vpack.c.b16 %v215, %v207
    %v264 = vpack.c.b16 %v216, %v208
    %v265 = vpack.c.b16 %v217, %v209
    %v266 = vpack.c.b16 %v226, %v218
    %v267 = vpack.c.b16 %v227, %v219
    %v268 = vpack.c.b16 %v228, %v220
    %v269 = vpack.c.b16 %v229, %v221
    %v270 = vpack.c.b16 %v230, %v222
    %v271 = vpack.c.b16 %v231, %v223
    %v272 = vpack.c.b16 %v232, %v224
    %v273 = vpack.c.b16 %v233, %v225
    %v274 = vpack.c.b16 %v242, %v234
    %v275 = vpack.c.b16 %v243, %v235
    %v276 = vpack.c.b16 %v244, %v236
    %v277 = vpack.c.b16 %v245, %v237
    %v278 = vpack.c.b16 %v246, %v238
    %v279 = vpack.c.b16 %v247, %v239
    %v280 = vpack.c.b16 %v248, %v240
    %v281 = vpack.c.b16 %v249, %v241
    %vm314 = vcmask 523264
    %v316 = vsel %vm314, %v150, 0
    %v319 = vsel %vm314, %v151, 0
    %v322 = vsel %vm314, %v152, 0
    %v325 = vsel %vm314, %v153, 0
    %327 = vmatpush.bf16.msra.mxu0 0
    %328 = vmatpush.bf16.msra.mxu0 0
    %329 = vmatpush.bf16.msra.mxu0 0
    %330 = vmatpush.bf16.msra.mxu0 0
    %331 = vmatpush.bf16.msra.mxu0 %v274
    %332 = vmatpush.bf16.msra.mxu0 %v266
    %333 = vmatpush.bf16.msra.mxu0 %v258
    %334 = vmatpush.bf16.msra.mxu0 %v250
    %335 = vmatmul.bf16.gmra.mxu0 %v316
    %v336 = vpop.f32.mrf.mxu0
    %v337 = vadd.f32 %v118, %v336
    %v338 = vpop.f32.mrf.mxu0
    %v339 = vadd.f32 %v118, %v338
    %340 = vmatmul.bf16.gmra.mxu0 %v319
    %v341 = vpop.f32.mrf.mxu0
    %v342 = vadd.f32 %v118, %v341
    %v343 = vpop.f32.mrf.mxu0
    %v344 = vadd.f32 %v118, %v343
    %345 = vmatmul.bf16.gmra.mxu0 %v322
    %v346 = vpop.f32.mrf.mxu0
    %v347 = vadd.f32 %v118, %v346
    %v348 = vpop.f32.mrf.mxu0
    %v349 = vadd.f32 %v118, %v348
    %350 = vmatmul.bf16.gmra.mxu0 %v325
    %v351 = vpop.f32.mrf.mxu0
    %v352 = vadd.f32 %v118, %v351
    %v353 = vpop.f32.mrf.mxu0
    %v354 = vadd.f32 %v118, %v353
    %355 = vdwg.mxu0
    %356 = vmatpush.bf16.msra.mxu0 0
    %357 = vmatpush.bf16.msra.mxu0 0
    %358 = vmatpush.bf16.msra.mxu0 0
    %359 = vmatpush.bf16.msra.mxu0 0
    %360 = vmatpush.bf16.msra.mxu0 %v275
    %361 = vmatpush.bf16.msra.mxu0 %v267
    %362 = vmatpush.bf16.msra.mxu0 %v259
    %363 = vmatpush.bf16.msra.mxu0 %v251
    %364 = vmatmul.bf16.gmra.mxu0 %v316
    %v365 = vpop.f32.mrf.mxu0
    %v366 = vadd.f32 %v119, %v365
    %v367 = vpop.f32.mrf.mxu0
    %v368 = vadd.f32 %v119, %v367
    %369 = vmatmul.bf16.gmra.mxu0 %v319
    %v370 = vpop.f32.mrf.mxu0
    %v371 = vadd.f32 %v119, %v370
    %v372 = vpop.f32.mrf.mxu0
    %v373 = vadd.f32 %v119, %v372
    %374 = vmatmul.bf16.gmra.mxu0 %v322
    %v375 = vpop.f32.mrf.mxu0
    %v376 = vadd.f32 %v119, %v375
    %v377 = vpop.f32.mrf.mxu0
    %v378 = vadd.f32 %v119, %v377
    %379 = vmatmul.bf16.gmra.mxu0 %v325
    %v380 = vpop.f32.mrf.mxu0
    %v381 = vadd.f32 %v119, %v380
    %v382 = vpop.f32.mrf.mxu0
    %v383 = vadd.f32 %v119, %v382
    %384 = vdwg.mxu0
    %385 = vmatpush.bf16.msra.mxu0 0
    %386 = vmatpush.bf16.msra.mxu0 0
    %387 = vmatpush.bf16.msra.mxu0 0
    %388 = vmatpush.bf16.msra.mxu0 0
    %389 = vmatpush.bf16.msra.mxu0 %v276
    %390 = vmatpush.bf16.msra.mxu0 %v268
    %391 = vmatpush.bf16.msra.mxu0 %v260
    %392 = vmatpush.bf16.msra.mxu0 %v252
    %393 = vmatmul.bf16.gmra.mxu0 %v316
    %v394 = vpop.f32.mrf.mxu0
    %v395 = vadd.f32 %v120, %v394
    %v396 = vpop.f32.mrf.mxu0
    %v397 = vadd.f32 %v120, %v396
    %398 = vmatmul.bf16.gmra.mxu0 %v319
    %v399 = vpop.f32.mrf.mxu0
    %v400 = vadd.f32 %v120, %v399
    %v401 = vpop.f32.mrf.mxu0
    %v402 = vadd.f32 %v120, %v401
    %403 = vmatmul.bf16.gmra.mxu0 %v322
    %v404 = vpop.f32.mrf.mxu0
    %v405 = vadd.f32 %v120, %v404
    %v406 = vpop.f32.mrf.mxu0
    %v407 = vadd.f32 %v120, %v406
    %408 = vmatmul.bf16.gmra.mxu0 %v325
    %v409 = vpop.f32.mrf.mxu0
    %v410 = vadd.f32 %v120, %v409
    %v411 = vpop.f32.mrf.mxu0
    %v412 = vadd.f32 %v120, %v411
    %413 = vdwg.mxu0
    %414 = vmatpush.bf16.msra.mxu0 0
    %415 = vmatpush.bf16.msra.mxu0 0
    %416 = vmatpush.bf16.msra.mxu0 0
    %417 = vmatpush.bf16.msra.mxu0 0
    %418 = vmatpush.bf16.msra.mxu0 %v277
    %419 = vmatpush.bf16.msra.mxu0 %v269
    %420 = vmatpush.bf16.msra.mxu0 %v261
    %421 = vmatpush.bf16.msra.mxu0 %v253
    %422 = vmatmul.bf16.gmra.mxu0 %v316
    %v423 = vpop.f32.mrf.mxu0
    %v424 = vadd.f32 %v121, %v423
    %v425 = vpop.f32.mrf.mxu0
    %v426 = vadd.f32 %v121, %v425
    %427 = vmatmul.bf16.gmra.mxu0 %v319
    %v428 = vpop.f32.mrf.mxu0
    %v429 = vadd.f32 %v121, %v428
    %v430 = vpop.f32.mrf.mxu0
    %v431 = vadd.f32 %v121, %v430
    %432 = vmatmul.bf16.gmra.mxu0 %v322
    %v433 = vpop.f32.mrf.mxu0
    %v434 = vadd.f32 %v121, %v433
    %v435 = vpop.f32.mrf.mxu0
    %v436 = vadd.f32 %v121, %v435
    %437 = vmatmul.bf16.gmra.mxu0 %v325
    %v438 = vpop.f32.mrf.mxu0
    %v439 = vadd.f32 %v121, %v438
    %v440 = vpop.f32.mrf.mxu0
    %v441 = vadd.f32 %v121, %v440
    %442 = vdwg.mxu0
    %443 = vmatpush.bf16.msra.mxu0 0
    %444 = vmatpush.bf16.msra.mxu0 0
    %445 = vmatpush.bf16.msra.mxu0 0
    %446 = vmatpush.bf16.msra.mxu0 0
    %447 = vmatpush.bf16.msra.mxu0 %v278
    %448 = vmatpush.bf16.msra.mxu0 %v270
    %449 = vmatpush.bf16.msra.mxu0 %v262
    %450 = vmatpush.bf16.msra.mxu0 %v254
    %451 = vmatmul.bf16.gmra.mxu0 %v316
    %v452 = vpop.f32.mrf.mxu0
    %v453 = vadd.f32 %v122, %v452
    %v454 = vpop.f32.mrf.mxu0
    %v455 = vadd.f32 %v122, %v454
    %456 = vmatmul.bf16.gmra.mxu0 %v319
    %v457 = vpop.f32.mrf.mxu0
    %v458 = vadd.f32 %v122, %v457
    %v459 = vpop.f32.mrf.mxu0
    %v460 = vadd.f32 %v122, %v459
    %461 = vmatmul.bf16.gmra.mxu0 %v322
    %v462 = vpop.f32.mrf.mxu0
    %v463 = vadd.f32 %v122, %v462
    %v464 = vpop.f32.mrf.mxu0
    %v465 = vadd.f32 %v122, %v464
    %466 = vmatmul.bf16.gmra.mxu0 %v325
    %v467 = vpop.f32.mrf.mxu0
    %v468 = vadd.f32 %v122, %v467
    %v469 = vpop.f32.mrf.mxu0
    %v470 = vadd.f32 %v122, %v469
    %471 = vdwg.mxu0
    %472 = vmatpush.bf16.msra.mxu0 0
    %473 = vmatpush.bf16.msra.mxu0 0
    %474 = vmatpush.bf16.msra.mxu0 0
    %475 = vmatpush.bf16.msra.mxu0 0
    %476 = vmatpush.bf16.msra.mxu0 %v279
    %477 = vmatpush.bf16.msra.mxu0 %v271
    %478 = vmatpush.bf16.msra.mxu0 %v263
    %479 = vmatpush.bf16.msra.mxu0 %v255
    %480 = vmatmul.bf16.gmra.mxu0 %v316
    %v481 = vpop.f32.mrf.mxu0
    %v482 = vadd.f32 %v123, %v481
    %v483 = vpop.f32.mrf.mxu0
    %v484 = vadd.f32 %v123, %v483
    %485 = vmatmul.bf16.gmra.mxu0 %v319
    %v486 = vpop.f32.mrf.mxu0
    %v487 = vadd.f32 %v123, %v486
    %v488 = vpop.f32.mrf.mxu0
    %v489 = vadd.f32 %v123, %v488
    %490 = vmatmul.bf16.gmra.mxu0 %v322
    %v491 = vpop.f32.mrf.mxu0
    %v492 = vadd.f32 %v123, %v491
    %v493 = vpop.f32.mrf.mxu0
    %v494 = vadd.f32 %v123, %v493
    %495 = vmatmul.bf16.gmra.mxu0 %v325
    %v496 = vpop.f32.mrf.mxu0
    %v497 = vadd.f32 %v123, %v496
    %v498 = vpop.f32.mrf.mxu0
    %v499 = vadd.f32 %v123, %v498
    %500 = vdwg.mxu0
    %501 = vmatpush.bf16.msra.mxu0 0
    %502 = vmatpush.bf16.msra.mxu0 0
    %503 = vmatpush.bf16.msra.mxu0 0
    %504 = vmatpush.bf16.msra.mxu0 0
    %505 = vmatpush.bf16.msra.mxu0 %v280
    %506 = vmatpush.bf16.msra.mxu0 %v272
    %507 = vmatpush.bf16.msra.mxu0 %v264
    %508 = vmatpush.bf16.msra.mxu0 %v256
    %509 = vmatmul.bf16.gmra.mxu0 %v316
    %v510 = vpop.f32.mrf.mxu0
    %v511 = vadd.f32 %v124, %v510
    %v512 = vpop.f32.mrf.mxu0
    %v513 = vadd.f32 %v124, %v512
    %514 = vmatmul.bf16.gmra.mxu0 %v319
    %v515 = vpop.f32.mrf.mxu0
    %v516 = vadd.f32 %v124, %v515
    %v517 = vpop.f32.mrf.mxu0
    %v518 = vadd.f32 %v124, %v517
    %519 = vmatmul.bf16.gmra.mxu0 %v322
    %v520 = vpop.f32.mrf.mxu0
    %v521 = vadd.f32 %v124, %v520
    %v522 = vpop.f32.mrf.mxu0
    %v523 = vadd.f32 %v124, %v522
    %524 = vmatmul.bf16.gmra.mxu0 %v325
    %v525 = vpop.f32.mrf.mxu0
    %v526 = vadd.f32 %v124, %v525
    %v527 = vpop.f32.mrf.mxu0
    %v528 = vadd.f32 %v124, %v527
    %529 = vdwg.mxu0
    %530 = vmatpush.bf16.msra.mxu0 0
    %531 = vmatpush.bf16.msra.mxu0 0
    %532 = vmatpush.bf16.msra.mxu0 0
    %533 = vmatpush.bf16.msra.mxu0 0
    %534 = vmatpush.bf16.msra.mxu0 %v281
    %535 = vmatpush.bf16.msra.mxu0 %v273
    %536 = vmatpush.bf16.msra.mxu0 %v265
    %537 = vmatpush.bf16.msra.mxu0 %v257
    %538 = vmatmul.bf16.gmra.mxu0 %v316
    %v539 = vpop.f32.mrf.mxu0
    %v540 = vadd.f32 %v125, %v539
    %v541 = vpop.f32.mrf.mxu0
    %v542 = vadd.f32 %v125, %v541
    %543 = vmatmul.bf16.gmra.mxu0 %v319
    %v544 = vpop.f32.mrf.mxu0
    %v545 = vadd.f32 %v125, %v544
    %v546 = vpop.f32.mrf.mxu0
    %v547 = vadd.f32 %v125, %v546
    %548 = vmatmul.bf16.gmra.mxu0 %v322
    %v549 = vpop.f32.mrf.mxu0
    %v550 = vadd.f32 %v125, %v549
    %v551 = vpop.f32.mrf.mxu0
    %v552 = vadd.f32 %v125, %v551
    %553 = vmatmul.bf16.gmra.mxu0 %v325
    %v554 = vpop.f32.mrf.mxu0
    %v555 = vadd.f32 %v125, %v554
    %v556 = vpop.f32.mrf.mxu0
    %v557 = vadd.f32 %v125, %v556
    %558 = vdwg.mxu0
    %v559 = vpack.c.bf16 %v366, %v337
    %v560 = vpack.c.bf16 %v424, %v395
    %v561 = vpack.c.bf16 %v482, %v453
    %v562 = vpack.c.bf16 %v540, %v511
    %v563 = vpack.c.bf16 %v368, %v339
    %v564 = vpack.c.bf16 %v426, %v397
    %v565 = vpack.c.bf16 %v484, %v455
    %v566 = vpack.c.bf16 %v542, %v513
    %v567 = vpack.c.bf16 %v371, %v342
    %v568 = vpack.c.bf16 %v429, %v400
    %v569 = vpack.c.bf16 %v487, %v458
    %v570 = vpack.c.bf16 %v545, %v516
    %v571 = vpack.c.bf16 %v373, %v344
    %v572 = vpack.c.bf16 %v431, %v402
    %v573 = vpack.c.bf16 %v489, %v460
    %v574 = vpack.c.bf16 %v547, %v518
    %v575 = vpack.c.bf16 %v376, %v347
    %v576 = vpack.c.bf16 %v434, %v405
    %v577 = vpack.c.bf16 %v492, %v463
    %v578 = vpack.c.bf16 %v550, %v521
    %v579 = vpack.c.bf16 %v378, %v349
    %v580 = vpack.c.bf16 %v436, %v407
    %v581 = vpack.c.bf16 %v494, %v465
    %v582 = vpack.c.bf16 %v552, %v523
    %v583 = vpack.c.bf16 %v381, %v352
    %v584 = vpack.c.bf16 %v439, %v410
    %v585 = vpack.c.bf16 %v497, %v468
    %v586 = vpack.c.bf16 %v555, %v526
    %v587 = vpack.c.bf16 %v383, %v354
    %v588 = vpack.c.bf16 %v441, %v412
    %v589 = vpack.c.bf16 %v499, %v470
    %v590 = vpack.c.bf16 %v557, %v528
    %591 = vst [vmem:[#allocation2] sm:$0xff] %v559
    %592 = vst [vmem:[#allocation2 + $0x8] sm:$0xff] %v560
    %593 = vst [vmem:[#allocation2 + $0x10] sm:$0xff] %v561
    %594 = vst [vmem:[#allocation2 + $0x18] sm:$0xff] %v562
    %595 = vst [vmem:[#allocation2 + $0x20] sm:$0xff] %v563
    %596 = vst [vmem:[#allocation2 + $0x28] sm:$0xff] %v564
    %597 = vst [vmem:[#allocation2 + $0x30] sm:$0xff] %v565
    %598 = vst [vmem:[#allocation2 + $0x38] sm:$0xff] %v566
    %599 = vst [vmem:[#allocation2 + $0x40] sm:$0xff] %v567
    %600 = vst [vmem:[#allocation2 + $0x48] sm:$0xff] %v568
    %601 = vst [vmem:[#allocation2 + $0x50] sm:$0xff] %v569
    %602 = vst [vmem:[#allocation2 + $0x58] sm:$0xff] %v570
    %603 = vst [vmem:[#allocation2 + $0x60] sm:$0xff] %v571
    %604 = vst [vmem:[#allocation2 + $0x68] sm:$0xff] %v572
    %605 = vst [vmem:[#allocation2 + $0x70] sm:$0xff] %v573
    %606 = vst [vmem:[#allocation2 + $0x78] sm:$0xff] %v574
    %607 = vst [vmem:[#allocation2 + $0x80] sm:$0xff] %v575
    %608 = vst [vmem:[#allocation2 + $0x88] sm:$0xff] %v576
    %609 = vst [vmem:[#allocation2 + $0x90] sm:$0xff] %v577
    %610 = vst [vmem:[#allocation2 + $0x98] sm:$0xff] %v578
    %611 = vst [vmem:[#allocation2 + $0xa0] sm:$0xff] %v579
    %612 = vst [vmem:[#allocation2 + $0xa8] sm:$0xff] %v580
    %613 = vst [vmem:[#allocation2 + $0xb0] sm:$0xff] %v581
    %614 = vst [vmem:[#allocation2 + $0xb8] sm:$0xff] %v582
    %615 = vst [vmem:[#allocation2 + $0xc0] sm:$0xff] %v583
    %616 = vst [vmem:[#allocation2 + $0xc8] sm:$0xff] %v584
    %617 = vst [vmem:[#allocation2 + $0xd0] sm:$0xff] %v585
    %618 = vst [vmem:[#allocation2 + $0xd8] sm:$0xff] %v586
    %619 = vst [vmem:[#allocation2 + $0xe0] sm:$0xff] %v587
    %620 = vst [vmem:[#allocation2 + $0xe8] sm:$0xff] %v588
    %621 = vst [vmem:[#allocation2 + $0xf0] sm:$0xff] %v589
    %622 = vst [vmem:[#allocation2 + $0xf8] sm:$0xff] %v590
    %v623 = vld [vmem:[#allocation3] sm:$0xff]
    %v624 = vld [vmem:[#allocation4] sm:$0xff]
    %v625 = vld [vmem:[#allocation4 + $0x8] sm:$0xff]
    %s626 = smul.u32 0, 8
    %s627 = smul.addr %s626, 4
    %s628 = scalar_lea.vmem [#allocation2], %s627
    %v629 = vld [vmem:[%s628] sm:$0xff]
    %v630 = vld [vmem:[%s628 + $0x8] sm:$0xff]
    %v631 = vld [vmem:[%s628 + $0x10] sm:$0xff]
    %v632 = vld [vmem:[%s628 + $0x18] sm:$0xff]
    %v633 = vunpack.c.l.bf16 %v629
    %v634 = vunpack.c.h.bf16 %v629
    %v635 = vunpack.c.l.bf16 %v630
    %v636 = vunpack.c.h.bf16 %v630
    %v637 = vunpack.c.l.bf16 %v631
    %v638 = vunpack.c.h.bf16 %v631
    %v639 = vunpack.c.l.bf16 %v632
    %v640 = vunpack.c.h.bf16 %v632
    %v641 = vld [vmem:[#allocation7] sm:$0xff]
    %v642 = vld [vmem:[#allocation7 + $0x8] sm:$0xff]
    %v643 = vld [vmem:[#allocation7 + $0x10] sm:$0xff]
    %v644 = vld [vmem:[#allocation7 + $0x18] sm:$0xff]
    %v645 = vld [vmem:[#allocation7 + $0x20] sm:$0xff]
    %v646 = vld [vmem:[#allocation7 + $0x28] sm:$0xff]
    %v647 = vld [vmem:[#allocation7 + $0x30] sm:$0xff]
    %v648 = vld [vmem:[#allocation7 + $0x38] sm:$0xff]
    %v649 = vld [vmem:[#allocation7 + $0x40] sm:$0xff]
    %v650 = vld [vmem:[#allocation7 + $0x48] sm:$0xff]
    %v651 = vld [vmem:[#allocation7 + $0x50] sm:$0xff]
    %v652 = vld [vmem:[#allocation7 + $0x58] sm:$0xff]
    %v653 = vld [vmem:[#allocation7 + $0x60] sm:$0xff]
    %v654 = vld [vmem:[#allocation7 + $0x68] sm:$0xff]
    %v655 = vld [vmem:[#allocation7 + $0x70] sm:$0xff]
    %v656 = vld [vmem:[#allocation7 + $0x78] sm:$0xff]
    %v657 = vld [vmem:[#allocation7 + $0x80] sm:$0xff]
    %v658 = vld [vmem:[#allocation7 + $0x88] sm:$0xff]
    %v659 = vld [vmem:[#allocation7 + $0x90] sm:$0xff]
    %v660 = vld [vmem:[#allocation7 + $0x98] sm:$0xff]
    %v661 = vld [vmem:[#allocation7 + $0xa0] sm:$0xff]
    %v662 = vld [vmem:[#allocation7 + $0xa8] sm:$0xff]
    %v663 = vld [vmem:[#allocation7 + $0xb0] sm:$0xff]
    %v664 = vld [vmem:[#allocation7 + $0xb8] sm:$0xff]
    %v665 = vld [vmem:[#allocation7 + $0xc0] sm:$0xff]
    %v666 = vld [vmem:[#allocation7 + $0xc8] sm:$0xff]
    %v667 = vld [vmem:[#allocation7 + $0xd0] sm:$0xff]
    %v668 = vld [vmem:[#allocation7 + $0xd8] sm:$0xff]
    %v669 = vld [vmem:[#allocation7 + $0xe0] sm:$0xff]
    %v670 = vld [vmem:[#allocation7 + $0xe8] sm:$0xff]
    %v671 = vld [vmem:[#allocation7 + $0xf0] sm:$0xff]
    %v672 = vld [vmem:[#allocation7 + $0xf8] sm:$0xff]
    %v673 = vld [vmem:[#allocation7 + $0x100] sm:$0xff]
    %v674 = vld [vmem:[#allocation7 + $0x108] sm:$0xff]
    %v675 = vld [vmem:[#allocation7 + $0x110] sm:$0xff]
    %v676 = vld [vmem:[#allocation7 + $0x118] sm:$0xff]
    %v677 = vld [vmem:[#allocation7 + $0x120] sm:$0xff]
    %v678 = vld [vmem:[#allocation7 + $0x128] sm:$0xff]
    %v679 = vld [vmem:[#allocation7 + $0x130] sm:$0xff]
    %v680 = vld [vmem:[#allocation7 + $0x138] sm:$0xff]
    %v681 = vld [vmem:[#allocation7 + $0x140] sm:$0xff]
    %v682 = vld [vmem:[#allocation7 + $0x148] sm:$0xff]
    %v683 = vld [vmem:[#allocation7 + $0x150] sm:$0xff]
    %v684 = vld [vmem:[#allocation7 + $0x158] sm:$0xff]
    %v685 = vld [vmem:[#allocation7 + $0x160] sm:$0xff]
    %v686 = vld [vmem:[#allocation7 + $0x168] sm:$0xff]
    %v687 = vld [vmem:[#allocation7 + $0x170] sm:$0xff]
    %v688 = vld [vmem:[#allocation7 + $0x178] sm:$0xff]
    %v689 = vld [vmem:[#allocation7 + $0x180] sm:$0xff]
    %v690 = vld [vmem:[#allocation7 + $0x188] sm:$0xff]
    %v691 = vld [vmem:[#allocation7 + $0x190] sm:$0xff]
    %v692 = vld [vmem:[#allocation7 + $0x198] sm:$0xff]
    %v693 = vld [vmem:[#allocation7 + $0x1a0] sm:$0xff]
    %v694 = vld [vmem:[#allocation7 + $0x1a8] sm:$0xff]
    %v695 = vld [vmem:[#allocation7 + $0x1b0] sm:$0xff]
    %v696 = vld [vmem:[#allocation7 + $0x1b8] sm:$0xff]
    %v697 = vld [vmem:[#allocation7 + $0x1c0] sm:$0xff]
    %v698 = vld [vmem:[#allocation7 + $0x1c8] sm:$0xff]
    %v699 = vld [vmem:[#allocation7 + $0x1d0] sm:$0xff]
    %v700 = vld [vmem:[#allocation7 + $0x1d8] sm:$0xff]
    %v701 = vld [vmem:[#allocation7 + $0x1e0] sm:$0xff]
    %v702 = vld [vmem:[#allocation7 + $0x1e8] sm:$0xff]
    %v703 = vld [vmem:[#allocation7 + $0x1f0] sm:$0xff]
    %v704 = vld [vmem:[#allocation7 + $0x1f8] sm:$0xff]
    %v705 = vld [vmem:[#allocation7 + $0x200] sm:$0xff]
    %v706 = vld [vmem:[#allocation7 + $0x208] sm:$0xff]
    %v707 = vld [vmem:[#allocation7 + $0x210] sm:$0xff]
    %v708 = vld [vmem:[#allocation7 + $0x218] sm:$0xff]
    %v709 = vld [vmem:[#allocation7 + $0x220] sm:$0xff]
    %v710 = vld [vmem:[#allocation7 + $0x228] sm:$0xff]
    %v711 = vld [vmem:[#allocation7 + $0x230] sm:$0xff]
    %v712 = vld [vmem:[#allocation7 + $0x238] sm:$0xff]
    %v713 = vld [vmem:[#allocation7 + $0x240] sm:$0xff]
    %v714 = vld [vmem:[#allocation7 + $0x248] sm:$0xff]
    %v715 = vld [vmem:[#allocation7 + $0x250] sm:$0xff]
    %v716 = vld [vmem:[#allocation7 + $0x258] sm:$0xff]
    %v717 = vld [vmem:[#allocation7 + $0x260] sm:$0xff]
    %v718 = vld [vmem:[#allocation7 + $0x268] sm:$0xff]
    %v719 = vld [vmem:[#allocation7 + $0x270] sm:$0xff]
    %v720 = vld [vmem:[#allocation7 + $0x278] sm:$0xff]
    %v721 = vld [vmem:[#allocation7 + $0x280] sm:$0xff]
    %v722 = vld [vmem:[#allocation7 + $0x288] sm:$0xff]
    %v723 = vld [vmem:[#allocation7 + $0x290] sm:$0xff]
    %v724 = vld [vmem:[#allocation7 + $0x298] sm:$0xff]
    %v725 = vld [vmem:[#allocation7 + $0x2a0] sm:$0xff]
    %v726 = vld [vmem:[#allocation7 + $0x2a8] sm:$0xff]
    %v727 = vld [vmem:[#allocation7 + $0x2b0] sm:$0xff]
    %v728 = vld [vmem:[#allocation7 + $0x2b8] sm:$0xff]
    %v729 = vld [vmem:[#allocation7 + $0x2c0] sm:$0xff]
    %v730 = vld [vmem:[#allocation7 + $0x2c8] sm:$0xff]
    %v731 = vld [vmem:[#allocation7 + $0x2d0] sm:$0xff]
    %v732 = vld [vmem:[#allocation7 + $0x2d8] sm:$0xff]
    %v733 = vld [vmem:[#allocation7 + $0x2e0] sm:$0xff]
    %v734 = vld [vmem:[#allocation7 + $0x2e8] sm:$0xff]
    %v735 = vld [vmem:[#allocation7 + $0x2f0] sm:$0xff]
    %v736 = vld [vmem:[#allocation7 + $0x2f8] sm:$0xff]
    %v737 = vld [vmem:[#allocation7 + $0x300] sm:$0xff]
    %v738 = vld [vmem:[#allocation7 + $0x308] sm:$0xff]
    %v739 = vld [vmem:[#allocation7 + $0x310] sm:$0xff]
    %v740 = vld [vmem:[#allocation7 + $0x318] sm:$0xff]
    %v741 = vld [vmem:[#allocation7 + $0x320] sm:$0xff]
    %v742 = vld [vmem:[#allocation7 + $0x328] sm:$0xff]
    %v743 = vld [vmem:[#allocation7 + $0x330] sm:$0xff]
    %v744 = vld [vmem:[#allocation7 + $0x338] sm:$0xff]
    %v745 = vld [vmem:[#allocation7 + $0x340] sm:$0xff]
    %v746 = vld [vmem:[#allocation7 + $0x348] sm:$0xff]
    %v747 = vld [vmem:[#allocation7 + $0x350] sm:$0xff]
    %v748 = vld [vmem:[#allocation7 + $0x358] sm:$0xff]
    %v749 = vld [vmem:[#allocation7 + $0x360] sm:$0xff]
    %v750 = vld [vmem:[#allocation7 + $0x368] sm:$0xff]
    %v751 = vld [vmem:[#allocation7 + $0x370] sm:$0xff]
    %v752 = vld [vmem:[#allocation7 + $0x378] sm:$0xff]
    %v753 = vld [vmem:[#allocation7 + $0x380] sm:$0xff]
    %v754 = vld [vmem:[#allocation7 + $0x388] sm:$0xff]
    %v755 = vld [vmem:[#allocation7 + $0x390] sm:$0xff]
    %v756 = vld [vmem:[#allocation7 + $0x398] sm:$0xff]
    %v757 = vld [vmem:[#allocation7 + $0x3a0] sm:$0xff]
    %v758 = vld [vmem:[#allocation7 + $0x3a8] sm:$0xff]
    %v759 = vld [vmem:[#allocation7 + $0x3b0] sm:$0xff]
    %v760 = vld [vmem:[#allocation7 + $0x3b8] sm:$0xff]
    %v761 = vld [vmem:[#allocation7 + $0x3c0] sm:$0xff]
    %v762 = vld [vmem:[#allocation7 + $0x3c8] sm:$0xff]
    %v763 = vld [vmem:[#allocation7 + $0x3d0] sm:$0xff]
    %v764 = vld [vmem:[#allocation7 + $0x3d8] sm:$0xff]
    %v765 = vld [vmem:[#allocation7 + $0x3e0] sm:$0xff]
    %v766 = vld [vmem:[#allocation7 + $0x3e8] sm:$0xff]
    %v767 = vld [vmem:[#allocation7 + $0x3f0] sm:$0xff]
    %v768 = vld [vmem:[#allocation7 + $0x3f8] sm:$0xff]
    %v770 = vunpack.c.l.b16 %v623
    %v771 = vunpack.c.h.b16 %v623
    %v772 = vpack.c.b16 %v770, %v770
    %v773 = vpack.c.b16 %v771, %v771
    %v904 = vunpack.c.l.b16 %v641
    %v905 = vunpack.c.h.b16 %v641
    %v906 = vunpack.c.l.b16 %v642
    %v907 = vunpack.c.h.b16 %v642
    %v908 = vunpack.c.l.b16 %v643
    %v909 = vunpack.c.h.b16 %v643
    %v910 = vunpack.c.l.b16 %v644
    %v911 = vunpack.c.h.b16 %v644
    %v912 = vunpack.c.l.b16 %v645
    %v913 = vunpack.c.h.b16 %v645
    %v914 = vunpack.c.l.b16 %v646
    %v915 = vunpack.c.h.b16 %v646
    %v916 = vunpack.c.l.b16 %v647
    %v917 = vunpack.c.h.b16 %v647
    %v918 = vunpack.c.l.b16 %v648
    %v919 = vunpack.c.h.b16 %v648
    %v920 = vunpack.c.l.b16 %v649
    %v921 = vunpack.c.h.b16 %v649
    %v922 = vunpack.c.l.b16 %v650
    %v923 = vunpack.c.h.b16 %v650
    %v924 = vunpack.c.l.b16 %v651
    %v925 = vunpack.c.h.b16 %v651
    %v926 = vunpack.c.l.b16 %v652
    %v927 = vunpack.c.h.b16 %v652
    %v928 = vunpack.c.l.b16 %v653
    %v929 = vunpack.c.h.b16 %v653
    %v930 = vunpack.c.l.b16 %v654
    %v931 = vunpack.c.h.b16 %v654
    %v932 = vunpack.c.l.b16 %v655
    %v933 = vunpack.c.h.b16 %v655
    %v934 = vunpack.c.l.b16 %v656
    %v935 = vunpack.c.h.b16 %v656
    %v936 = vunpack.c.l.b16 %v657
    %v937 = vunpack.c.h.b16 %v657
    %v938 = vunpack.c.l.b16 %v658
    %v939 = vunpack.c.h.b16 %v658
    %v940 = vunpack.c.l.b16 %v659
    %v941 = vunpack.c.h.b16 %v659
    %v942 = vunpack.c.l.b16 %v660
    %v943 = vunpack.c.h.b16 %v660
    %v944 = vunpack.c.l.b16 %v661
    %v945 = vunpack.c.h.b16 %v661
    %v946 = vunpack.c.l.b16 %v662
    %v947 = vunpack.c.h.b16 %v662
    %v948 = vunpack.c.l.b16 %v663
    %v949 = vunpack.c.h.b16 %v663
    %v950 = vunpack.c.l.b16 %v664
    %v951 = vunpack.c.h.b16 %v664
    %v952 = vunpack.c.l.b16 %v665
    %v953 = vunpack.c.h.b16 %v665
    %v954 = vunpack.c.l.b16 %v666
    %v955 = vunpack.c.h.b16 %v666
    %v956 = vunpack.c.l.b16 %v667
    %v957 = vunpack.c.h.b16 %v667
    %v958 = vunpack.c.l.b16 %v668
    %v959 = vunpack.c.h.b16 %v668
    %v960 = vunpack.c.l.b16 %v669
    %v961 = vunpack.c.h.b16 %v669
    %v962 = vunpack.c.l.b16 %v670
    %v963 = vunpack.c.h.b16 %v670
    %v964 = vunpack.c.l.b16 %v671
    %v965 = vunpack.c.h.b16 %v671
    %v966 = vunpack.c.l.b16 %v672
    %v967 = vunpack.c.h.b16 %v672
    %v968 = vunpack.c.l.b16 %v673
    %v969 = vunpack.c.h.b16 %v673
    %v970 = vunpack.c.l.b16 %v674
    %v971 = vunpack.c.h.b16 %v674
    %v972 = vunpack.c.l.b16 %v675
    %v973 = vunpack.c.h.b16 %v675
    %v974 = vunpack.c.l.b16 %v676
    %v975 = vunpack.c.h.b16 %v676
    %v976 = vunpack.c.l.b16 %v677
    %v977 = vunpack.c.h.b16 %v677
    %v978 = vunpack.c.l.b16 %v678
    %v979 = vunpack.c.h.b16 %v678
    %v980 = vunpack.c.l.b16 %v679
    %v981 = vunpack.c.h.b16 %v679
    %v982 = vunpack.c.l.b16 %v680
    %v983 = vunpack.c.h.b16 %v680
    %v984 = vunpack.c.l.b16 %v681
    %v985 = vunpack.c.h.b16 %v681
    %v986 = vunpack.c.l.b16 %v682
    %v987 = vunpack.c.h.b16 %v682
    %v988 = vunpack.c.l.b16 %v683
    %v989 = vunpack.c.h.b16 %v683
    %v990 = vunpack.c.l.b16 %v684
    %v991 = vunpack.c.h.b16 %v684
    %v992 = vunpack.c.l.b16 %v685
    %v993 = vunpack.c.h.b16 %v685
    %v994 = vunpack.c.l.b16 %v686
    %v995 = vunpack.c.h.b16 %v686
    %v996 = vunpack.c.l.b16 %v687
    %v997 = vunpack.c.h.b16 %v687
    %v998 = vunpack.c.l.b16 %v688
    %v999 = vunpack.c.h.b16 %v688
    %v1000 = vunpack.c.l.b16 %v689
    %v1001 = vunpack.c.h.b16 %v689
    %v1002 = vunpack.c.l.b16 %v690
    %v1003 = vunpack.c.h.b16 %v690
    %v1004 = vunpack.c.l.b16 %v691
    %v1005 = vunpack.c.h.b16 %v691
    %v1006 = vunpack.c.l.b16 %v692
    %v1007 = vunpack.c.h.b16 %v692
    %v1008 = vunpack.c.l.b16 %v693
    %v1009 = vunpack.c.h.b16 %v693
    %v1010 = vunpack.c.l.b16 %v694
    %v1011 = vunpack.c.h.b16 %v694
    %v1012 = vunpack.c.l.b16 %v695
    %v1013 = vunpack.c.h.b16 %v695
    %v1014 = vunpack.c.l.b16 %v696
    %v1015 = vunpack.c.h.b16 %v696
    %v1016 = vunpack.c.l.b16 %v697
    %v1017 = vunpack.c.h.b16 %v697
    %v1018 = vunpack.c.l.b16 %v698
    %v1019 = vunpack.c.h.b16 %v698
    %v1020 = vunpack.c.l.b16 %v699
    %v1021 = vunpack.c.h.b16 %v699
    %v1022 = vunpack.c.l.b16 %v700
    %v1023 = vunpack.c.h.b16 %v700
    %v1024 = vunpack.c.l.b16 %v701
    %v1025 = vunpack.c.h.b16 %v701
    %v1026 = vunpack.c.l.b16 %v702
    %v1027 = vunpack.c.h.b16 %v702
    %v1028 = vunpack.c.l.b16 %v703
    %v1029 = vunpack.c.h.b16 %v703
    %v1030 = vunpack.c.l.b16 %v704
    %v1031 = vunpack.c.h.b16 %v704
    %v1032 = vunpack.c.l.b16 %v705
    %v1033 = vunpack.c.h.b16 %v705
    %v1034 = vunpack.c.l.b16 %v706
    %v1035 = vunpack.c.h.b16 %v706
    %v1036 = vunpack.c.l.b16 %v707
    %v1037 = vunpack.c.h.b16 %v707
    %v1038 = vunpack.c.l.b16 %v708
    %v1039 = vunpack.c.h.b16 %v708
    %v1040 = vunpack.c.l.b16 %v709
    %v1041 = vunpack.c.h.b16 %v709
    %v1042 = vunpack.c.l.b16 %v710
    %v1043 = vunpack.c.h.b16 %v710
    %v1044 = vunpack.c.l.b16 %v711
    %v1045 = vunpack.c.h.b16 %v711
    %v1046 = vunpack.c.l.b16 %v712
    %v1047 = vunpack.c.h.b16 %v712
    %v1048 = vunpack.c.l.b16 %v713
    %v1049 = vunpack.c.h.b16 %v713
    %v1050 = vunpack.c.l.b16 %v714
    %v1051 = vunpack.c.h.b16 %v714
    %v1052 = vunpack.c.l.b16 %v715
    %v1053 = vunpack.c.h.b16 %v715
    %v1054 = vunpack.c.l.b16 %v716
    %v1055 = vunpack.c.h.b16 %v716
    %v1056 = vunpack.c.l.b16 %v717
    %v1057 = vunpack.c.h.b16 %v717
    %v1058 = vunpack.c.l.b16 %v718
    %v1059 = vunpack.c.h.b16 %v718
    %v1060 = vunpack.c.l.b16 %v719
    %v1061 = vunpack.c.h.b16 %v719
    %v1062 = vunpack.c.l.b16 %v720
    %v1063 = vunpack.c.h.b16 %v720
    %v1064 = vunpack.c.l.b16 %v721
    %v1065 = vunpack.c.h.b16 %v721
    %v1066 = vunpack.c.l.b16 %v722
    %v1067 = vunpack.c.h.b16 %v722
    %v1068 = vunpack.c.l.b16 %v723
    %v1069 = vunpack.c.h.b16 %v723
    %v1070 = vunpack.c.l.b16 %v724
    %v1071 = vunpack.c.h.b16 %v724
    %v1072 = vunpack.c.l.b16 %v725
    %v1073 = vunpack.c.h.b16 %v725
    %v1074 = vunpack.c.l.b16 %v726
    %v1075 = vunpack.c.h.b16 %v726
    %v1076 = vunpack.c.l.b16 %v727
    %v1077 = vunpack.c.h.b16 %v727
    %v1078 = vunpack.c.l.b16 %v728
    %v1079 = vunpack.c.h.b16 %v728
    %v1080 = vunpack.c.l.b16 %v729
    %v1081 = vunpack.c.h.b16 %v729
    %v1082 = vunpack.c.l.b16 %v730
    %v1083 = vunpack.c.h.b16 %v730
    %v1084 = vunpack.c.l.b16 %v731
    %v1085 = vunpack.c.h.b16 %v731
    %v1086 = vunpack.c.l.b16 %v732
    %v1087 = vunpack.c.h.b16 %v732
    %v1088 = vunpack.c.l.b16 %v733
    %v1089 = vunpack.c.h.b16 %v733
    %v1090 = vunpack.c.l.b16 %v734
    %v1091 = vunpack.c.h.b16 %v734
    %v1092 = vunpack.c.l.b16 %v735
    %v1093 = vunpack.c.h.b16 %v735
    %v1094 = vunpack.c.l.b16 %v736
    %v1095 = vunpack.c.h.b16 %v736
    %v1096 = vunpack.c.l.b16 %v737
    %v1097 = vunpack.c.h.b16 %v737
    %v1098 = vunpack.c.l.b16 %v738
    %v1099 = vunpack.c.h.b16 %v738
    %v1100 = vunpack.c.l.b16 %v739
    %v1101 = vunpack.c.h.b16 %v739
    %v1102 = vunpack.c.l.b16 %v740
    %v1103 = vunpack.c.h.b16 %v740
    %v1104 = vunpack.c.l.b16 %v741
    %v1105 = vunpack.c.h.b16 %v741
    %v1106 = vunpack.c.l.b16 %v742
    %v1107 = vunpack.c.h.b16 %v742
    %v1108 = vunpack.c.l.b16 %v743
    %v1109 = vunpack.c.h.b16 %v743
    %v1110 = vunpack.c.l.b16 %v744
    %v1111 = vunpack.c.h.b16 %v744
    %v1112 = vunpack.c.l.b16 %v745
    %v1113 = vunpack.c.h.b16 %v745
    %v1114 = vunpack.c.l.b16 %v746
    %v1115 = vunpack.c.h.b16 %v746
    %v1116 = vunpack.c.l.b16 %v747
    %v1117 = vunpack.c.h.b16 %v747
    %v1118 = vunpack.c.l.b16 %v748
    %v1119 = vunpack.c.h.b16 %v748
    %v1120 = vunpack.c.l.b16 %v749
    %v1121 = vunpack.c.h.b16 %v749
    %v1122 = vunpack.c.l.b16 %v750
    %v1123 = vunpack.c.h.b16 %v750
    %v1124 = vunpack.c.l.b16 %v751
    %v1125 = vunpack.c.h.b16 %v751
    %v1126 = vunpack.c.l.b16 %v752
    %v1127 = vunpack.c.h.b16 %v752
    %v1128 = vunpack.c.l.b16 %v753
    %v1129 = vunpack.c.h.b16 %v753
    %v1130 = vunpack.c.l.b16 %v754
    %v1131 = vunpack.c.h.b16 %v754
    %v1132 = vunpack.c.l.b16 %v755
    %v1133 = vunpack.c.h.b16 %v755
    %v1134 = vunpack.c.l.b16 %v756
    %v1135 = vunpack.c.h.b16 %v756
    %v1136 = vunpack.c.l.b16 %v757
    %v1137 = vunpack.c.h.b16 %v757
    %v1138 = vunpack.c.l.b16 %v758
    %v1139 = vunpack.c.h.b16 %v758
    %v1140 = vunpack.c.l.b16 %v759
    %v1141 = vunpack.c.h.b16 %v759
    %v1142 = vunpack.c.l.b16 %v760
    %v1143 = vunpack.c.h.b16 %v760
    %v1144 = vunpack.c.l.b16 %v761
    %v1145 = vunpack.c.h.b16 %v761
    %v1146 = vunpack.c.l.b16 %v762
    %v1147 = vunpack.c.h.b16 %v762
    %v1148 = vunpack.c.l.b16 %v763
    %v1149 = vunpack.c.h.b16 %v763
    %v1150 = vunpack.c.l.b16 %v764
    %v1151 = vunpack.c.h.b16 %v764
    %v1152 = vunpack.c.l.b16 %v765
    %v1153 = vunpack.c.h.b16 %v765
    %v1154 = vunpack.c.l.b16 %v766
    %v1155 = vunpack.c.h.b16 %v766
    %v1156 = vunpack.c.l.b16 %v767
    %v1157 = vunpack.c.h.b16 %v767
    %v1158 = vunpack.c.l.b16 %v768
    %v1159 = vunpack.c.h.b16 %v768
    %v1160 = vpack.c.b16 %v912, %v904
    %v1161 = vpack.c.b16 %v913, %v905
    %v1162 = vpack.c.b16 %v914, %v906
    %v1163 = vpack.c.b16 %v915, %v907
    %v1164 = vpack.c.b16 %v916, %v908
    %v1165 = vpack.c.b16 %v917, %v909
    %v1166 = vpack.c.b16 %v918, %v910
    %v1167 = vpack.c.b16 %v919, %v911
    %v1168 = vpack.c.b16 %v928, %v920
    %v1169 = vpack.c.b16 %v929, %v921
    %v1170 = vpack.c.b16 %v930, %v922
    %v1171 = vpack.c.b16 %v931, %v923
    %v1172 = vpack.c.b16 %v932, %v924
    %v1173 = vpack.c.b16 %v933, %v925
    %v1174 = vpack.c.b16 %v934, %v926
    %v1175 = vpack.c.b16 %v935, %v927
    %v1176 = vpack.c.b16 %v944, %v936
    %v1177 = vpack.c.b16 %v945, %v937
    %v1178 = vpack.c.b16 %v946, %v938
    %v1179 = vpack.c.b16 %v947, %v939
    %v1180 = vpack.c.b16 %v948, %v940
    %v1181 = vpack.c.b16 %v949, %v941
    %v1182 = vpack.c.b16 %v950, %v942
    %v1183 = vpack.c.b16 %v951, %v943
    %v1184 = vpack.c.b16 %v960, %v952
    %v1185 = vpack.c.b16 %v961, %v953
    %v1186 = vpack.c.b16 %v962, %v954
    %v1187 = vpack.c.b16 %v963, %v955
    %v1188 = vpack.c.b16 %v964, %v956
    %v1189 = vpack.c.b16 %v965, %v957
    %v1190 = vpack.c.b16 %v966, %v958
    %v1191 = vpack.c.b16 %v967, %v959
    %v1192 = vpack.c.b16 %v976, %v968
    %v1193 = vpack.c.b16 %v977, %v969
    %v1194 = vpack.c.b16 %v978, %v970
    %v1195 = vpack.c.b16 %v979, %v971
    %v1196 = vpack.c.b16 %v980, %v972
    %v1197 = vpack.c.b16 %v981, %v973
    %v1198 = vpack.c.b16 %v982, %v974
    %v1199 = vpack.c.b16 %v983, %v975
    %v1200 = vpack.c.b16 %v992, %v984
    %v1201 = vpack.c.b16 %v993, %v985
    %v1202 = vpack.c.b16 %v994, %v986
    %v1203 = vpack.c.b16 %v995, %v987
    %v1204 = vpack.c.b16 %v996, %v988
    %v1205 = vpack.c.b16 %v997, %v989
    %v1206 = vpack.c.b16 %v998, %v990
    %v1207 = vpack.c.b16 %v999, %v991
    %v1208 = vpack.c.b16 %v1008, %v1000
    %v1209 = vpack.c.b16 %v1009, %v1001
    %v1210 = vpack.c.b16 %v1010, %v1002
    %v1211 = vpack.c.b16 %v1011, %v1003
    %v1212 = vpack.c.b16 %v1012, %v1004
    %v1213 = vpack.c.b16 %v1013, %v1005
    %v1214 = vpack.c.b16 %v1014, %v1006
    %v1215 = vpack.c.b16 %v1015, %v1007
    %v1216 = vpack.c.b16 %v1024, %v1016
    %v1217 = vpack.c.b16 %v1025, %v1017
    %v1218 = vpack.c.b16 %v1026, %v1018
    %v1219 = vpack.c.b16 %v1027, %v1019
    %v1220 = vpack.c.b16 %v1028, %v1020
    %v1221 = vpack.c.b16 %v1029, %v1021
    %v1222 = vpack.c.b16 %v1030, %v1022
    %v1223 = vpack.c.b16 %v1031, %v1023
    %v1224 = vpack.c.b16 %v1040, %v1032
    %v1225 = vpack.c.b16 %v1041, %v1033
    %v1226 = vpack.c.b16 %v1042, %v1034
    %v1227 = vpack.c.b16 %v1043, %v1035
    %v1228 = vpack.c.b16 %v1044, %v1036
    %v1229 = vpack.c.b16 %v1045, %v1037
    %v1230 = vpack.c.b16 %v1046, %v1038
    %v1231 = vpack.c.b16 %v1047, %v1039
    %v1232 = vpack.c.b16 %v1056, %v1048
    %v1233 = vpack.c.b16 %v1057, %v1049
    %v1234 = vpack.c.b16 %v1058, %v1050
    %v1235 = vpack.c.b16 %v1059, %v1051
    %v1236 = vpack.c.b16 %v1060, %v1052
    %v1237 = vpack.c.b16 %v1061, %v1053
    %v1238 = vpack.c.b16 %v1062, %v1054
    %v1239 = vpack.c.b16 %v1063, %v1055
    %v1240 = vpack.c.b16 %v1072, %v1064
    %v1241 = vpack.c.b16 %v1073, %v1065
    %v1242 = vpack.c.b16 %v1074, %v1066
    %v1243 = vpack.c.b16 %v1075, %v1067
    %v1244 = vpack.c.b16 %v1076, %v1068
    %v1245 = vpack.c.b16 %v1077, %v1069
    %v1246 = vpack.c.b16 %v1078, %v1070
    %v1247 = vpack.c.b16 %v1079, %v1071
    %v1248 = vpack.c.b16 %v1088, %v1080
    %v1249 = vpack.c.b16 %v1089, %v1081
    %v1250 = vpack.c.b16 %v1090, %v1082
    %v1251 = vpack.c.b16 %v1091, %v1083
    %v1252 = vpack.c.b16 %v1092, %v1084
    %v1253 = vpack.c.b16 %v1093, %v1085
    %v1254 = vpack.c.b16 %v1094, %v1086
    %v1255 = vpack.c.b16 %v1095, %v1087
    %v1256 = vpack.c.b16 %v1104, %v1096
    %v1257 = vpack.c.b16 %v1105, %v1097
    %v1258 = vpack.c.b16 %v1106, %v1098
    %v1259 = vpack.c.b16 %v1107, %v1099
    %v1260 = vpack.c.b16 %v1108, %v1100
    %v1261 = vpack.c.b16 %v1109, %v1101
    %v1262 = vpack.c.b16 %v1110, %v1102
    %v1263 = vpack.c.b16 %v1111, %v1103
    %v1264 = vpack.c.b16 %v1120, %v1112
    %v1265 = vpack.c.b16 %v1121, %v1113
    %v1266 = vpack.c.b16 %v1122, %v1114
    %v1267 = vpack.c.b16 %v1123, %v1115
    %v1268 = vpack.c.b16 %v1124, %v1116
    %v1269 = vpack.c.b16 %v1125, %v1117
    %v1270 = vpack.c.b16 %v1126, %v1118
    %v1271 = vpack.c.b16 %v1127, %v1119
    %v1272 = vpack.c.b16 %v1136, %v1128
    %v1273 = vpack.c.b16 %v1137, %v1129
    %v1274 = vpack.c.b16 %v1138, %v1130
    %v1275 = vpack.c.b16 %v1139, %v1131
    %v1276 = vpack.c.b16 %v1140, %v1132
    %v1277 = vpack.c.b16 %v1141, %v1133
    %v1278 = vpack.c.b16 %v1142, %v1134
    %v1279 = vpack.c.b16 %v1143, %v1135
    %v1280 = vpack.c.b16 %v1152, %v1144
    %v1281 = vpack.c.b16 %v1153, %v1145
    %v1282 = vpack.c.b16 %v1154, %v1146
    %v1283 = vpack.c.b16 %v1155, %v1147
    %v1284 = vpack.c.b16 %v1156, %v1148
    %v1285 = vpack.c.b16 %v1157, %v1149
    %v1286 = vpack.c.b16 %v1158, %v1150
    %v1287 = vpack.c.b16 %v1159, %v1151
    %1416 = vmatpush.bf16.msra.mxu0 %v1216
    %1417 = vmatpush.bf16.msra.mxu0 %v1208
    %1418 = vmatpush.bf16.msra.mxu0 %v1200
    %1419 = vmatpush.bf16.msra.mxu0 %v1192
    %1420 = vmatpush.bf16.msra.mxu0 %v1184
    %1421 = vmatpush.bf16.msra.mxu0 %v1176
    %1422 = vmatpush.bf16.msra.mxu0 %v1168
    %1423 = vmatpush.bf16.msra.mxu0 %v1160
    %1424 = vmatmul.bf16.gmra.mxu0 %v772
    %v1425 = vpop.f32.mrf.mxu0
    %v1426 = vadd.f32 0.0, %v1425
    %v1427 = vpop.f32.mrf.mxu0
    %1428 = vdwg.mxu0
    %1429 = vmatpush.bf16.msra.mxu0 %v1280
    %1430 = vmatpush.bf16.msra.mxu0 %v1272
    %1431 = vmatpush.bf16.msra.mxu0 %v1264
    %1432 = vmatpush.bf16.msra.mxu0 %v1256
    %1433 = vmatpush.bf16.msra.mxu0 %v1248
    %1434 = vmatpush.bf16.msra.mxu0 %v1240
    %1435 = vmatpush.bf16.msra.mxu0 %v1232
    %1436 = vmatpush.bf16.msra.mxu0 %v1224
    %1437 = vmatmul.bf16.gmra.mxu0 %v773
    %v1438 = vpop.f32.mrf.mxu0
    %v1439 = vadd.f32 %v1426, %v1438
    %v1440 = vpop.f32.mrf.mxu0
    %1441 = vdwg.mxu0
    %1442 = vmatpush.bf16.msra.mxu0 %v1217
    %1443 = vmatpush.bf16.msra.mxu0 %v1209
    %1444 = vmatpush.bf16.msra.mxu0 %v1201
    %1445 = vmatpush.bf16.msra.mxu0 %v1193
    %1446 = vmatpush.bf16.msra.mxu0 %v1185
    %1447 = vmatpush.bf16.msra.mxu0 %v1177
    %1448 = vmatpush.bf16.msra.mxu0 %v1169
    %1449 = vmatpush.bf16.msra.mxu0 %v1161
    %1450 = vmatmul.bf16.gmra.mxu0 %v772
    %v1451 = vpop.f32.mrf.mxu0
    %v1452 = vadd.f32 0.0, %v1451
    %v1453 = vpop.f32.mrf.mxu0
    %1454 = vdwg.mxu0
    %1455 = vmatpush.bf16.msra.mxu0 %v1281
    %1456 = vmatpush.bf16.msra.mxu0 %v1273
    %1457 = vmatpush.bf16.msra.mxu0 %v1265
    %1458 = vmatpush.bf16.msra.mxu0 %v1257
    %1459 = vmatpush.bf16.msra.mxu0 %v1249
    %1460 = vmatpush.bf16.msra.mxu0 %v1241
    %1461 = vmatpush.bf16.msra.mxu0 %v1233
    %1462 = vmatpush.bf16.msra.mxu0 %v1225
    %1463 = vmatmul.bf16.gmra.mxu0 %v773
    %v1464 = vpop.f32.mrf.mxu0
    %v1465 = vadd.f32 %v1452, %v1464
    %v1466 = vpop.f32.mrf.mxu0
    %1467 = vdwg.mxu0
    %1468 = vmatpush.bf16.msra.mxu0 %v1218
    %1469 = vmatpush.bf16.msra.mxu0 %v1210
    %1470 = vmatpush.bf16.msra.mxu0 %v1202
    %1471 = vmatpush.bf16.msra.mxu0 %v1194
    %1472 = vmatpush.bf16.msra.mxu0 %v1186
    %1473 = vmatpush.bf16.msra.mxu0 %v1178
    %1474 = vmatpush.bf16.msra.mxu0 %v1170
    %1475 = vmatpush.bf16.msra.mxu0 %v1162
    %1476 = vmatmul.bf16.gmra.mxu0 %v772
    %v1477 = vpop.f32.mrf.mxu0
    %v1478 = vadd.f32 0.0, %v1477
    %v1479 = vpop.f32.mrf.mxu0
    %1480 = vdwg.mxu0
    %1481 = vmatpush.bf16.msra.mxu0 %v1282
    %1482 = vmatpush.bf16.msra.mxu0 %v1274
    %1483 = vmatpush.bf16.msra.mxu0 %v1266
    %1484 = vmatpush.bf16.msra.mxu0 %v1258
    %1485 = vmatpush.bf16.msra.mxu0 %v1250
    %1486 = vmatpush.bf16.msra.mxu0 %v1242
    %1487 = vmatpush.bf16.msra.mxu0 %v1234
    %1488 = vmatpush.bf16.msra.mxu0 %v1226
    %1489 = vmatmul.bf16.gmra.mxu0 %v773
    %v1490 = vpop.f32.mrf.mxu0
    %v1491 = vadd.f32 %v1478, %v1490
    %v1492 = vpop.f32.mrf.mxu0
    %1493 = vdwg.mxu0
    %1494 = vmatpush.bf16.msra.mxu0 %v1219
    %1495 = vmatpush.bf16.msra.mxu0 %v1211
    %1496 = vmatpush.bf16.msra.mxu0 %v1203
    %1497 = vmatpush.bf16.msra.mxu0 %v1195
    %1498 = vmatpush.bf16.msra.mxu0 %v1187
    %1499 = vmatpush.bf16.msra.mxu0 %v1179
    %1500 = vmatpush.bf16.msra.mxu0 %v1171
    %1501 = vmatpush.bf16.msra.mxu0 %v1163
    %1502 = vmatmul.bf16.gmra.mxu0 %v772
    %v1503 = vpop.f32.mrf.mxu0
    %v1504 = vadd.f32 0.0, %v1503
    %v1505 = vpop.f32.mrf.mxu0
    %1506 = vdwg.mxu0
    %1507 = vmatpush.bf16.msra.mxu0 %v1283
    %1508 = vmatpush.bf16.msra.mxu0 %v1275
    %1509 = vmatpush.bf16.msra.mxu0 %v1267
    %1510 = vmatpush.bf16.msra.mxu0 %v1259
    %1511 = vmatpush.bf16.msra.mxu0 %v1251
    %1512 = vmatpush.bf16.msra.mxu0 %v1243
    %1513 = vmatpush.bf16.msra.mxu0 %v1235
    %1514 = vmatpush.bf16.msra.mxu0 %v1227
    %1515 = vmatmul.bf16.gmra.mxu0 %v773
    %v1516 = vpop.f32.mrf.mxu0
    %v1517 = vadd.f32 %v1504, %v1516
    %v1518 = vpop.f32.mrf.mxu0
    %1519 = vdwg.mxu0
    %1520 = vmatpush.bf16.msra.mxu0 %v1220
    %1521 = vmatpush.bf16.msra.mxu0 %v1212
    %1522 = vmatpush.bf16.msra.mxu0 %v1204
    %1523 = vmatpush.bf16.msra.mxu0 %v1196
    %1524 = vmatpush.bf16.msra.mxu0 %v1188
    %1525 = vmatpush.bf16.msra.mxu0 %v1180
    %1526 = vmatpush.bf16.msra.mxu0 %v1172
    %1527 = vmatpush.bf16.msra.mxu0 %v1164
    %1528 = vmatmul.bf16.gmra.mxu0 %v772
    %v1529 = vpop.f32.mrf.mxu0
    %v1530 = vadd.f32 0.0, %v1529
    %v1531 = vpop.f32.mrf.mxu0
    %1532 = vdwg.mxu0
    %1533 = vmatpush.bf16.msra.mxu0 %v1284
    %1534 = vmatpush.bf16.msra.mxu0 %v1276
    %1535 = vmatpush.bf16.msra.mxu0 %v1268
    %1536 = vmatpush.bf16.msra.mxu0 %v1260
    %1537 = vmatpush.bf16.msra.mxu0 %v1252
    %1538 = vmatpush.bf16.msra.mxu0 %v1244
    %1539 = vmatpush.bf16.msra.mxu0 %v1236
    %1540 = vmatpush.bf16.msra.mxu0 %v1228
    %1541 = vmatmul.bf16.gmra.mxu0 %v773
    %v1542 = vpop.f32.mrf.mxu0
    %v1543 = vadd.f32 %v1530, %v1542
    %v1544 = vpop.f32.mrf.mxu0
    %1545 = vdwg.mxu0
    %1546 = vmatpush.bf16.msra.mxu0 %v1221
    %1547 = vmatpush.bf16.msra.mxu0 %v1213
    %1548 = vmatpush.bf16.msra.mxu0 %v1205
    %1549 = vmatpush.bf16.msra.mxu0 %v1197
    %1550 = vmatpush.bf16.msra.mxu0 %v1189
    %1551 = vmatpush.bf16.msra.mxu0 %v1181
    %1552 = vmatpush.bf16.msra.mxu0 %v1173
    %1553 = vmatpush.bf16.msra.mxu0 %v1165
    %1554 = vmatmul.bf16.gmra.mxu0 %v772
    %v1555 = vpop.f32.mrf.mxu0
    %v1556 = vadd.f32 0.0, %v1555
    %v1557 = vpop.f32.mrf.mxu0
    %1558 = vdwg.mxu0
    %1559 = vmatpush.bf16.msra.mxu0 %v1285
    %1560 = vmatpush.bf16.msra.mxu0 %v1277
    %1561 = vmatpush.bf16.msra.mxu0 %v1269
    %1562 = vmatpush.bf16.msra.mxu0 %v1261
    %1563 = vmatpush.bf16.msra.mxu0 %v1253
    %1564 = vmatpush.bf16.msra.mxu0 %v1245
    %1565 = vmatpush.bf16.msra.mxu0 %v1237
    %1566 = vmatpush.bf16.msra.mxu0 %v1229
    %1567 = vmatmul.bf16.gmra.mxu0 %v773
    %v1568 = vpop.f32.mrf.mxu0
    %v1569 = vadd.f32 %v1556, %v1568
    %v1570 = vpop.f32.mrf.mxu0
    %1571 = vdwg.mxu0
    %1572 = vmatpush.bf16.msra.mxu0 %v1222
    %1573 = vmatpush.bf16.msra.mxu0 %v1214
    %1574 = vmatpush.bf16.msra.mxu0 %v1206
    %1575 = vmatpush.bf16.msra.mxu0 %v1198
    %1576 = vmatpush.bf16.msra.mxu0 %v1190
    %1577 = vmatpush.bf16.msra.mxu0 %v1182
    %1578 = vmatpush.bf16.msra.mxu0 %v1174
    %1579 = vmatpush.bf16.msra.mxu0 %v1166
    %1580 = vmatmul.bf16.gmra.mxu0 %v772
    %v1581 = vpop.f32.mrf.mxu0
    %v1582 = vadd.f32 0.0, %v1581
    %v1583 = vpop.f32.mrf.mxu0
    %1584 = vdwg.mxu0
    %1585 = vmatpush.bf16.msra.mxu0 %v1286
    %1586 = vmatpush.bf16.msra.mxu0 %v1278
    %1587 = vmatpush.bf16.msra.mxu0 %v1270
    %1588 = vmatpush.bf16.msra.mxu0 %v1262
    %1589 = vmatpush.bf16.msra.mxu0 %v1254
    %1590 = vmatpush.bf16.msra.mxu0 %v1246
    %1591 = vmatpush.bf16.msra.mxu0 %v1238
    %1592 = vmatpush.bf16.msra.mxu0 %v1230
    %1593 = vmatmul.bf16.gmra.mxu0 %v773
    %v1594 = vpop.f32.mrf.mxu0
    %v1595 = vadd.f32 %v1582, %v1594
    %v1596 = vpop.f32.mrf.mxu0
    %1597 = vdwg.mxu0
    %1598 = vmatpush.bf16.msra.mxu0 %v1223
    %1599 = vmatpush.bf16.msra.mxu0 %v1215
    %1600 = vmatpush.bf16.msra.mxu0 %v1207
    %1601 = vmatpush.bf16.msra.mxu0 %v1199
    %1602 = vmatpush.bf16.msra.mxu0 %v1191
    %1603 = vmatpush.bf16.msra.mxu0 %v1183
    %1604 = vmatpush.bf16.msra.mxu0 %v1175
    %1605 = vmatpush.bf16.msra.mxu0 %v1167
    %1606 = vmatmul.bf16.gmra.mxu0 %v772
    %v1607 = vpop.f32.mrf.mxu0
    %v1608 = vadd.f32 0.0, %v1607
    %v1609 = vpop.f32.mrf.mxu0
    %1610 = vdwg.mxu0
    %1611 = vmatpush.bf16.msra.mxu0 %v1287
    %1612 = vmatpush.bf16.msra.mxu0 %v1279
    %1613 = vmatpush.bf16.msra.mxu0 %v1271
    %1614 = vmatpush.bf16.msra.mxu0 %v1263
    %1615 = vmatpush.bf16.msra.mxu0 %v1255
    %1616 = vmatpush.bf16.msra.mxu0 %v1247
    %1617 = vmatpush.bf16.msra.mxu0 %v1239
    %1618 = vmatpush.bf16.msra.mxu0 %v1231
    %1619 = vmatmul.bf16.gmra.mxu0 %v773
    %v1620 = vpop.f32.mrf.mxu0
    %v1621 = vadd.f32 %v1608, %v1620
    %v1622 = vpop.f32.mrf.mxu0
    %1623 = vdwg.mxu0
    %v1624 = vadd.f32 %v633, %v1439
    %v1625 = vadd.f32 %v634, %v1465
    %v1626 = vadd.f32 %v635, %v1491
    %v1627 = vadd.f32 %v636, %v1517
    %v1628 = vadd.f32 %v637, %v1543
    %v1629 = vadd.f32 %v638, %v1569
    %v1630 = vadd.f32 %v639, %v1595
    %v1631 = vadd.f32 %v640, %v1621
    %v1632 = vmul.f32 %v1624, 0.5
    %v1633 = vmul.f32 %v1625, 0.5
    %v1634 = vtanh.pop %v1632
    %v1635 = vtanh.pop %v1633
    %v1636 = vmul.f32 %v1634, 0.5
    %v1637 = vmul.f32 %v1635, 0.5
    %v1638 = vadd.f32 %v1636, 0.5
    %v1639 = vadd.f32 %v1637, 0.5
    %v1640 = vmul.f32 %v1626, 0.5
    %v1641 = vmul.f32 %v1627, 0.5
    %v1642 = vtanh.pop %v1640
    %v1643 = vtanh.pop %v1641
    %v1644 = vmul.f32 %v1642, 0.5
    %v1645 = vmul.f32 %v1643, 0.5
    %v1646 = vadd.f32 %v1644, 0.5
    %v1647 = vadd.f32 %v1645, 0.5
    %v1648 = vtanh.pop %v1628
    %v1649 = vtanh.pop %v1629
    %v1650 = vmul.f32 %v1630, 0.5
    %v1651 = vmul.f32 %v1631, 0.5
    %v1652 = vtanh.pop %v1650
    %v1653 = vtanh.pop %v1651
    %v1654 = vmul.f32 %v1652, 0.5
    %v1655 = vmul.f32 %v1653, 0.5
    %v1656 = vadd.f32 %v1654, 0.5
    %v1657 = vadd.f32 %v1655, 0.5
    %v1658 = vmul.f32 %v1646, %v624
    %v1659 = vmul.f32 %v1647, %v625
    %v1660 = vmul.f32 %v1638, %v1648
    %v1661 = vmul.f32 %v1639, %v1649
    %v1662 = vadd.f32 %v1658, %v1660
    %v1663 = vadd.f32 %v1659, %v1661
    %v1664 = vtanh.pop %v1662
    %v1665 = vtanh.pop %v1663
    %v1666 = vmul.f32 %v1656, %v1664
    %v1667 = vmul.f32 %v1657, %v1665
    %v1668 = vpack.c.bf16 %v1666, %v1666
    %v1669 = vpack.c.bf16 %v1667, %v1667
    %s1670 = smul.u32 1, 8
    %s1671 = smul.addr %s1670, 4
    %s1672 = scalar_lea.vmem [#allocation2], %s1671
    %v1673 = vld [vmem:[%s1672] sm:$0xff]
    %v1674 = vld [vmem:[%s1672 + $0x8] sm:$0xff]
    %v1675 = vld [vmem:[%s1672 + $0x10] sm:$0xff]
    %v1676 = vld [vmem:[%s1672 + $0x18] sm:$0xff]
    %v1677 = vunpack.c.l.bf16 %v1673
    %v1678 = vunpack.c.h.bf16 %v1673
    %v1679 = vunpack.c.l.bf16 %v1674
    %v1680 = vunpack.c.h.bf16 %v1674
    %v1681 = vunpack.c.l.bf16 %v1675
    %v1682 = vunpack.c.h.bf16 %v1675
    %v1683 = vunpack.c.l.bf16 %v1676
    %v1684 = vunpack.c.h.bf16 %v1676
    %1685 = vmatpush.bf16.msra.mxu0 %v1216
    %1686 = vmatpush.bf16.msra.mxu0 %v1208
    %1687 = vmatpush.bf16.msra.mxu0 %v1200
    %1688 = vmatpush.bf16.msra.mxu0 %v1192
    %1689 = vmatpush.bf16.msra.mxu0 %v1184
    %1690 = vmatpush.bf16.msra.mxu0 %v1176
    %1691 = vmatpush.bf16.msra.mxu0 %v1168
    %1692 = vmatpush.bf16.msra.mxu0 %v1160
    %1693 = vmatmul.bf16.gmra.mxu0 %v1668
    %v1694 = vpop.f32.mrf.mxu0
    %v1695 = vadd.f32 0.0, %v1694
    %v1696 = vpop.f32.mrf.mxu0
    %1697 = vdwg.mxu0
    %1698 = vmatpush.bf16.msra.mxu0 %v1280
    %1699 = vmatpush.bf16.msra.mxu0 %v1272
    %1700 = vmatpush.bf16.msra.mxu0 %v1264
    %1701 = vmatpush.bf16.msra.mxu0 %v1256
    %1702 = vmatpush.bf16.msra.mxu0 %v1248
    %1703 = vmatpush.bf16.msra.mxu0 %v1240
    %1704 = vmatpush.bf16.msra.mxu0 %v1232
    %1705 = vmatpush.bf16.msra.mxu0 %v1224
    %1706 = vmatmul.bf16.gmra.mxu0 %v1669
    %v1707 = vpop.f32.mrf.mxu0
    %v1708 = vadd.f32 %v1695, %v1707
    %v1709 = vpop.f32.mrf.mxu0
    %1710 = vdwg.mxu0
    %1711 = vmatpush.bf16.msra.mxu0 %v1217
    %1712 = vmatpush.bf16.msra.mxu0 %v1209
    %1713 = vmatpush.bf16.msra.mxu0 %v1201
    %1714 = vmatpush.bf16.msra.mxu0 %v1193
    %1715 = vmatpush.bf16.msra.mxu0 %v1185
    %1716 = vmatpush.bf16.msra.mxu0 %v1177
    %1717 = vmatpush.bf16.msra.mxu0 %v1169
    %1718 = vmatpush.bf16.msra.mxu0 %v1161
    %1719 = vmatmul.bf16.gmra.mxu0 %v1668
    %v1720 = vpop.f32.mrf.mxu0
    %v1721 = vadd.f32 0.0, %v1720
    %v1722 = vpop.f32.mrf.mxu0
    %1723 = vdwg.mxu0
    %1724 = vmatpush.bf16.msra.mxu0 %v1281
    %1725 = vmatpush.bf16.msra.mxu0 %v1273
    %1726 = vmatpush.bf16.msra.mxu0 %v1265
    %1727 = vmatpush.bf16.msra.mxu0 %v1257
    %1728 = vmatpush.bf16.msra.mxu0 %v1249
    %1729 = vmatpush.bf16.msra.mxu0 %v1241
    %1730 = vmatpush.bf16.msra.mxu0 %v1233
    %1731 = vmatpush.bf16.msra.mxu0 %v1225
    %1732 = vmatmul.bf16.gmra.mxu0 %v1669
    %v1733 = vpop.f32.mrf.mxu0
    %v1734 = vadd.f32 %v1721, %v1733
    %v1735 = vpop.f32.mrf.mxu0
    %1736 = vdwg.mxu0
    %1737 = vmatpush.bf16.msra.mxu0 %v1218
    %1738 = vmatpush.bf16.msra.mxu0 %v1210
    %1739 = vmatpush.bf16.msra.mxu0 %v1202
    %1740 = vmatpush.bf16.msra.mxu0 %v1194
    %1741 = vmatpush.bf16.msra.mxu0 %v1186
    %1742 = vmatpush.bf16.msra.mxu0 %v1178
    %1743 = vmatpush.bf16.msra.mxu0 %v1170
    %1744 = vmatpush.bf16.msra.mxu0 %v1162
    %1745 = vmatmul.bf16.gmra.mxu0 %v1668
    %v1746 = vpop.f32.mrf.mxu0
    %v1747 = vadd.f32 0.0, %v1746
    %v1748 = vpop.f32.mrf.mxu0
    %1749 = vdwg.mxu0
    %1750 = vmatpush.bf16.msra.mxu0 %v1282
    %1751 = vmatpush.bf16.msra.mxu0 %v1274
    %1752 = vmatpush.bf16.msra.mxu0 %v1266
    %1753 = vmatpush.bf16.msra.mxu0 %v1258
    %1754 = vmatpush.bf16.msra.mxu0 %v1250
    %1755 = vmatpush.bf16.msra.mxu0 %v1242
    %1756 = vmatpush.bf16.msra.mxu0 %v1234
    %1757 = vmatpush.bf16.msra.mxu0 %v1226
    %1758 = vmatmul.bf16.gmra.mxu0 %v1669
    %v1759 = vpop.f32.mrf.mxu0
    %v1760 = vadd.f32 %v1747, %v1759
    %v1761 = vpop.f32.mrf.mxu0
    %1762 = vdwg.mxu0
    %1763 = vmatpush.bf16.msra.mxu0 %v1219
    %1764 = vmatpush.bf16.msra.mxu0 %v1211
    %1765 = vmatpush.bf16.msra.mxu0 %v1203
    %1766 = vmatpush.bf16.msra.mxu0 %v1195
    %1767 = vmatpush.bf16.msra.mxu0 %v1187
    %1768 = vmatpush.bf16.msra.mxu0 %v1179
    %1769 = vmatpush.bf16.msra.mxu0 %v1171
    %1770 = vmatpush.bf16.msra.mxu0 %v1163
    %1771 = vmatmul.bf16.gmra.mxu0 %v1668
    %v1772 = vpop.f32.mrf.mxu0
    %v1773 = vadd.f32 0.0, %v1772
    %v1774 = vpop.f32.mrf.mxu0
    %1775 = vdwg.mxu0
    %1776 = vmatpush.bf16.msra.mxu0 %v1283
    %1777 = vmatpush.bf16.msra.mxu0 %v1275
    %1778 = vmatpush.bf16.msra.mxu0 %v1267
    %1779 = vmatpush.bf16.msra.mxu0 %v1259
    %1780 = vmatpush.bf16.msra.mxu0 %v1251
    %1781 = vmatpush.bf16.msra.mxu0 %v1243
    %1782 = vmatpush.bf16.msra.mxu0 %v1235
    %1783 = vmatpush.bf16.msra.mxu0 %v1227
    %1784 = vmatmul.bf16.gmra.mxu0 %v1669
    %v1785 = vpop.f32.mrf.mxu0
    %v1786 = vadd.f32 %v1773, %v1785
    %v1787 = vpop.f32.mrf.mxu0
    %1788 = vdwg.mxu0
    %1789 = vmatpush.bf16.msra.mxu0 %v1220
    %1790 = vmatpush.bf16.msra.mxu0 %v1212
    %1791 = vmatpush.bf16.msra.mxu0 %v1204
    %1792 = vmatpush.bf16.msra.mxu0 %v1196
    %1793 = vmatpush.bf16.msra.mxu0 %v1188
    %1794 = vmatpush.bf16.msra.mxu0 %v1180
    %1795 = vmatpush.bf16.msra.mxu0 %v1172
    %1796 = vmatpush.bf16.msra.mxu0 %v1164
    %1797 = vmatmul.bf16.gmra.mxu0 %v1668
    %v1798 = vpop.f32.mrf.mxu0
    %v1799 = vadd.f32 0.0, %v1798
    %v1800 = vpop.f32.mrf.mxu0
    %1801 = vdwg.mxu0
    %1802 = vmatpush.bf16.msra.mxu0 %v1284
    %1803 = vmatpush.bf16.msra.mxu0 %v1276
    %1804 = vmatpush.bf16.msra.mxu0 %v1268
    %1805 = vmatpush.bf16.msra.mxu0 %v1260
    %1806 = vmatpush.bf16.msra.mxu0 %v1252
    %1807 = vmatpush.bf16.msra.mxu0 %v1244
    %1808 = vmatpush.bf16.msra.mxu0 %v1236
    %1809 = vmatpush.bf16.msra.mxu0 %v1228
    %1810 = vmatmul.bf16.gmra.mxu0 %v1669
    %v1811 = vpop.f32.mrf.mxu0
    %v1812 = vadd.f32 %v1799, %v1811
    %v1813 = vpop.f32.mrf.mxu0
    %1814 = vdwg.mxu0
    %1815 = vmatpush.bf16.msra.mxu0 %v1221
    %1816 = vmatpush.bf16.msra.mxu0 %v1213
    %1817 = vmatpush.bf16.msra.mxu0 %v1205
    %1818 = vmatpush.bf16.msra.mxu0 %v1197
    %1819 = vmatpush.bf16.msra.mxu0 %v1189
    %1820 = vmatpush.bf16.msra.mxu0 %v1181
    %1821 = vmatpush.bf16.msra.mxu0 %v1173
    %1822 = vmatpush.bf16.msra.mxu0 %v1165
    %1823 = vmatmul.bf16.gmra.mxu0 %v1668
    %v1824 = vpop.f32.mrf.mxu0
    %v1825 = vadd.f32 0.0, %v1824
    %v1826 = vpop.f32.mrf.mxu0
    %1827 = vdwg.mxu0
    %1828 = vmatpush.bf16.msra.mxu0 %v1285
    %1829 = vmatpush.bf16.msra.mxu0 %v1277
    %1830 = vmatpush.bf16.msra.mxu0 %v1269
    %1831 = vmatpush.bf16.msra.mxu0 %v1261
    %1832 = vmatpush.bf16.msra.mxu0 %v1253
    %1833 = vmatpush.bf16.msra.mxu0 %v1245
    %1834 = vmatpush.bf16.msra.mxu0 %v1237
    %1835 = vmatpush.bf16.msra.mxu0 %v1229
    %1836 = vmatmul.bf16.gmra.mxu0 %v1669
    %v1837 = vpop.f32.mrf.mxu0
    %v1838 = vadd.f32 %v1825, %v1837
    %v1839 = vpop.f32.mrf.mxu0
    %1840 = vdwg.mxu0
    %1841 = vmatpush.bf16.msra.mxu0 %v1222
    %1842 = vmatpush.bf16.msra.mxu0 %v1214
    %1843 = vmatpush.bf16.msra.mxu0 %v1206
    %1844 = vmatpush.bf16.msra.mxu0 %v1198
    %1845 = vmatpush.bf16.msra.mxu0 %v1190
    %1846 = vmatpush.bf16.msra.mxu0 %v1182
    %1847 = vmatpush.bf16.msra.mxu0 %v1174
    %1848 = vmatpush.bf16.msra.mxu0 %v1166
    %1849 = vmatmul.bf16.gmra.mxu0 %v1668
    %v1850 = vpop.f32.mrf.mxu0
    %v1851 = vadd.f32 0.0, %v1850
    %v1852 = vpop.f32.mrf.mxu0
    %1853 = vdwg.mxu0
    %1854 = vmatpush.bf16.msra.mxu0 %v1286
    %1855 = vmatpush.bf16.msra.mxu0 %v1278
    %1856 = vmatpush.bf16.msra.mxu0 %v1270
    %1857 = vmatpush.bf16.msra.mxu0 %v1262
    %1858 = vmatpush.bf16.msra.mxu0 %v1254
    %1859 = vmatpush.bf16.msra.mxu0 %v1246
    %1860 = vmatpush.bf16.msra.mxu0 %v1238
    %1861 = vmatpush.bf16.msra.mxu0 %v1230
    %1862 = vmatmul.bf16.gmra.mxu0 %v1669
    %v1863 = vpop.f32.mrf.mxu0
    %v1864 = vadd.f32 %v1851, %v1863
    %v1865 = vpop.f32.mrf.mxu0
    %1866 = vdwg.mxu0
    %1867 = vmatpush.bf16.msra.mxu0 %v1223
    %1868 = vmatpush.bf16.msra.mxu0 %v1215
    %1869 = vmatpush.bf16.msra.mxu0 %v1207
    %1870 = vmatpush.bf16.msra.mxu0 %v1199
    %1871 = vmatpush.bf16.msra.mxu0 %v1191
    %1872 = vmatpush.bf16.msra.mxu0 %v1183
    %1873 = vmatpush.bf16.msra.mxu0 %v1175
    %1874 = vmatpush.bf16.msra.mxu0 %v1167
    %1875 = vmatmul.bf16.gmra.mxu0 %v1668
    %v1876 = vpop.f32.mrf.mxu0
    %v1877 = vadd.f32 0.0, %v1876
    %v1878 = vpop.f32.mrf.mxu0
    %1879 = vdwg.mxu0
    %1880 = vmatpush.bf16.msra.mxu0 %v1287
    %1881 = vmatpush.bf16.msra.mxu0 %v1279
    %1882 = vmatpush.bf16.msra.mxu0 %v1271
    %1883 = vmatpush.bf16.msra.mxu0 %v1263
    %1884 = vmatpush.bf16.msra.mxu0 %v1255
    %1885 = vmatpush.bf16.msra.mxu0 %v1247
    %1886 = vmatpush.bf16.msra.mxu0 %v1239
    %1887 = vmatpush.bf16.msra.mxu0 %v1231
    %1888 = vmatmul.bf16.gmra.mxu0 %v1669
    %v1889 = vpop.f32.mrf.mxu0
    %v1890 = vadd.f32 %v1877, %v1889
    %v1891 = vpop.f32.mrf.mxu0
    %1892 = vdwg.mxu0
    %v1893 = vadd.f32 %v1677, %v1708
    %v1894 = vadd.f32 %v1678, %v1734
    %v1895 = vadd.f32 %v1679, %v1760
    %v1896 = vadd.f32 %v1680, %v1786
    %v1897 = vadd.f32 %v1681, %v1812
    %v1898 = vadd.f32 %v1682, %v1838
    %v1899 = vadd.f32 %v1683, %v1864
    %v1900 = vadd.f32 %v1684, %v1890
    %v1901 = vmul.f32 %v1893, 0.5
    %v1902 = vmul.f32 %v1894, 0.5
    %v1903 = vtanh.pop %v1901
    %v1904 = vtanh.pop %v1902
    %v1905 = vmul.f32 %v1903, 0.5
    %v1906 = vmul.f32 %v1904, 0.5
    %v1907 = vadd.f32 %v1905, 0.5
    %v1908 = vadd.f32 %v1906, 0.5
    %v1909 = vmul.f32 %v1895, 0.5
    %v1910 = vmul.f32 %v1896, 0.5
    %v1911 = vtanh.pop %v1909
    %v1912 = vtanh.pop %v1910
    %v1913 = vmul.f32 %v1911, 0.5
    %v1914 = vmul.f32 %v1912, 0.5
    %v1915 = vadd.f32 %v1913, 0.5
    %v1916 = vadd.f32 %v1914, 0.5
    %v1917 = vtanh.pop %v1897
    %v1918 = vtanh.pop %v1898
    %v1919 = vmul.f32 %v1899, 0.5
    %v1920 = vmul.f32 %v1900, 0.5
    %v1921 = vtanh.pop %v1919
    %v1922 = vtanh.pop %v1920
    %v1923 = vmul.f32 %v1921, 0.5
    %v1924 = vmul.f32 %v1922, 0.5
    %v1925 = vadd.f32 %v1923, 0.5
    %v1926 = vadd.f32 %v1924, 0.5
    %v1927 = vmul.f32 %v1915, %v1662
    %v1928 = vmul.f32 %v1916, %v1663
    %v1929 = vmul.f32 %v1907, %v1917
    %v1930 = vmul.f32 %v1908, %v1918
    %v1931 = vadd.f32 %v1927, %v1929
    %v1932 = vadd.f32 %v1928, %v1930
    %v1933 = vtanh.pop %v1931
    %v1934 = vtanh.pop %v1932
    %v1935 = vmul.f32 %v1925, %v1933
    %v1936 = vmul.f32 %v1926, %v1934
    %v1937 = vpack.c.bf16 %v1935, %v1935
    %v1938 = vpack.c.bf16 %v1936, %v1936
    %s1939 = smul.u32 2, 8
    %s1940 = smul.addr %s1939, 4
    %s1941 = scalar_lea.vmem [#allocation2], %s1940
    %v1942 = vld [vmem:[%s1941] sm:$0xff]
    %v1943 = vld [vmem:[%s1941 + $0x8] sm:$0xff]
    %v1944 = vld [vmem:[%s1941 + $0x10] sm:$0xff]
    %v1945 = vld [vmem:[%s1941 + $0x18] sm:$0xff]
    %v1946 = vunpack.c.l.bf16 %v1942
    %v1947 = vunpack.c.h.bf16 %v1942
    %v1948 = vunpack.c.l.bf16 %v1943
    %v1949 = vunpack.c.h.bf16 %v1943
    %v1950 = vunpack.c.l.bf16 %v1944
    %v1951 = vunpack.c.h.bf16 %v1944
    %v1952 = vunpack.c.l.bf16 %v1945
    %v1953 = vunpack.c.h.bf16 %v1945
    %1954 = vmatpush.bf16.msra.mxu0 %v1216
    %1955 = vmatpush.bf16.msra.mxu0 %v1208
    %1956 = vmatpush.bf16.msra.mxu0 %v1200
    %1957 = vmatpush.bf16.msra.mxu0 %v1192
    %1958 = vmatpush.bf16.msra.mxu0 %v1184
    %1959 = vmatpush.bf16.msra.mxu0 %v1176
    %1960 = vmatpush.bf16.msra.mxu0 %v1168
    %1961 = vmatpush.bf16.msra.mxu0 %v1160
    %1962 = vmatmul.bf16.gmra.mxu0 %v1937
    %v1963 = vpop.f32.mrf.mxu0
    %v1964 = vadd.f32 0.0, %v1963
    %v1965 = vpop.f32.mrf.mxu0
    %1966 = vdwg.mxu0
    %1967 = vmatpush.bf16.msra.mxu0 %v1280
    %1968 = vmatpush.bf16.msra.mxu0 %v1272
    %1969 = vmatpush.bf16.msra.mxu0 %v1264
    %1970 = vmatpush.bf16.msra.mxu0 %v1256
    %1971 = vmatpush.bf16.msra.mxu0 %v1248
    %1972 = vmatpush.bf16.msra.mxu0 %v1240
    %1973 = vmatpush.bf16.msra.mxu0 %v1232
    %1974 = vmatpush.bf16.msra.mxu0 %v1224
    %1975 = vmatmul.bf16.gmra.mxu0 %v1938
    %v1976 = vpop.f32.mrf.mxu0
    %v1977 = vadd.f32 %v1964, %v1976
    %v1978 = vpop.f32.mrf.mxu0
    %1979 = vdwg.mxu0
    %1980 = vmatpush.bf16.msra.mxu0 %v1217
    %1981 = vmatpush.bf16.msra.mxu0 %v1209
    %1982 = vmatpush.bf16.msra.mxu0 %v1201
    %1983 = vmatpush.bf16.msra.mxu0 %v1193
    %1984 = vmatpush.bf16.msra.mxu0 %v1185
    %1985 = vmatpush.bf16.msra.mxu0 %v1177
    %1986 = vmatpush.bf16.msra.mxu0 %v1169
    %1987 = vmatpush.bf16.msra.mxu0 %v1161
    %1988 = vmatmul.bf16.gmra.mxu0 %v1937
    %v1989 = vpop.f32.mrf.mxu0
    %v1990 = vadd.f32 0.0, %v1989
    %v1991 = vpop.f32.mrf.mxu0
    %1992 = vdwg.mxu0
    %1993 = vmatpush.bf16.msra.mxu0 %v1281
    %1994 = vmatpush.bf16.msra.mxu0 %v1273
    %1995 = vmatpush.bf16.msra.mxu0 %v1265
    %1996 = vmatpush.bf16.msra.mxu0 %v1257
    %1997 = vmatpush.bf16.msra.mxu0 %v1249
    %1998 = vmatpush.bf16.msra.mxu0 %v1241
    %1999 = vmatpush.bf16.msra.mxu0 %v1233
    %2000 = vmatpush.bf16.msra.mxu0 %v1225
    %2001 = vmatmul.bf16.gmra.mxu0 %v1938
    %v2002 = vpop.f32.mrf.mxu0
    %v2003 = vadd.f32 %v1990, %v2002
    %v2004 = vpop.f32.mrf.mxu0
    %2005 = vdwg.mxu0
    %2006 = vmatpush.bf16.msra.mxu0 %v1218
    %2007 = vmatpush.bf16.msra.mxu0 %v1210
    %2008 = vmatpush.bf16.msra.mxu0 %v1202
    %2009 = vmatpush.bf16.msra.mxu0 %v1194
    %2010 = vmatpush.bf16.msra.mxu0 %v1186
    %2011 = vmatpush.bf16.msra.mxu0 %v1178
    %2012 = vmatpush.bf16.msra.mxu0 %v1170
    %2013 = vmatpush.bf16.msra.mxu0 %v1162
    %2014 = vmatmul.bf16.gmra.mxu0 %v1937
    %v2015 = vpop.f32.mrf.mxu0
    %v2016 = vadd.f32 0.0, %v2015
    %v2017 = vpop.f32.mrf.mxu0
    %2018 = vdwg.mxu0
    %2019 = vmatpush.bf16.msra.mxu0 %v1282
    %2020 = vmatpush.bf16.msra.mxu0 %v1274
    %2021 = vmatpush.bf16.msra.mxu0 %v1266
    %2022 = vmatpush.bf16.msra.mxu0 %v1258
    %2023 = vmatpush.bf16.msra.mxu0 %v1250
    %2024 = vmatpush.bf16.msra.mxu0 %v1242
    %2025 = vmatpush.bf16.msra.mxu0 %v1234
    %2026 = vmatpush.bf16.msra.mxu0 %v1226
    %2027 = vmatmul.bf16.gmra.mxu0 %v1938
    %v2028 = vpop.f32.mrf.mxu0
    %v2029 = vadd.f32 %v2016, %v2028
    %v2030 = vpop.f32.mrf.mxu0
    %2031 = vdwg.mxu0
    %2032 = vmatpush.bf16.msra.mxu0 %v1219
    %2033 = vmatpush.bf16.msra.mxu0 %v1211
    %2034 = vmatpush.bf16.msra.mxu0 %v1203
    %2035 = vmatpush.bf16.msra.mxu0 %v1195
    %2036 = vmatpush.bf16.msra.mxu0 %v1187
    %2037 = vmatpush.bf16.msra.mxu0 %v1179
    %2038 = vmatpush.bf16.msra.mxu0 %v1171
    %2039 = vmatpush.bf16.msra.mxu0 %v1163
    %2040 = vmatmul.bf16.gmra.mxu0 %v1937
    %v2041 = vpop.f32.mrf.mxu0
    %v2042 = vadd.f32 0.0, %v2041
    %v2043 = vpop.f32.mrf.mxu0
    %2044 = vdwg.mxu0
    %2045 = vmatpush.bf16.msra.mxu0 %v1283
    %2046 = vmatpush.bf16.msra.mxu0 %v1275
    %2047 = vmatpush.bf16.msra.mxu0 %v1267
    %2048 = vmatpush.bf16.msra.mxu0 %v1259
    %2049 = vmatpush.bf16.msra.mxu0 %v1251
    %2050 = vmatpush.bf16.msra.mxu0 %v1243
    %2051 = vmatpush.bf16.msra.mxu0 %v1235
    %2052 = vmatpush.bf16.msra.mxu0 %v1227
    %2053 = vmatmul.bf16.gmra.mxu0 %v1938
    %v2054 = vpop.f32.mrf.mxu0
    %v2055 = vadd.f32 %v2042, %v2054
    %v2056 = vpop.f32.mrf.mxu0
    %2057 = vdwg.mxu0
    %2058 = vmatpush.bf16.msra.mxu0 %v1220
    %2059 = vmatpush.bf16.msra.mxu0 %v1212
    %2060 = vmatpush.bf16.msra.mxu0 %v1204
    %2061 = vmatpush.bf16.msra.mxu0 %v1196
    %2062 = vmatpush.bf16.msra.mxu0 %v1188
    %2063 = vmatpush.bf16.msra.mxu0 %v1180
    %2064 = vmatpush.bf16.msra.mxu0 %v1172
    %2065 = vmatpush.bf16.msra.mxu0 %v1164
    %2066 = vmatmul.bf16.gmra.mxu0 %v1937
    %v2067 = vpop.f32.mrf.mxu0
    %v2068 = vadd.f32 0.0, %v2067
    %v2069 = vpop.f32.mrf.mxu0
    %2070 = vdwg.mxu0
    %2071 = vmatpush.bf16.msra.mxu0 %v1284
    %2072 = vmatpush.bf16.msra.mxu0 %v1276
    %2073 = vmatpush.bf16.msra.mxu0 %v1268
    %2074 = vmatpush.bf16.msra.mxu0 %v1260
    %2075 = vmatpush.bf16.msra.mxu0 %v1252
    %2076 = vmatpush.bf16.msra.mxu0 %v1244
    %2077 = vmatpush.bf16.msra.mxu0 %v1236
    %2078 = vmatpush.bf16.msra.mxu0 %v1228
    %2079 = vmatmul.bf16.gmra.mxu0 %v1938
    %v2080 = vpop.f32.mrf.mxu0
    %v2081 = vadd.f32 %v2068, %v2080
    %v2082 = vpop.f32.mrf.mxu0
    %2083 = vdwg.mxu0
    %2084 = vmatpush.bf16.msra.mxu0 %v1221
    %2085 = vmatpush.bf16.msra.mxu0 %v1213
    %2086 = vmatpush.bf16.msra.mxu0 %v1205
    %2087 = vmatpush.bf16.msra.mxu0 %v1197
    %2088 = vmatpush.bf16.msra.mxu0 %v1189
    %2089 = vmatpush.bf16.msra.mxu0 %v1181
    %2090 = vmatpush.bf16.msra.mxu0 %v1173
    %2091 = vmatpush.bf16.msra.mxu0 %v1165
    %2092 = vmatmul.bf16.gmra.mxu0 %v1937
    %v2093 = vpop.f32.mrf.mxu0
    %v2094 = vadd.f32 0.0, %v2093
    %v2095 = vpop.f32.mrf.mxu0
    %2096 = vdwg.mxu0
    %2097 = vmatpush.bf16.msra.mxu0 %v1285
    %2098 = vmatpush.bf16.msra.mxu0 %v1277
    %2099 = vmatpush.bf16.msra.mxu0 %v1269
    %2100 = vmatpush.bf16.msra.mxu0 %v1261
    %2101 = vmatpush.bf16.msra.mxu0 %v1253
    %2102 = vmatpush.bf16.msra.mxu0 %v1245
    %2103 = vmatpush.bf16.msra.mxu0 %v1237
    %2104 = vmatpush.bf16.msra.mxu0 %v1229
    %2105 = vmatmul.bf16.gmra.mxu0 %v1938
    %v2106 = vpop.f32.mrf.mxu0
    %v2107 = vadd.f32 %v2094, %v2106
    %v2108 = vpop.f32.mrf.mxu0
    %2109 = vdwg.mxu0
    %2110 = vmatpush.bf16.msra.mxu0 %v1222
    %2111 = vmatpush.bf16.msra.mxu0 %v1214
    %2112 = vmatpush.bf16.msra.mxu0 %v1206
    %2113 = vmatpush.bf16.msra.mxu0 %v1198
    %2114 = vmatpush.bf16.msra.mxu0 %v1190
    %2115 = vmatpush.bf16.msra.mxu0 %v1182
    %2116 = vmatpush.bf16.msra.mxu0 %v1174
    %2117 = vmatpush.bf16.msra.mxu0 %v1166
    %2118 = vmatmul.bf16.gmra.mxu0 %v1937
    %v2119 = vpop.f32.mrf.mxu0
    %v2120 = vadd.f32 0.0, %v2119
    %v2121 = vpop.f32.mrf.mxu0
    %2122 = vdwg.mxu0
    %2123 = vmatpush.bf16.msra.mxu0 %v1286
    %2124 = vmatpush.bf16.msra.mxu0 %v1278
    %2125 = vmatpush.bf16.msra.mxu0 %v1270
    %2126 = vmatpush.bf16.msra.mxu0 %v1262
    %2127 = vmatpush.bf16.msra.mxu0 %v1254
    %2128 = vmatpush.bf16.msra.mxu0 %v1246
    %2129 = vmatpush.bf16.msra.mxu0 %v1238
    %2130 = vmatpush.bf16.msra.mxu0 %v1230
    %2131 = vmatmul.bf16.gmra.mxu0 %v1938
    %v2132 = vpop.f32.mrf.mxu0
    %v2133 = vadd.f32 %v2120, %v2132
    %v2134 = vpop.f32.mrf.mxu0
    %2135 = vdwg.mxu0
    %2136 = vmatpush.bf16.msra.mxu0 %v1223
    %2137 = vmatpush.bf16.msra.mxu0 %v1215
    %2138 = vmatpush.bf16.msra.mxu0 %v1207
    %2139 = vmatpush.bf16.msra.mxu0 %v1199
    %2140 = vmatpush.bf16.msra.mxu0 %v1191
    %2141 = vmatpush.bf16.msra.mxu0 %v1183
    %2142 = vmatpush.bf16.msra.mxu0 %v1175
    %2143 = vmatpush.bf16.msra.mxu0 %v1167
    %2144 = vmatmul.bf16.gmra.mxu0 %v1937
    %v2145 = vpop.f32.mrf.mxu0
    %v2146 = vadd.f32 0.0, %v2145
    %v2147 = vpop.f32.mrf.mxu0
    %2148 = vdwg.mxu0
    %2149 = vmatpush.bf16.msra.mxu0 %v1287
    %2150 = vmatpush.bf16.msra.mxu0 %v1279
    %2151 = vmatpush.bf16.msra.mxu0 %v1271
    %2152 = vmatpush.bf16.msra.mxu0 %v1263
    %2153 = vmatpush.bf16.msra.mxu0 %v1255
    %2154 = vmatpush.bf16.msra.mxu0 %v1247
    %2155 = vmatpush.bf16.msra.mxu0 %v1239
    %2156 = vmatpush.bf16.msra.mxu0 %v1231
    %2157 = vmatmul.bf16.gmra.mxu0 %v1938
    %v2158 = vpop.f32.mrf.mxu0
    %v2159 = vadd.f32 %v2146, %v2158
    %v2160 = vpop.f32.mrf.mxu0
    %2161 = vdwg.mxu0
    %v2162 = vadd.f32 %v1946, %v1977
    %v2163 = vadd.f32 %v1947, %v2003
    %v2164 = vadd.f32 %v1948, %v2029
    %v2165 = vadd.f32 %v1949, %v2055
    %v2166 = vadd.f32 %v1950, %v2081
    %v2167 = vadd.f32 %v1951, %v2107
    %v2168 = vadd.f32 %v1952, %v2133
    %v2169 = vadd.f32 %v1953, %v2159
    %v2170 = vmul.f32 %v2162, 0.5
    %v2171 = vmul.f32 %v2163, 0.5
    %v2172 = vtanh.pop %v2170
    %v2173 = vtanh.pop %v2171
    %v2174 = vmul.f32 %v2172, 0.5
    %v2175 = vmul.f32 %v2173, 0.5
    %v2176 = vadd.f32 %v2174, 0.5
    %v2177 = vadd.f32 %v2175, 0.5
    %v2178 = vmul.f32 %v2164, 0.5
    %v2179 = vmul.f32 %v2165, 0.5
    %v2180 = vtanh.pop %v2178
    %v2181 = vtanh.pop %v2179
    %v2182 = vmul.f32 %v2180, 0.5
    %v2183 = vmul.f32 %v2181, 0.5
    %v2184 = vadd.f32 %v2182, 0.5
    %v2185 = vadd.f32 %v2183, 0.5
    %v2186 = vtanh.pop %v2166
    %v2187 = vtanh.pop %v2167
    %v2188 = vmul.f32 %v2168, 0.5
    %v2189 = vmul.f32 %v2169, 0.5
    %v2190 = vtanh.pop %v2188
    %v2191 = vtanh.pop %v2189
    %v2192 = vmul.f32 %v2190, 0.5
    %v2193 = vmul.f32 %v2191, 0.5
    %v2194 = vadd.f32 %v2192, 0.5
    %v2195 = vadd.f32 %v2193, 0.5
    %v2196 = vmul.f32 %v2184, %v1931
    %v2197 = vmul.f32 %v2185, %v1932
    %v2198 = vmul.f32 %v2176, %v2186
    %v2199 = vmul.f32 %v2177, %v2187
    %v2200 = vadd.f32 %v2196, %v2198
    %v2201 = vadd.f32 %v2197, %v2199
    %v2202 = vtanh.pop %v2200
    %v2203 = vtanh.pop %v2201
    %v2204 = vmul.f32 %v2194, %v2202
    %v2205 = vmul.f32 %v2195, %v2203
    %v2206 = vpack.c.bf16 %v2204, %v2204
    %v2207 = vpack.c.bf16 %v2205, %v2205
    %s2208 = smul.u32 3, 8
    %s2209 = smul.addr %s2208, 4
    %s2210 = scalar_lea.vmem [#allocation2], %s2209
    %v2211 = vld [vmem:[%s2210] sm:$0xff]
    %v2212 = vld [vmem:[%s2210 + $0x8] sm:$0xff]
    %v2213 = vld [vmem:[%s2210 + $0x10] sm:$0xff]
    %v2214 = vld [vmem:[%s2210 + $0x18] sm:$0xff]
    %v2215 = vunpack.c.l.bf16 %v2211
    %v2216 = vunpack.c.h.bf16 %v2211
    %v2217 = vunpack.c.l.bf16 %v2212
    %v2218 = vunpack.c.h.bf16 %v2212
    %v2219 = vunpack.c.l.bf16 %v2213
    %v2220 = vunpack.c.h.bf16 %v2213
    %v2221 = vunpack.c.l.bf16 %v2214
    %v2222 = vunpack.c.h.bf16 %v2214
    %2223 = vmatpush.bf16.msra.mxu0 %v1216
    %2224 = vmatpush.bf16.msra.mxu0 %v1208
    %2225 = vmatpush.bf16.msra.mxu0 %v1200
    %2226 = vmatpush.bf16.msra.mxu0 %v1192
    %2227 = vmatpush.bf16.msra.mxu0 %v1184
    %2228 = vmatpush.bf16.msra.mxu0 %v1176
    %2229 = vmatpush.bf16.msra.mxu0 %v1168
    %2230 = vmatpush.bf16.msra.mxu0 %v1160
    %2231 = vmatmul.bf16.gmra.mxu0 %v2206
    %v2232 = vpop.f32.mrf.mxu0
    %v2233 = vadd.f32 0.0, %v2232
    %v2234 = vpop.f32.mrf.mxu0
    %2235 = vdwg.mxu0
    %2236 = vmatpush.bf16.msra.mxu0 %v1280
    %2237 = vmatpush.bf16.msra.mxu0 %v1272
    %2238 = vmatpush.bf16.msra.mxu0 %v1264
    %2239 = vmatpush.bf16.msra.mxu0 %v1256
    %2240 = vmatpush.bf16.msra.mxu0 %v1248
    %2241 = vmatpush.bf16.msra.mxu0 %v1240
    %2242 = vmatpush.bf16.msra.mxu0 %v1232
    %2243 = vmatpush.bf16.msra.mxu0 %v1224
    %2244 = vmatmul.bf16.gmra.mxu0 %v2207
    %v2245 = vpop.f32.mrf.mxu0
    %v2246 = vadd.f32 %v2233, %v2245
    %v2247 = vpop.f32.mrf.mxu0
    %2248 = vdwg.mxu0
    %2249 = vmatpush.bf16.msra.mxu0 %v1217
    %2250 = vmatpush.bf16.msra.mxu0 %v1209
    %2251 = vmatpush.bf16.msra.mxu0 %v1201
    %2252 = vmatpush.bf16.msra.mxu0 %v1193
    %2253 = vmatpush.bf16.msra.mxu0 %v1185
    %2254 = vmatpush.bf16.msra.mxu0 %v1177
    %2255 = vmatpush.bf16.msra.mxu0 %v1169
    %2256 = vmatpush.bf16.msra.mxu0 %v1161
    %2257 = vmatmul.bf16.gmra.mxu0 %v2206
    %v2258 = vpop.f32.mrf.mxu0
    %v2259 = vadd.f32 0.0, %v2258
    %v2260 = vpop.f32.mrf.mxu0
    %2261 = vdwg.mxu0
    %2262 = vmatpush.bf16.msra.mxu0 %v1281
    %2263 = vmatpush.bf16.msra.mxu0 %v1273
    %2264 = vmatpush.bf16.msra.mxu0 %v1265
    %2265 = vmatpush.bf16.msra.mxu0 %v1257
    %2266 = vmatpush.bf16.msra.mxu0 %v1249
    %2267 = vmatpush.bf16.msra.mxu0 %v1241
    %2268 = vmatpush.bf16.msra.mxu0 %v1233
    %2269 = vmatpush.bf16.msra.mxu0 %v1225
    %2270 = vmatmul.bf16.gmra.mxu0 %v2207
    %v2271 = vpop.f32.mrf.mxu0
    %v2272 = vadd.f32 %v2259, %v2271
    %v2273 = vpop.f32.mrf.mxu0
    %2274 = vdwg.mxu0
    %2275 = vmatpush.bf16.msra.mxu0 %v1218
    %2276 = vmatpush.bf16.msra.mxu0 %v1210
    %2277 = vmatpush.bf16.msra.mxu0 %v1202
    %2278 = vmatpush.bf16.msra.mxu0 %v1194
    %2279 = vmatpush.bf16.msra.mxu0 %v1186
    %2280 = vmatpush.bf16.msra.mxu0 %v1178
    %2281 = vmatpush.bf16.msra.mxu0 %v1170
    %2282 = vmatpush.bf16.msra.mxu0 %v1162
    %2283 = vmatmul.bf16.gmra.mxu0 %v2206
    %v2284 = vpop.f32.mrf.mxu0
    %v2285 = vadd.f32 0.0, %v2284
    %v2286 = vpop.f32.mrf.mxu0
    %2287 = vdwg.mxu0
    %2288 = vmatpush.bf16.msra.mxu0 %v1282
    %2289 = vmatpush.bf16.msra.mxu0 %v1274
    %2290 = vmatpush.bf16.msra.mxu0 %v1266
    %2291 = vmatpush.bf16.msra.mxu0 %v1258
    %2292 = vmatpush.bf16.msra.mxu0 %v1250
    %2293 = vmatpush.bf16.msra.mxu0 %v1242
    %2294 = vmatpush.bf16.msra.mxu0 %v1234
    %2295 = vmatpush.bf16.msra.mxu0 %v1226
    %2296 = vmatmul.bf16.gmra.mxu0 %v2207
    %v2297 = vpop.f32.mrf.mxu0
    %v2298 = vadd.f32 %v2285, %v2297
    %v2299 = vpop.f32.mrf.mxu0
    %2300 = vdwg.mxu0
    %2301 = vmatpush.bf16.msra.mxu0 %v1219
    %2302 = vmatpush.bf16.msra.mxu0 %v1211
    %2303 = vmatpush.bf16.msra.mxu0 %v1203
    %2304 = vmatpush.bf16.msra.mxu0 %v1195
    %2305 = vmatpush.bf16.msra.mxu0 %v1187
    %2306 = vmatpush.bf16.msra.mxu0 %v1179
    %2307 = vmatpush.bf16.msra.mxu0 %v1171
    %2308 = vmatpush.bf16.msra.mxu0 %v1163
    %2309 = vmatmul.bf16.gmra.mxu0 %v2206
    %v2310 = vpop.f32.mrf.mxu0
    %v2311 = vadd.f32 0.0, %v2310
    %v2312 = vpop.f32.mrf.mxu0
    %2313 = vdwg.mxu0
    %2314 = vmatpush.bf16.msra.mxu0 %v1283
    %2315 = vmatpush.bf16.msra.mxu0 %v1275
    %2316 = vmatpush.bf16.msra.mxu0 %v1267
    %2317 = vmatpush.bf16.msra.mxu0 %v1259
    %2318 = vmatpush.bf16.msra.mxu0 %v1251
    %2319 = vmatpush.bf16.msra.mxu0 %v1243
    %2320 = vmatpush.bf16.msra.mxu0 %v1235
    %2321 = vmatpush.bf16.msra.mxu0 %v1227
    %2322 = vmatmul.bf16.gmra.mxu0 %v2207
    %v2323 = vpop.f32.mrf.mxu0
    %v2324 = vadd.f32 %v2311, %v2323
    %v2325 = vpop.f32.mrf.mxu0
    %2326 = vdwg.mxu0
    %2327 = vmatpush.bf16.msra.mxu0 %v1220
    %2328 = vmatpush.bf16.msra.mxu0 %v1212
    %2329 = vmatpush.bf16.msra.mxu0 %v1204
    %2330 = vmatpush.bf16.msra.mxu0 %v1196
    %2331 = vmatpush.bf16.msra.mxu0 %v1188
    %2332 = vmatpush.bf16.msra.mxu0 %v1180
    %2333 = vmatpush.bf16.msra.mxu0 %v1172
    %2334 = vmatpush.bf16.msra.mxu0 %v1164
    %2335 = vmatmul.bf16.gmra.mxu0 %v2206
    %v2336 = vpop.f32.mrf.mxu0
    %v2337 = vadd.f32 0.0, %v2336
    %v2338 = vpop.f32.mrf.mxu0
    %2339 = vdwg.mxu0
    %2340 = vmatpush.bf16.msra.mxu0 %v1284
    %2341 = vmatpush.bf16.msra.mxu0 %v1276
    %2342 = vmatpush.bf16.msra.mxu0 %v1268
    %2343 = vmatpush.bf16.msra.mxu0 %v1260
    %2344 = vmatpush.bf16.msra.mxu0 %v1252
    %2345 = vmatpush.bf16.msra.mxu0 %v1244
    %2346 = vmatpush.bf16.msra.mxu0 %v1236
    %2347 = vmatpush.bf16.msra.mxu0 %v1228
    %2348 = vmatmul.bf16.gmra.mxu0 %v2207
    %v2349 = vpop.f32.mrf.mxu0
    %v2350 = vadd.f32 %v2337, %v2349
    %v2351 = vpop.f32.mrf.mxu0
    %2352 = vdwg.mxu0
    %2353 = vmatpush.bf16.msra.mxu0 %v1221
    %2354 = vmatpush.bf16.msra.mxu0 %v1213
    %2355 = vmatpush.bf16.msra.mxu0 %v1205
    %2356 = vmatpush.bf16.msra.mxu0 %v1197
    %2357 = vmatpush.bf16.msra.mxu0 %v1189
    %2358 = vmatpush.bf16.msra.mxu0 %v1181
    %2359 = vmatpush.bf16.msra.mxu0 %v1173
    %2360 = vmatpush.bf16.msra.mxu0 %v1165
    %2361 = vmatmul.bf16.gmra.mxu0 %v2206
    %v2362 = vpop.f32.mrf.mxu0
    %v2363 = vadd.f32 0.0, %v2362
    %v2364 = vpop.f32.mrf.mxu0
    %2365 = vdwg.mxu0
    %2366 = vmatpush.bf16.msra.mxu0 %v1285
    %2367 = vmatpush.bf16.msra.mxu0 %v1277
    %2368 = vmatpush.bf16.msra.mxu0 %v1269
    %2369 = vmatpush.bf16.msra.mxu0 %v1261
    %2370 = vmatpush.bf16.msra.mxu0 %v1253
    %2371 = vmatpush.bf16.msra.mxu0 %v1245
    %2372 = vmatpush.bf16.msra.mxu0 %v1237
    %2373 = vmatpush.bf16.msra.mxu0 %v1229
    %2374 = vmatmul.bf16.gmra.mxu0 %v2207
    %v2375 = vpop.f32.mrf.mxu0
    %v2376 = vadd.f32 %v2363, %v2375
    %v2377 = vpop.f32.mrf.mxu0
    %2378 = vdwg.mxu0
    %2379 = vmatpush.bf16.msra.mxu0 %v1222
    %2380 = vmatpush.bf16.msra.mxu0 %v1214
    %2381 = vmatpush.bf16.msra.mxu0 %v1206
    %2382 = vmatpush.bf16.msra.mxu0 %v1198
    %2383 = vmatpush.bf16.msra.mxu0 %v1190
    %2384 = vmatpush.bf16.msra.mxu0 %v1182
    %2385 = vmatpush.bf16.msra.mxu0 %v1174
    %2386 = vmatpush.bf16.msra.mxu0 %v1166
    %2387 = vmatmul.bf16.gmra.mxu0 %v2206
    %v2388 = vpop.f32.mrf.mxu0
    %v2389 = vadd.f32 0.0, %v2388
    %v2390 = vpop.f32.mrf.mxu0
    %2391 = vdwg.mxu0
    %2392 = vmatpush.bf16.msra.mxu0 %v1286
    %2393 = vmatpush.bf16.msra.mxu0 %v1278
    %2394 = vmatpush.bf16.msra.mxu0 %v1270
    %2395 = vmatpush.bf16.msra.mxu0 %v1262
    %2396 = vmatpush.bf16.msra.mxu0 %v1254
    %2397 = vmatpush.bf16.msra.mxu0 %v1246
    %2398 = vmatpush.bf16.msra.mxu0 %v1238
    %2399 = vmatpush.bf16.msra.mxu0 %v1230
    %2400 = vmatmul.bf16.gmra.mxu0 %v2207
    %v2401 = vpop.f32.mrf.mxu0
    %v2402 = vadd.f32 %v2389, %v2401
    %v2403 = vpop.f32.mrf.mxu0
    %2404 = vdwg.mxu0
    %2405 = vmatpush.bf16.msra.mxu0 %v1223
    %2406 = vmatpush.bf16.msra.mxu0 %v1215
    %2407 = vmatpush.bf16.msra.mxu0 %v1207
    %2408 = vmatpush.bf16.msra.mxu0 %v1199
    %2409 = vmatpush.bf16.msra.mxu0 %v1191
    %2410 = vmatpush.bf16.msra.mxu0 %v1183
    %2411 = vmatpush.bf16.msra.mxu0 %v1175
    %2412 = vmatpush.bf16.msra.mxu0 %v1167
    %2413 = vmatmul.bf16.gmra.mxu0 %v2206
    %v2414 = vpop.f32.mrf.mxu0
    %v2415 = vadd.f32 0.0, %v2414
    %v2416 = vpop.f32.mrf.mxu0
    %2417 = vdwg.mxu0
    %2418 = vmatpush.bf16.msra.mxu0 %v1287
    %2419 = vmatpush.bf16.msra.mxu0 %v1279
    %2420 = vmatpush.bf16.msra.mxu0 %v1271
    %2421 = vmatpush.bf16.msra.mxu0 %v1263
    %2422 = vmatpush.bf16.msra.mxu0 %v1255
    %2423 = vmatpush.bf16.msra.mxu0 %v1247
    %2424 = vmatpush.bf16.msra.mxu0 %v1239
    %2425 = vmatpush.bf16.msra.mxu0 %v1231
    %2426 = vmatmul.bf16.gmra.mxu0 %v2207
    %v2427 = vpop.f32.mrf.mxu0
    %v2428 = vadd.f32 %v2415, %v2427
    %v2429 = vpop.f32.mrf.mxu0
    %2430 = vdwg.mxu0
    %v2431 = vadd.f32 %v2215, %v2246
    %v2432 = vadd.f32 %v2216, %v2272
    %v2433 = vadd.f32 %v2217, %v2298
    %v2434 = vadd.f32 %v2218, %v2324
    %v2435 = vadd.f32 %v2219, %v2350
    %v2436 = vadd.f32 %v2220, %v2376
    %v2437 = vadd.f32 %v2221, %v2402
    %v2438 = vadd.f32 %v2222, %v2428
    %v2439 = vmul.f32 %v2431, 0.5
    %v2440 = vmul.f32 %v2432, 0.5
    %v2441 = vtanh.pop %v2439
    %v2442 = vtanh.pop %v2440
    %v2443 = vmul.f32 %v2441, 0.5
    %v2444 = vmul.f32 %v2442, 0.5
    %v2445 = vadd.f32 %v2443, 0.5
    %v2446 = vadd.f32 %v2444, 0.5
    %v2447 = vmul.f32 %v2433, 0.5
    %v2448 = vmul.f32 %v2434, 0.5
    %v2449 = vtanh.pop %v2447
    %v2450 = vtanh.pop %v2448
    %v2451 = vmul.f32 %v2449, 0.5
    %v2452 = vmul.f32 %v2450, 0.5
    %v2453 = vadd.f32 %v2451, 0.5
    %v2454 = vadd.f32 %v2452, 0.5
    %v2455 = vtanh.pop %v2435
    %v2456 = vtanh.pop %v2436
    %v2457 = vmul.f32 %v2437, 0.5
    %v2458 = vmul.f32 %v2438, 0.5
    %v2459 = vtanh.pop %v2457
    %v2460 = vtanh.pop %v2458
    %v2461 = vmul.f32 %v2459, 0.5
    %v2462 = vmul.f32 %v2460, 0.5
    %v2463 = vadd.f32 %v2461, 0.5
    %v2464 = vadd.f32 %v2462, 0.5
    %v2465 = vmul.f32 %v2453, %v2200
    %v2466 = vmul.f32 %v2454, %v2201
    %v2467 = vmul.f32 %v2445, %v2455
    %v2468 = vmul.f32 %v2446, %v2456
    %v2469 = vadd.f32 %v2465, %v2467
    %v2470 = vadd.f32 %v2466, %v2468
    %v2471 = vtanh.pop %v2469
    %v2472 = vtanh.pop %v2470
    %v2473 = vmul.f32 %v2463, %v2471
    %v2474 = vmul.f32 %v2464, %v2472
    %v2475 = vpack.c.bf16 %v2473, %v2473
    %v2476 = vpack.c.bf16 %v2474, %v2474
    %s2477 = smul.u32 4, 8
    %s2478 = smul.addr %s2477, 4
    %s2479 = scalar_lea.vmem [#allocation2], %s2478
    %v2480 = vld [vmem:[%s2479] sm:$0xff]
    %v2481 = vld [vmem:[%s2479 + $0x8] sm:$0xff]
    %v2482 = vld [vmem:[%s2479 + $0x10] sm:$0xff]
    %v2483 = vld [vmem:[%s2479 + $0x18] sm:$0xff]
    %v2484 = vunpack.c.l.bf16 %v2480
    %v2485 = vunpack.c.h.bf16 %v2480
    %v2486 = vunpack.c.l.bf16 %v2481
    %v2487 = vunpack.c.h.bf16 %v2481
    %v2488 = vunpack.c.l.bf16 %v2482
    %v2489 = vunpack.c.h.bf16 %v2482
    %v2490 = vunpack.c.l.bf16 %v2483
    %v2491 = vunpack.c.h.bf16 %v2483
    %2492 = vmatpush.bf16.msra.mxu0 %v1216
    %2493 = vmatpush.bf16.msra.mxu0 %v1208
    %2494 = vmatpush.bf16.msra.mxu0 %v1200
    %2495 = vmatpush.bf16.msra.mxu0 %v1192
    %2496 = vmatpush.bf16.msra.mxu0 %v1184
    %2497 = vmatpush.bf16.msra.mxu0 %v1176
    %2498 = vmatpush.bf16.msra.mxu0 %v1168
    %2499 = vmatpush.bf16.msra.mxu0 %v1160
    %2500 = vmatmul.bf16.gmra.mxu0 %v2475
    %v2501 = vpop.f32.mrf.mxu0
    %v2502 = vadd.f32 0.0, %v2501
    %v2503 = vpop.f32.mrf.mxu0
    %2504 = vdwg.mxu0
    %2505 = vmatpush.bf16.msra.mxu0 %v1280
    %2506 = vmatpush.bf16.msra.mxu0 %v1272
    %2507 = vmatpush.bf16.msra.mxu0 %v1264
    %2508 = vmatpush.bf16.msra.mxu0 %v1256
    %2509 = vmatpush.bf16.msra.mxu0 %v1248
    %2510 = vmatpush.bf16.msra.mxu0 %v1240
    %2511 = vmatpush.bf16.msra.mxu0 %v1232
    %2512 = vmatpush.bf16.msra.mxu0 %v1224
    %2513 = vmatmul.bf16.gmra.mxu0 %v2476
    %v2514 = vpop.f32.mrf.mxu0
    %v2515 = vadd.f32 %v2502, %v2514
    %v2516 = vpop.f32.mrf.mxu0
    %2517 = vdwg.mxu0
    %2518 = vmatpush.bf16.msra.mxu0 %v1217
    %2519 = vmatpush.bf16.msra.mxu0 %v1209
    %2520 = vmatpush.bf16.msra.mxu0 %v1201
    %2521 = vmatpush.bf16.msra.mxu0 %v1193
    %2522 = vmatpush.bf16.msra.mxu0 %v1185
    %2523 = vmatpush.bf16.msra.mxu0 %v1177
    %2524 = vmatpush.bf16.msra.mxu0 %v1169
    %2525 = vmatpush.bf16.msra.mxu0 %v1161
    %2526 = vmatmul.bf16.gmra.mxu0 %v2475
    %v2527 = vpop.f32.mrf.mxu0
    %v2528 = vadd.f32 0.0, %v2527
    %v2529 = vpop.f32.mrf.mxu0
    %2530 = vdwg.mxu0
    %2531 = vmatpush.bf16.msra.mxu0 %v1281
    %2532 = vmatpush.bf16.msra.mxu0 %v1273
    %2533 = vmatpush.bf16.msra.mxu0 %v1265
    %2534 = vmatpush.bf16.msra.mxu0 %v1257
    %2535 = vmatpush.bf16.msra.mxu0 %v1249
    %2536 = vmatpush.bf16.msra.mxu0 %v1241
    %2537 = vmatpush.bf16.msra.mxu0 %v1233
    %2538 = vmatpush.bf16.msra.mxu0 %v1225
    %2539 = vmatmul.bf16.gmra.mxu0 %v2476
    %v2540 = vpop.f32.mrf.mxu0
    %v2541 = vadd.f32 %v2528, %v2540
    %v2542 = vpop.f32.mrf.mxu0
    %2543 = vdwg.mxu0
    %2544 = vmatpush.bf16.msra.mxu0 %v1218
    %2545 = vmatpush.bf16.msra.mxu0 %v1210
    %2546 = vmatpush.bf16.msra.mxu0 %v1202
    %2547 = vmatpush.bf16.msra.mxu0 %v1194
    %2548 = vmatpush.bf16.msra.mxu0 %v1186
    %2549 = vmatpush.bf16.msra.mxu0 %v1178
    %2550 = vmatpush.bf16.msra.mxu0 %v1170
    %2551 = vmatpush.bf16.msra.mxu0 %v1162
    %2552 = vmatmul.bf16.gmra.mxu0 %v2475
    %v2553 = vpop.f32.mrf.mxu0
    %v2554 = vadd.f32 0.0, %v2553
    %v2555 = vpop.f32.mrf.mxu0
    %2556 = vdwg.mxu0
    %2557 = vmatpush.bf16.msra.mxu0 %v1282
    %2558 = vmatpush.bf16.msra.mxu0 %v1274
    %2559 = vmatpush.bf16.msra.mxu0 %v1266
    %2560 = vmatpush.bf16.msra.mxu0 %v1258
    %2561 = vmatpush.bf16.msra.mxu0 %v1250
    %2562 = vmatpush.bf16.msra.mxu0 %v1242
    %2563 = vmatpush.bf16.msra.mxu0 %v1234
    %2564 = vmatpush.bf16.msra.mxu0 %v1226
    %2565 = vmatmul.bf16.gmra.mxu0 %v2476
    %v2566 = vpop.f32.mrf.mxu0
    %v2567 = vadd.f32 %v2554, %v2566
    %v2568 = vpop.f32.mrf.mxu0
    %2569 = vdwg.mxu0
    %2570 = vmatpush.bf16.msra.mxu0 %v1219
    %2571 = vmatpush.bf16.msra.mxu0 %v1211
    %2572 = vmatpush.bf16.msra.mxu0 %v1203
    %2573 = vmatpush.bf16.msra.mxu0 %v1195
    %2574 = vmatpush.bf16.msra.mxu0 %v1187
    %2575 = vmatpush.bf16.msra.mxu0 %v1179
    %2576 = vmatpush.bf16.msra.mxu0 %v1171
    %2577 = vmatpush.bf16.msra.mxu0 %v1163
    %2578 = vmatmul.bf16.gmra.mxu0 %v2475
    %v2579 = vpop.f32.mrf.mxu0
    %v2580 = vadd.f32 0.0, %v2579
    %v2581 = vpop.f32.mrf.mxu0
    %2582 = vdwg.mxu0
    %2583 = vmatpush.bf16.msra.mxu0 %v1283
    %2584 = vmatpush.bf16.msra.mxu0 %v1275
    %2585 = vmatpush.bf16.msra.mxu0 %v1267
    %2586 = vmatpush.bf16.msra.mxu0 %v1259
    %2587 = vmatpush.bf16.msra.mxu0 %v1251
    %2588 = vmatpush.bf16.msra.mxu0 %v1243
    %2589 = vmatpush.bf16.msra.mxu0 %v1235
    %2590 = vmatpush.bf16.msra.mxu0 %v1227
    %2591 = vmatmul.bf16.gmra.mxu0 %v2476
    %v2592 = vpop.f32.mrf.mxu0
    %v2593 = vadd.f32 %v2580, %v2592
    %v2594 = vpop.f32.mrf.mxu0
    %2595 = vdwg.mxu0
    %2596 = vmatpush.bf16.msra.mxu0 %v1220
    %2597 = vmatpush.bf16.msra.mxu0 %v1212
    %2598 = vmatpush.bf16.msra.mxu0 %v1204
    %2599 = vmatpush.bf16.msra.mxu0 %v1196
    %2600 = vmatpush.bf16.msra.mxu0 %v1188
    %2601 = vmatpush.bf16.msra.mxu0 %v1180
    %2602 = vmatpush.bf16.msra.mxu0 %v1172
    %2603 = vmatpush.bf16.msra.mxu0 %v1164
    %2604 = vmatmul.bf16.gmra.mxu0 %v2475
    %v2605 = vpop.f32.mrf.mxu0
    %v2606 = vadd.f32 0.0, %v2605
    %v2607 = vpop.f32.mrf.mxu0
    %2608 = vdwg.mxu0
    %2609 = vmatpush.bf16.msra.mxu0 %v1284
    %2610 = vmatpush.bf16.msra.mxu0 %v1276
    %2611 = vmatpush.bf16.msra.mxu0 %v1268
    %2612 = vmatpush.bf16.msra.mxu0 %v1260
    %2613 = vmatpush.bf16.msra.mxu0 %v1252
    %2614 = vmatpush.bf16.msra.mxu0 %v1244
    %2615 = vmatpush.bf16.msra.mxu0 %v1236
    %2616 = vmatpush.bf16.msra.mxu0 %v1228
    %2617 = vmatmul.bf16.gmra.mxu0 %v2476
    %v2618 = vpop.f32.mrf.mxu0
    %v2619 = vadd.f32 %v2606, %v2618
    %v2620 = vpop.f32.mrf.mxu0
    %2621 = vdwg.mxu0
    %2622 = vmatpush.bf16.msra.mxu0 %v1221
    %2623 = vmatpush.bf16.msra.mxu0 %v1213
    %2624 = vmatpush.bf16.msra.mxu0 %v1205
    %2625 = vmatpush.bf16.msra.mxu0 %v1197
    %2626 = vmatpush.bf16.msra.mxu0 %v1189
    %2627 = vmatpush.bf16.msra.mxu0 %v1181
    %2628 = vmatpush.bf16.msra.mxu0 %v1173
    %2629 = vmatpush.bf16.msra.mxu0 %v1165
    %2630 = vmatmul.bf16.gmra.mxu0 %v2475
    %v2631 = vpop.f32.mrf.mxu0
    %v2632 = vadd.f32 0.0, %v2631
    %v2633 = vpop.f32.mrf.mxu0
    %2634 = vdwg.mxu0
    %2635 = vmatpush.bf16.msra.mxu0 %v1285
    %2636 = vmatpush.bf16.msra.mxu0 %v1277
    %2637 = vmatpush.bf16.msra.mxu0 %v1269
    %2638 = vmatpush.bf16.msra.mxu0 %v1261
    %2639 = vmatpush.bf16.msra.mxu0 %v1253
    %2640 = vmatpush.bf16.msra.mxu0 %v1245
    %2641 = vmatpush.bf16.msra.mxu0 %v1237
    %2642 = vmatpush.bf16.msra.mxu0 %v1229
    %2643 = vmatmul.bf16.gmra.mxu0 %v2476
    %v2644 = vpop.f32.mrf.mxu0
    %v2645 = vadd.f32 %v2632, %v2644
    %v2646 = vpop.f32.mrf.mxu0
    %2647 = vdwg.mxu0
    %2648 = vmatpush.bf16.msra.mxu0 %v1222
    %2649 = vmatpush.bf16.msra.mxu0 %v1214
    %2650 = vmatpush.bf16.msra.mxu0 %v1206
    %2651 = vmatpush.bf16.msra.mxu0 %v1198
    %2652 = vmatpush.bf16.msra.mxu0 %v1190
    %2653 = vmatpush.bf16.msra.mxu0 %v1182
    %2654 = vmatpush.bf16.msra.mxu0 %v1174
    %2655 = vmatpush.bf16.msra.mxu0 %v1166
    %2656 = vmatmul.bf16.gmra.mxu0 %v2475
    %v2657 = vpop.f32.mrf.mxu0
    %v2658 = vadd.f32 0.0, %v2657
    %v2659 = vpop.f32.mrf.mxu0
    %2660 = vdwg.mxu0
    %2661 = vmatpush.bf16.msra.mxu0 %v1286
    %2662 = vmatpush.bf16.msra.mxu0 %v1278
    %2663 = vmatpush.bf16.msra.mxu0 %v1270
    %2664 = vmatpush.bf16.msra.mxu0 %v1262
    %2665 = vmatpush.bf16.msra.mxu0 %v1254
    %2666 = vmatpush.bf16.msra.mxu0 %v1246
    %2667 = vmatpush.bf16.msra.mxu0 %v1238
    %2668 = vmatpush.bf16.msra.mxu0 %v1230
    %2669 = vmatmul.bf16.gmra.mxu0 %v2476
    %v2670 = vpop.f32.mrf.mxu0
    %v2671 = vadd.f32 %v2658, %v2670
    %v2672 = vpop.f32.mrf.mxu0
    %2673 = vdwg.mxu0
    %2674 = vmatpush.bf16.msra.mxu0 %v1223
    %2675 = vmatpush.bf16.msra.mxu0 %v1215
    %2676 = vmatpush.bf16.msra.mxu0 %v1207
    %2677 = vmatpush.bf16.msra.mxu0 %v1199
    %2678 = vmatpush.bf16.msra.mxu0 %v1191
    %2679 = vmatpush.bf16.msra.mxu0 %v1183
    %2680 = vmatpush.bf16.msra.mxu0 %v1175
    %2681 = vmatpush.bf16.msra.mxu0 %v1167
    %2682 = vmatmul.bf16.gmra.mxu0 %v2475
    %v2683 = vpop.f32.mrf.mxu0
    %v2684 = vadd.f32 0.0, %v2683
    %v2685 = vpop.f32.mrf.mxu0
    %2686 = vdwg.mxu0
    %2687 = vmatpush.bf16.msra.mxu0 %v1287
    %2688 = vmatpush.bf16.msra.mxu0 %v1279
    %2689 = vmatpush.bf16.msra.mxu0 %v1271
    %2690 = vmatpush.bf16.msra.mxu0 %v1263
    %2691 = vmatpush.bf16.msra.mxu0 %v1255
    %2692 = vmatpush.bf16.msra.mxu0 %v1247
    %2693 = vmatpush.bf16.msra.mxu0 %v1239
    %2694 = vmatpush.bf16.msra.mxu0 %v1231
    %2695 = vmatmul.bf16.gmra.mxu0 %v2476
    %v2696 = vpop.f32.mrf.mxu0
    %v2697 = vadd.f32 %v2684, %v2696
    %v2698 = vpop.f32.mrf.mxu0
    %2699 = vdwg.mxu0
    %v2700 = vadd.f32 %v2484, %v2515
    %v2701 = vadd.f32 %v2485, %v2541
    %v2702 = vadd.f32 %v2486, %v2567
    %v2703 = vadd.f32 %v2487, %v2593
    %v2704 = vadd.f32 %v2488, %v2619
    %v2705 = vadd.f32 %v2489, %v2645
    %v2706 = vadd.f32 %v2490, %v2671
    %v2707 = vadd.f32 %v2491, %v2697
    %v2708 = vmul.f32 %v2700, 0.5
    %v2709 = vmul.f32 %v2701, 0.5
    %v2710 = vtanh.pop %v2708
    %v2711 = vtanh.pop %v2709
    %v2712 = vmul.f32 %v2710, 0.5
    %v2713 = vmul.f32 %v2711, 0.5
    %v2714 = vadd.f32 %v2712, 0.5
    %v2715 = vadd.f32 %v2713, 0.5
    %v2716 = vmul.f32 %v2702, 0.5
    %v2717 = vmul.f32 %v2703, 0.5
    %v2718 = vtanh.pop %v2716
    %v2719 = vtanh.pop %v2717
    %v2720 = vmul.f32 %v2718, 0.5
    %v2721 = vmul.f32 %v2719, 0.5
    %v2722 = vadd.f32 %v2720, 0.5
    %v2723 = vadd.f32 %v2721, 0.5
    %v2724 = vtanh.pop %v2704
    %v2725 = vtanh.pop %v2705
    %v2726 = vmul.f32 %v2706, 0.5
    %v2727 = vmul.f32 %v2707, 0.5
    %v2728 = vtanh.pop %v2726
    %v2729 = vtanh.pop %v2727
    %v2730 = vmul.f32 %v2728, 0.5
    %v2731 = vmul.f32 %v2729, 0.5
    %v2732 = vadd.f32 %v2730, 0.5
    %v2733 = vadd.f32 %v2731, 0.5
    %v2734 = vmul.f32 %v2722, %v2469
    %v2735 = vmul.f32 %v2723, %v2470
    %v2736 = vmul.f32 %v2714, %v2724
    %v2737 = vmul.f32 %v2715, %v2725
    %v2738 = vadd.f32 %v2734, %v2736
    %v2739 = vadd.f32 %v2735, %v2737
    %v2740 = vtanh.pop %v2738
    %v2741 = vtanh.pop %v2739
    %v2742 = vmul.f32 %v2732, %v2740
    %v2743 = vmul.f32 %v2733, %v2741
    %v2744 = vpack.c.bf16 %v2742, %v2742
    %v2745 = vpack.c.bf16 %v2743, %v2743
    %s2746 = smul.u32 5, 8
    %s2747 = smul.addr %s2746, 4
    %s2748 = scalar_lea.vmem [#allocation2], %s2747
    %v2749 = vld [vmem:[%s2748] sm:$0xff]
    %v2750 = vld [vmem:[%s2748 + $0x8] sm:$0xff]
    %v2751 = vld [vmem:[%s2748 + $0x10] sm:$0xff]
    %v2752 = vld [vmem:[%s2748 + $0x18] sm:$0xff]
    %v2753 = vunpack.c.l.bf16 %v2749
    %v2754 = vunpack.c.h.bf16 %v2749
    %v2755 = vunpack.c.l.bf16 %v2750
    %v2756 = vunpack.c.h.bf16 %v2750
    %v2757 = vunpack.c.l.bf16 %v2751
    %v2758 = vunpack.c.h.bf16 %v2751
    %v2759 = vunpack.c.l.bf16 %v2752
    %v2760 = vunpack.c.h.bf16 %v2752
    %2761 = vmatpush.bf16.msra.mxu0 %v1216
    %2762 = vmatpush.bf16.msra.mxu0 %v1208
    %2763 = vmatpush.bf16.msra.mxu0 %v1200
    %2764 = vmatpush.bf16.msra.mxu0 %v1192
    %2765 = vmatpush.bf16.msra.mxu0 %v1184
    %2766 = vmatpush.bf16.msra.mxu0 %v1176
    %2767 = vmatpush.bf16.msra.mxu0 %v1168
    %2768 = vmatpush.bf16.msra.mxu0 %v1160
    %2769 = vmatmul.bf16.gmra.mxu0 %v2744
    %v2770 = vpop.f32.mrf.mxu0
    %v2771 = vadd.f32 0.0, %v2770
    %v2772 = vpop.f32.mrf.mxu0
    %2773 = vdwg.mxu0
    %2774 = vmatpush.bf16.msra.mxu0 %v1280
    %2775 = vmatpush.bf16.msra.mxu0 %v1272
    %2776 = vmatpush.bf16.msra.mxu0 %v1264
    %2777 = vmatpush.bf16.msra.mxu0 %v1256
    %2778 = vmatpush.bf16.msra.mxu0 %v1248
    %2779 = vmatpush.bf16.msra.mxu0 %v1240
    %2780 = vmatpush.bf16.msra.mxu0 %v1232
    %2781 = vmatpush.bf16.msra.mxu0 %v1224
    %2782 = vmatmul.bf16.gmra.mxu0 %v2745
    %v2783 = vpop.f32.mrf.mxu0
    %v2784 = vadd.f32 %v2771, %v2783
    %v2785 = vpop.f32.mrf.mxu0
    %2786 = vdwg.mxu0
    %2787 = vmatpush.bf16.msra.mxu0 %v1217
    %2788 = vmatpush.bf16.msra.mxu0 %v1209
    %2789 = vmatpush.bf16.msra.mxu0 %v1201
    %2790 = vmatpush.bf16.msra.mxu0 %v1193
    %2791 = vmatpush.bf16.msra.mxu0 %v1185
    %2792 = vmatpush.bf16.msra.mxu0 %v1177
    %2793 = vmatpush.bf16.msra.mxu0 %v1169
    %2794 = vmatpush.bf16.msra.mxu0 %v1161
    %2795 = vmatmul.bf16.gmra.mxu0 %v2744
    %v2796 = vpop.f32.mrf.mxu0
    %v2797 = vadd.f32 0.0, %v2796
    %v2798 = vpop.f32.mrf.mxu0
    %2799 = vdwg.mxu0
    %2800 = vmatpush.bf16.msra.mxu0 %v1281
    %2801 = vmatpush.bf16.msra.mxu0 %v1273
    %2802 = vmatpush.bf16.msra.mxu0 %v1265
    %2803 = vmatpush.bf16.msra.mxu0 %v1257
    %2804 = vmatpush.bf16.msra.mxu0 %v1249
    %2805 = vmatpush.bf16.msra.mxu0 %v1241
    %2806 = vmatpush.bf16.msra.mxu0 %v1233
    %2807 = vmatpush.bf16.msra.mxu0 %v1225
    %2808 = vmatmul.bf16.gmra.mxu0 %v2745
    %v2809 = vpop.f32.mrf.mxu0
    %v2810 = vadd.f32 %v2797, %v2809
    %v2811 = vpop.f32.mrf.mxu0
    %2812 = vdwg.mxu0
    %2813 = vmatpush.bf16.msra.mxu0 %v1218
    %2814 = vmatpush.bf16.msra.mxu0 %v1210
    %2815 = vmatpush.bf16.msra.mxu0 %v1202
    %2816 = vmatpush.bf16.msra.mxu0 %v1194
    %2817 = vmatpush.bf16.msra.mxu0 %v1186
    %2818 = vmatpush.bf16.msra.mxu0 %v1178
    %2819 = vmatpush.bf16.msra.mxu0 %v1170
    %2820 = vmatpush.bf16.msra.mxu0 %v1162
    %2821 = vmatmul.bf16.gmra.mxu0 %v2744
    %v2822 = vpop.f32.mrf.mxu0
    %v2823 = vadd.f32 0.0, %v2822
    %v2824 = vpop.f32.mrf.mxu0
    %2825 = vdwg.mxu0
    %2826 = vmatpush.bf16.msra.mxu0 %v1282
    %2827 = vmatpush.bf16.msra.mxu0 %v1274
    %2828 = vmatpush.bf16.msra.mxu0 %v1266
    %2829 = vmatpush.bf16.msra.mxu0 %v1258
    %2830 = vmatpush.bf16.msra.mxu0 %v1250
    %2831 = vmatpush.bf16.msra.mxu0 %v1242
    %2832 = vmatpush.bf16.msra.mxu0 %v1234
    %2833 = vmatpush.bf16.msra.mxu0 %v1226
    %2834 = vmatmul.bf16.gmra.mxu0 %v2745
    %v2835 = vpop.f32.mrf.mxu0
    %v2836 = vadd.f32 %v2823, %v2835
    %v2837 = vpop.f32.mrf.mxu0
    %2838 = vdwg.mxu0
    %2839 = vmatpush.bf16.msra.mxu0 %v1219
    %2840 = vmatpush.bf16.msra.mxu0 %v1211
    %2841 = vmatpush.bf16.msra.mxu0 %v1203
    %2842 = vmatpush.bf16.msra.mxu0 %v1195
    %2843 = vmatpush.bf16.msra.mxu0 %v1187
    %2844 = vmatpush.bf16.msra.mxu0 %v1179
    %2845 = vmatpush.bf16.msra.mxu0 %v1171
    %2846 = vmatpush.bf16.msra.mxu0 %v1163
    %2847 = vmatmul.bf16.gmra.mxu0 %v2744
    %v2848 = vpop.f32.mrf.mxu0
    %v2849 = vadd.f32 0.0, %v2848
    %v2850 = vpop.f32.mrf.mxu0
    %2851 = vdwg.mxu0
    %2852 = vmatpush.bf16.msra.mxu0 %v1283
    %2853 = vmatpush.bf16.msra.mxu0 %v1275
    %2854 = vmatpush.bf16.msra.mxu0 %v1267
    %2855 = vmatpush.bf16.msra.mxu0 %v1259
    %2856 = vmatpush.bf16.msra.mxu0 %v1251
    %2857 = vmatpush.bf16.msra.mxu0 %v1243
    %2858 = vmatpush.bf16.msra.mxu0 %v1235
    %2859 = vmatpush.bf16.msra.mxu0 %v1227
    %2860 = vmatmul.bf16.gmra.mxu0 %v2745
    %v2861 = vpop.f32.mrf.mxu0
    %v2862 = vadd.f32 %v2849, %v2861
    %v2863 = vpop.f32.mrf.mxu0
    %2864 = vdwg.mxu0
    %2865 = vmatpush.bf16.msra.mxu0 %v1220
    %2866 = vmatpush.bf16.msra.mxu0 %v1212
    %2867 = vmatpush.bf16.msra.mxu0 %v1204
    %2868 = vmatpush.bf16.msra.mxu0 %v1196
    %2869 = vmatpush.bf16.msra.mxu0 %v1188
    %2870 = vmatpush.bf16.msra.mxu0 %v1180
    %2871 = vmatpush.bf16.msra.mxu0 %v1172
    %2872 = vmatpush.bf16.msra.mxu0 %v1164
    %2873 = vmatmul.bf16.gmra.mxu0 %v2744
    %v2874 = vpop.f32.mrf.mxu0
    %v2875 = vadd.f32 0.0, %v2874
    %v2876 = vpop.f32.mrf.mxu0
    %2877 = vdwg.mxu0
    %2878 = vmatpush.bf16.msra.mxu0 %v1284
    %2879 = vmatpush.bf16.msra.mxu0 %v1276
    %2880 = vmatpush.bf16.msra.mxu0 %v1268
    %2881 = vmatpush.bf16.msra.mxu0 %v1260
    %2882 = vmatpush.bf16.msra.mxu0 %v1252
    %2883 = vmatpush.bf16.msra.mxu0 %v1244
    %2884 = vmatpush.bf16.msra.mxu0 %v1236
    %2885 = vmatpush.bf16.msra.mxu0 %v1228
    %2886 = vmatmul.bf16.gmra.mxu0 %v2745
    %v2887 = vpop.f32.mrf.mxu0
    %v2888 = vadd.f32 %v2875, %v2887
    %v2889 = vpop.f32.mrf.mxu0
    %2890 = vdwg.mxu0
    %2891 = vmatpush.bf16.msra.mxu0 %v1221
    %2892 = vmatpush.bf16.msra.mxu0 %v1213
    %2893 = vmatpush.bf16.msra.mxu0 %v1205
    %2894 = vmatpush.bf16.msra.mxu0 %v1197
    %2895 = vmatpush.bf16.msra.mxu0 %v1189
    %2896 = vmatpush.bf16.msra.mxu0 %v1181
    %2897 = vmatpush.bf16.msra.mxu0 %v1173
    %2898 = vmatpush.bf16.msra.mxu0 %v1165
    %2899 = vmatmul.bf16.gmra.mxu0 %v2744
    %v2900 = vpop.f32.mrf.mxu0
    %v2901 = vadd.f32 0.0, %v2900
    %v2902 = vpop.f32.mrf.mxu0
    %2903 = vdwg.mxu0
    %2904 = vmatpush.bf16.msra.mxu0 %v1285
    %2905 = vmatpush.bf16.msra.mxu0 %v1277
    %2906 = vmatpush.bf16.msra.mxu0 %v1269
    %2907 = vmatpush.bf16.msra.mxu0 %v1261
    %2908 = vmatpush.bf16.msra.mxu0 %v1253
    %2909 = vmatpush.bf16.msra.mxu0 %v1245
    %2910 = vmatpush.bf16.msra.mxu0 %v1237
    %2911 = vmatpush.bf16.msra.mxu0 %v1229
    %2912 = vmatmul.bf16.gmra.mxu0 %v2745
    %v2913 = vpop.f32.mrf.mxu0
    %v2914 = vadd.f32 %v2901, %v2913
    %v2915 = vpop.f32.mrf.mxu0
    %2916 = vdwg.mxu0
    %2917 = vmatpush.bf16.msra.mxu0 %v1222
    %2918 = vmatpush.bf16.msra.mxu0 %v1214
    %2919 = vmatpush.bf16.msra.mxu0 %v1206
    %2920 = vmatpush.bf16.msra.mxu0 %v1198
    %2921 = vmatpush.bf16.msra.mxu0 %v1190
    %2922 = vmatpush.bf16.msra.mxu0 %v1182
    %2923 = vmatpush.bf16.msra.mxu0 %v1174
    %2924 = vmatpush.bf16.msra.mxu0 %v1166
    %2925 = vmatmul.bf16.gmra.mxu0 %v2744
    %v2926 = vpop.f32.mrf.mxu0
    %v2927 = vadd.f32 0.0, %v2926
    %v2928 = vpop.f32.mrf.mxu0
    %2929 = vdwg.mxu0
    %2930 = vmatpush.bf16.msra.mxu0 %v1286
    %2931 = vmatpush.bf16.msra.mxu0 %v1278
    %2932 = vmatpush.bf16.msra.mxu0 %v1270
    %2933 = vmatpush.bf16.msra.mxu0 %v1262
    %2934 = vmatpush.bf16.msra.mxu0 %v1254
    %2935 = vmatpush.bf16.msra.mxu0 %v1246
    %2936 = vmatpush.bf16.msra.mxu0 %v1238
    %2937 = vmatpush.bf16.msra.mxu0 %v1230
    %2938 = vmatmul.bf16.gmra.mxu0 %v2745
    %v2939 = vpop.f32.mrf.mxu0
    %v2940 = vadd.f32 %v2927, %v2939
    %v2941 = vpop.f32.mrf.mxu0
    %2942 = vdwg.mxu0
    %2943 = vmatpush.bf16.msra.mxu0 %v1223
    %2944 = vmatpush.bf16.msra.mxu0 %v1215
    %2945 = vmatpush.bf16.msra.mxu0 %v1207
    %2946 = vmatpush.bf16.msra.mxu0 %v1199
    %2947 = vmatpush.bf16.msra.mxu0 %v1191
    %2948 = vmatpush.bf16.msra.mxu0 %v1183
    %2949 = vmatpush.bf16.msra.mxu0 %v1175
    %2950 = vmatpush.bf16.msra.mxu0 %v1167
    %2951 = vmatmul.bf16.gmra.mxu0 %v2744
    %v2952 = vpop.f32.mrf.mxu0
    %v2953 = vadd.f32 0.0, %v2952
    %v2954 = vpop.f32.mrf.mxu0
    %2955 = vdwg.mxu0
    %2956 = vmatpush.bf16.msra.mxu0 %v1287
    %2957 = vmatpush.bf16.msra.mxu0 %v1279
    %2958 = vmatpush.bf16.msra.mxu0 %v1271
    %2959 = vmatpush.bf16.msra.mxu0 %v1263
    %2960 = vmatpush.bf16.msra.mxu0 %v1255
    %2961 = vmatpush.bf16.msra.mxu0 %v1247
    %2962 = vmatpush.bf16.msra.mxu0 %v1239
    %2963 = vmatpush.bf16.msra.mxu0 %v1231
    %2964 = vmatmul.bf16.gmra.mxu0 %v2745
    %v2965 = vpop.f32.mrf.mxu0
    %v2966 = vadd.f32 %v2953, %v2965
    %v2967 = vpop.f32.mrf.mxu0
    %2968 = vdwg.mxu0
    %v2969 = vadd.f32 %v2753, %v2784
    %v2970 = vadd.f32 %v2754, %v2810
    %v2971 = vadd.f32 %v2755, %v2836
    %v2972 = vadd.f32 %v2756, %v2862
    %v2973 = vadd.f32 %v2757, %v2888
    %v2974 = vadd.f32 %v2758, %v2914
    %v2975 = vadd.f32 %v2759, %v2940
    %v2976 = vadd.f32 %v2760, %v2966
    %v2977 = vmul.f32 %v2969, 0.5
    %v2978 = vmul.f32 %v2970, 0.5
    %v2979 = vtanh.pop %v2977
    %v2980 = vtanh.pop %v2978
    %v2981 = vmul.f32 %v2979, 0.5
    %v2982 = vmul.f32 %v2980, 0.5
    %v2983 = vadd.f32 %v2981, 0.5
    %v2984 = vadd.f32 %v2982, 0.5
    %v2985 = vmul.f32 %v2971, 0.5
    %v2986 = vmul.f32 %v2972, 0.5
    %v2987 = vtanh.pop %v2985
    %v2988 = vtanh.pop %v2986
    %v2989 = vmul.f32 %v2987, 0.5
    %v2990 = vmul.f32 %v2988, 0.5
    %v2991 = vadd.f32 %v2989, 0.5
    %v2992 = vadd.f32 %v2990, 0.5
    %v2993 = vtanh.pop %v2973
    %v2994 = vtanh.pop %v2974
    %v2995 = vmul.f32 %v2975, 0.5
    %v2996 = vmul.f32 %v2976, 0.5
    %v2997 = vtanh.pop %v2995
    %v2998 = vtanh.pop %v2996
    %v2999 = vmul.f32 %v2997, 0.5
    %v3000 = vmul.f32 %v2998, 0.5
    %v3001 = vadd.f32 %v2999, 0.5
    %v3002 = vadd.f32 %v3000, 0.5
    %v3003 = vmul.f32 %v2991, %v2738
    %v3004 = vmul.f32 %v2992, %v2739
    %v3005 = vmul.f32 %v2983, %v2993
    %v3006 = vmul.f32 %v2984, %v2994
    %v3007 = vadd.f32 %v3003, %v3005
    %v3008 = vadd.f32 %v3004, %v3006
    %v3009 = vtanh.pop %v3007
    %v3010 = vtanh.pop %v3008
    %v3011 = vmul.f32 %v3001, %v3009
    %v3012 = vmul.f32 %v3002, %v3010
    %v3013 = vpack.c.bf16 %v3011, %v3011
    %v3014 = vpack.c.bf16 %v3012, %v3012
    %s3015 = smul.u32 6, 8
    %s3016 = smul.addr %s3015, 4
    %s3017 = scalar_lea.vmem [#allocation2], %s3016
    %v3018 = vld [vmem:[%s3017] sm:$0xff]
    %v3019 = vld [vmem:[%s3017 + $0x8] sm:$0xff]
    %v3020 = vld [vmem:[%s3017 + $0x10] sm:$0xff]
    %v3021 = vld [vmem:[%s3017 + $0x18] sm:$0xff]
    %v3022 = vunpack.c.l.bf16 %v3018
    %v3023 = vunpack.c.h.bf16 %v3018
    %v3024 = vunpack.c.l.bf16 %v3019
    %v3025 = vunpack.c.h.bf16 %v3019
    %v3026 = vunpack.c.l.bf16 %v3020
    %v3027 = vunpack.c.h.bf16 %v3020
    %v3028 = vunpack.c.l.bf16 %v3021
    %v3029 = vunpack.c.h.bf16 %v3021
    %3030 = vmatpush.bf16.msra.mxu0 %v1216
    %3031 = vmatpush.bf16.msra.mxu0 %v1208
    %3032 = vmatpush.bf16.msra.mxu0 %v1200
    %3033 = vmatpush.bf16.msra.mxu0 %v1192
    %3034 = vmatpush.bf16.msra.mxu0 %v1184
    %3035 = vmatpush.bf16.msra.mxu0 %v1176
    %3036 = vmatpush.bf16.msra.mxu0 %v1168
    %3037 = vmatpush.bf16.msra.mxu0 %v1160
    %3038 = vmatmul.bf16.gmra.mxu0 %v3013
    %v3039 = vpop.f32.mrf.mxu0
    %v3040 = vadd.f32 0.0, %v3039
    %v3041 = vpop.f32.mrf.mxu0
    %3042 = vdwg.mxu0
    %3043 = vmatpush.bf16.msra.mxu0 %v1280
    %3044 = vmatpush.bf16.msra.mxu0 %v1272
    %3045 = vmatpush.bf16.msra.mxu0 %v1264
    %3046 = vmatpush.bf16.msra.mxu0 %v1256
    %3047 = vmatpush.bf16.msra.mxu0 %v1248
    %3048 = vmatpush.bf16.msra.mxu0 %v1240
    %3049 = vmatpush.bf16.msra.mxu0 %v1232
    %3050 = vmatpush.bf16.msra.mxu0 %v1224
    %3051 = vmatmul.bf16.gmra.mxu0 %v3014
    %v3052 = vpop.f32.mrf.mxu0
    %v3053 = vadd.f32 %v3040, %v3052
    %v3054 = vpop.f32.mrf.mxu0
    %3055 = vdwg.mxu0
    %3056 = vmatpush.bf16.msra.mxu0 %v1217
    %3057 = vmatpush.bf16.msra.mxu0 %v1209
    %3058 = vmatpush.bf16.msra.mxu0 %v1201
    %3059 = vmatpush.bf16.msra.mxu0 %v1193
    %3060 = vmatpush.bf16.msra.mxu0 %v1185
    %3061 = vmatpush.bf16.msra.mxu0 %v1177
    %3062 = vmatpush.bf16.msra.mxu0 %v1169
    %3063 = vmatpush.bf16.msra.mxu0 %v1161
    %3064 = vmatmul.bf16.gmra.mxu0 %v3013
    %v3065 = vpop.f32.mrf.mxu0
    %v3066 = vadd.f32 0.0, %v3065
    %v3067 = vpop.f32.mrf.mxu0
    %3068 = vdwg.mxu0
    %3069 = vmatpush.bf16.msra.mxu0 %v1281
    %3070 = vmatpush.bf16.msra.mxu0 %v1273
    %3071 = vmatpush.bf16.msra.mxu0 %v1265
    %3072 = vmatpush.bf16.msra.mxu0 %v1257
    %3073 = vmatpush.bf16.msra.mxu0 %v1249
    %3074 = vmatpush.bf16.msra.mxu0 %v1241
    %3075 = vmatpush.bf16.msra.mxu0 %v1233
    %3076 = vmatpush.bf16.msra.mxu0 %v1225
    %3077 = vmatmul.bf16.gmra.mxu0 %v3014
    %v3078 = vpop.f32.mrf.mxu0
    %v3079 = vadd.f32 %v3066, %v3078
    %v3080 = vpop.f32.mrf.mxu0
    %3081 = vdwg.mxu0
    %3082 = vmatpush.bf16.msra.mxu0 %v1218
    %3083 = vmatpush.bf16.msra.mxu0 %v1210
    %3084 = vmatpush.bf16.msra.mxu0 %v1202
    %3085 = vmatpush.bf16.msra.mxu0 %v1194
    %3086 = vmatpush.bf16.msra.mxu0 %v1186
    %3087 = vmatpush.bf16.msra.mxu0 %v1178
    %3088 = vmatpush.bf16.msra.mxu0 %v1170
    %3089 = vmatpush.bf16.msra.mxu0 %v1162
    %3090 = vmatmul.bf16.gmra.mxu0 %v3013
    %v3091 = vpop.f32.mrf.mxu0
    %v3092 = vadd.f32 0.0, %v3091
    %v3093 = vpop.f32.mrf.mxu0
    %3094 = vdwg.mxu0
    %3095 = vmatpush.bf16.msra.mxu0 %v1282
    %3096 = vmatpush.bf16.msra.mxu0 %v1274
    %3097 = vmatpush.bf16.msra.mxu0 %v1266
    %3098 = vmatpush.bf16.msra.mxu0 %v1258
    %3099 = vmatpush.bf16.msra.mxu0 %v1250
    %3100 = vmatpush.bf16.msra.mxu0 %v1242
    %3101 = vmatpush.bf16.msra.mxu0 %v1234
    %3102 = vmatpush.bf16.msra.mxu0 %v1226
    %3103 = vmatmul.bf16.gmra.mxu0 %v3014
    %v3104 = vpop.f32.mrf.mxu0
    %v3105 = vadd.f32 %v3092, %v3104
    %v3106 = vpop.f32.mrf.mxu0
    %3107 = vdwg.mxu0
    %3108 = vmatpush.bf16.msra.mxu0 %v1219
    %3109 = vmatpush.bf16.msra.mxu0 %v1211
    %3110 = vmatpush.bf16.msra.mxu0 %v1203
    %3111 = vmatpush.bf16.msra.mxu0 %v1195
    %3112 = vmatpush.bf16.msra.mxu0 %v1187
    %3113 = vmatpush.bf16.msra.mxu0 %v1179
    %3114 = vmatpush.bf16.msra.mxu0 %v1171
    %3115 = vmatpush.bf16.msra.mxu0 %v1163
    %3116 = vmatmul.bf16.gmra.mxu0 %v3013
    %v3117 = vpop.f32.mrf.mxu0
    %v3118 = vadd.f32 0.0, %v3117
    %v3119 = vpop.f32.mrf.mxu0
    %3120 = vdwg.mxu0
    %3121 = vmatpush.bf16.msra.mxu0 %v1283
    %3122 = vmatpush.bf16.msra.mxu0 %v1275
    %3123 = vmatpush.bf16.msra.mxu0 %v1267
    %3124 = vmatpush.bf16.msra.mxu0 %v1259
    %3125 = vmatpush.bf16.msra.mxu0 %v1251
    %3126 = vmatpush.bf16.msra.mxu0 %v1243
    %3127 = vmatpush.bf16.msra.mxu0 %v1235
    %3128 = vmatpush.bf16.msra.mxu0 %v1227
    %3129 = vmatmul.bf16.gmra.mxu0 %v3014
    %v3130 = vpop.f32.mrf.mxu0
    %v3131 = vadd.f32 %v3118, %v3130
    %v3132 = vpop.f32.mrf.mxu0
    %3133 = vdwg.mxu0
    %3134 = vmatpush.bf16.msra.mxu0 %v1220
    %3135 = vmatpush.bf16.msra.mxu0 %v1212
    %3136 = vmatpush.bf16.msra.mxu0 %v1204
    %3137 = vmatpush.bf16.msra.mxu0 %v1196
    %3138 = vmatpush.bf16.msra.mxu0 %v1188
    %3139 = vmatpush.bf16.msra.mxu0 %v1180
    %3140 = vmatpush.bf16.msra.mxu0 %v1172
    %3141 = vmatpush.bf16.msra.mxu0 %v1164
    %3142 = vmatmul.bf16.gmra.mxu0 %v3013
    %v3143 = vpop.f32.mrf.mxu0
    %v3144 = vadd.f32 0.0, %v3143
    %v3145 = vpop.f32.mrf.mxu0
    %3146 = vdwg.mxu0
    %3147 = vmatpush.bf16.msra.mxu0 %v1284
    %3148 = vmatpush.bf16.msra.mxu0 %v1276
    %3149 = vmatpush.bf16.msra.mxu0 %v1268
    %3150 = vmatpush.bf16.msra.mxu0 %v1260
    %3151 = vmatpush.bf16.msra.mxu0 %v1252
    %3152 = vmatpush.bf16.msra.mxu0 %v1244
    %3153 = vmatpush.bf16.msra.mxu0 %v1236
    %3154 = vmatpush.bf16.msra.mxu0 %v1228
    %3155 = vmatmul.bf16.gmra.mxu0 %v3014
    %v3156 = vpop.f32.mrf.mxu0
    %v3157 = vadd.f32 %v3144, %v3156
    %v3158 = vpop.f32.mrf.mxu0
    %3159 = vdwg.mxu0
    %3160 = vmatpush.bf16.msra.mxu0 %v1221
    %3161 = vmatpush.bf16.msra.mxu0 %v1213
    %3162 = vmatpush.bf16.msra.mxu0 %v1205
    %3163 = vmatpush.bf16.msra.mxu0 %v1197
    %3164 = vmatpush.bf16.msra.mxu0 %v1189
    %3165 = vmatpush.bf16.msra.mxu0 %v1181
    %3166 = vmatpush.bf16.msra.mxu0 %v1173
    %3167 = vmatpush.bf16.msra.mxu0 %v1165
    %3168 = vmatmul.bf16.gmra.mxu0 %v3013
    %v3169 = vpop.f32.mrf.mxu0
    %v3170 = vadd.f32 0.0, %v3169
    %v3171 = vpop.f32.mrf.mxu0
    %3172 = vdwg.mxu0
    %3173 = vmatpush.bf16.msra.mxu0 %v1285
    %3174 = vmatpush.bf16.msra.mxu0 %v1277
    %3175 = vmatpush.bf16.msra.mxu0 %v1269
    %3176 = vmatpush.bf16.msra.mxu0 %v1261
    %3177 = vmatpush.bf16.msra.mxu0 %v1253
    %3178 = vmatpush.bf16.msra.mxu0 %v1245
    %3179 = vmatpush.bf16.msra.mxu0 %v1237
    %3180 = vmatpush.bf16.msra.mxu0 %v1229
    %3181 = vmatmul.bf16.gmra.mxu0 %v3014
    %v3182 = vpop.f32.mrf.mxu0
    %v3183 = vadd.f32 %v3170, %v3182
    %v3184 = vpop.f32.mrf.mxu0
    %3185 = vdwg.mxu0
    %3186 = vmatpush.bf16.msra.mxu0 %v1222
    %3187 = vmatpush.bf16.msra.mxu0 %v1214
    %3188 = vmatpush.bf16.msra.mxu0 %v1206
    %3189 = vmatpush.bf16.msra.mxu0 %v1198
    %3190 = vmatpush.bf16.msra.mxu0 %v1190
    %3191 = vmatpush.bf16.msra.mxu0 %v1182
    %3192 = vmatpush.bf16.msra.mxu0 %v1174
    %3193 = vmatpush.bf16.msra.mxu0 %v1166
    %3194 = vmatmul.bf16.gmra.mxu0 %v3013
    %v3195 = vpop.f32.mrf.mxu0
    %v3196 = vadd.f32 0.0, %v3195
    %v3197 = vpop.f32.mrf.mxu0
    %3198 = vdwg.mxu0
    %3199 = vmatpush.bf16.msra.mxu0 %v1286
    %3200 = vmatpush.bf16.msra.mxu0 %v1278
    %3201 = vmatpush.bf16.msra.mxu0 %v1270
    %3202 = vmatpush.bf16.msra.mxu0 %v1262
    %3203 = vmatpush.bf16.msra.mxu0 %v1254
    %3204 = vmatpush.bf16.msra.mxu0 %v1246
    %3205 = vmatpush.bf16.msra.mxu0 %v1238
    %3206 = vmatpush.bf16.msra.mxu0 %v1230
    %3207 = vmatmul.bf16.gmra.mxu0 %v3014
    %v3208 = vpop.f32.mrf.mxu0
    %v3209 = vadd.f32 %v3196, %v3208
    %v3210 = vpop.f32.mrf.mxu0
    %3211 = vdwg.mxu0
    %3212 = vmatpush.bf16.msra.mxu0 %v1223
    %3213 = vmatpush.bf16.msra.mxu0 %v1215
    %3214 = vmatpush.bf16.msra.mxu0 %v1207
    %3215 = vmatpush.bf16.msra.mxu0 %v1199
    %3216 = vmatpush.bf16.msra.mxu0 %v1191
    %3217 = vmatpush.bf16.msra.mxu0 %v1183
    %3218 = vmatpush.bf16.msra.mxu0 %v1175
    %3219 = vmatpush.bf16.msra.mxu0 %v1167
    %3220 = vmatmul.bf16.gmra.mxu0 %v3013
    %v3221 = vpop.f32.mrf.mxu0
    %v3222 = vadd.f32 0.0, %v3221
    %v3223 = vpop.f32.mrf.mxu0
    %3224 = vdwg.mxu0
    %3225 = vmatpush.bf16.msra.mxu0 %v1287
    %3226 = vmatpush.bf16.msra.mxu0 %v1279
    %3227 = vmatpush.bf16.msra.mxu0 %v1271
    %3228 = vmatpush.bf16.msra.mxu0 %v1263
    %3229 = vmatpush.bf16.msra.mxu0 %v1255
    %3230 = vmatpush.bf16.msra.mxu0 %v1247
    %3231 = vmatpush.bf16.msra.mxu0 %v1239
    %3232 = vmatpush.bf16.msra.mxu0 %v1231
    %3233 = vmatmul.bf16.gmra.mxu0 %v3014
    %v3234 = vpop.f32.mrf.mxu0
    %v3235 = vadd.f32 %v3222, %v3234
    %v3236 = vpop.f32.mrf.mxu0
    %3237 = vdwg.mxu0
    %v3238 = vadd.f32 %v3022, %v3053
    %v3239 = vadd.f32 %v3023, %v3079
    %v3240 = vadd.f32 %v3024, %v3105
    %v3241 = vadd.f32 %v3025, %v3131
    %v3242 = vadd.f32 %v3026, %v3157
    %v3243 = vadd.f32 %v3027, %v3183
    %v3244 = vadd.f32 %v3028, %v3209
    %v3245 = vadd.f32 %v3029, %v3235
    %v3246 = vmul.f32 %v3238, 0.5
    %v3247 = vmul.f32 %v3239, 0.5
    %v3248 = vtanh.pop %v3246
    %v3249 = vtanh.pop %v3247
    %v3250 = vmul.f32 %v3248, 0.5
    %v3251 = vmul.f32 %v3249, 0.5
    %v3252 = vadd.f32 %v3250, 0.5
    %v3253 = vadd.f32 %v3251, 0.5
    %v3254 = vmul.f32 %v3240, 0.5
    %v3255 = vmul.f32 %v3241, 0.5
    %v3256 = vtanh.pop %v3254
    %v3257 = vtanh.pop %v3255
    %v3258 = vmul.f32 %v3256, 0.5
    %v3259 = vmul.f32 %v3257, 0.5
    %v3260 = vadd.f32 %v3258, 0.5
    %v3261 = vadd.f32 %v3259, 0.5
    %v3262 = vtanh.pop %v3242
    %v3263 = vtanh.pop %v3243
    %v3264 = vmul.f32 %v3244, 0.5
    %v3265 = vmul.f32 %v3245, 0.5
    %v3266 = vtanh.pop %v3264
    %v3267 = vtanh.pop %v3265
    %v3268 = vmul.f32 %v3266, 0.5
    %v3269 = vmul.f32 %v3267, 0.5
    %v3270 = vadd.f32 %v3268, 0.5
    %v3271 = vadd.f32 %v3269, 0.5
    %v3272 = vmul.f32 %v3260, %v3007
    %v3273 = vmul.f32 %v3261, %v3008
    %v3274 = vmul.f32 %v3252, %v3262
    %v3275 = vmul.f32 %v3253, %v3263
    %v3276 = vadd.f32 %v3272, %v3274
    %v3277 = vadd.f32 %v3273, %v3275
    %v3278 = vtanh.pop %v3276
    %v3279 = vtanh.pop %v3277
    %v3280 = vmul.f32 %v3270, %v3278
    %v3281 = vmul.f32 %v3271, %v3279
    %v3282 = vpack.c.bf16 %v3280, %v3280
    %v3283 = vpack.c.bf16 %v3281, %v3281
    %s3284 = smul.u32 7, 8
    %s3285 = smul.addr %s3284, 4
    %s3286 = scalar_lea.vmem [#allocation2], %s3285
    %v3287 = vld [vmem:[%s3286] sm:$0xff]
    %v3288 = vld [vmem:[%s3286 + $0x8] sm:$0xff]
    %v3289 = vld [vmem:[%s3286 + $0x10] sm:$0xff]
    %v3290 = vld [vmem:[%s3286 + $0x18] sm:$0xff]
    %v3291 = vunpack.c.l.bf16 %v3287
    %v3292 = vunpack.c.h.bf16 %v3287
    %v3293 = vunpack.c.l.bf16 %v3288
    %v3294 = vunpack.c.h.bf16 %v3288
    %v3295 = vunpack.c.l.bf16 %v3289
    %v3296 = vunpack.c.h.bf16 %v3289
    %v3297 = vunpack.c.l.bf16 %v3290
    %v3298 = vunpack.c.h.bf16 %v3290
    %3299 = vmatpush.bf16.msra.mxu0 %v1216
    %3300 = vmatpush.bf16.msra.mxu0 %v1208
    %3301 = vmatpush.bf16.msra.mxu0 %v1200
    %3302 = vmatpush.bf16.msra.mxu0 %v1192
    %3303 = vmatpush.bf16.msra.mxu0 %v1184
    %3304 = vmatpush.bf16.msra.mxu0 %v1176
    %3305 = vmatpush.bf16.msra.mxu0 %v1168
    %3306 = vmatpush.bf16.msra.mxu0 %v1160
    %3307 = vmatmul.bf16.gmra.mxu0 %v3282
    %v3308 = vpop.f32.mrf.mxu0
    %v3309 = vadd.f32 0.0, %v3308
    %v3310 = vpop.f32.mrf.mxu0
    %3311 = vdwg.mxu0
    %3312 = vmatpush.bf16.msra.mxu0 %v1280
    %3313 = vmatpush.bf16.msra.mxu0 %v1272
    %3314 = vmatpush.bf16.msra.mxu0 %v1264
    %3315 = vmatpush.bf16.msra.mxu0 %v1256
    %3316 = vmatpush.bf16.msra.mxu0 %v1248
    %3317 = vmatpush.bf16.msra.mxu0 %v1240
    %3318 = vmatpush.bf16.msra.mxu0 %v1232
    %3319 = vmatpush.bf16.msra.mxu0 %v1224
    %3320 = vmatmul.bf16.gmra.mxu0 %v3283
    %v3321 = vpop.f32.mrf.mxu0
    %v3322 = vadd.f32 %v3309, %v3321
    %v3323 = vpop.f32.mrf.mxu0
    %3324 = vdwg.mxu0
    %3325 = vmatpush.bf16.msra.mxu0 %v1217
    %3326 = vmatpush.bf16.msra.mxu0 %v1209
    %3327 = vmatpush.bf16.msra.mxu0 %v1201
    %3328 = vmatpush.bf16.msra.mxu0 %v1193
    %3329 = vmatpush.bf16.msra.mxu0 %v1185
    %3330 = vmatpush.bf16.msra.mxu0 %v1177
    %3331 = vmatpush.bf16.msra.mxu0 %v1169
    %3332 = vmatpush.bf16.msra.mxu0 %v1161
    %3333 = vmatmul.bf16.gmra.mxu0 %v3282
    %v3334 = vpop.f32.mrf.mxu0
    %v3335 = vadd.f32 0.0, %v3334
    %v3336 = vpop.f32.mrf.mxu0
    %3337 = vdwg.mxu0
    %3338 = vmatpush.bf16.msra.mxu0 %v1281
    %3339 = vmatpush.bf16.msra.mxu0 %v1273
    %3340 = vmatpush.bf16.msra.mxu0 %v1265
    %3341 = vmatpush.bf16.msra.mxu0 %v1257
    %3342 = vmatpush.bf16.msra.mxu0 %v1249
    %3343 = vmatpush.bf16.msra.mxu0 %v1241
    %3344 = vmatpush.bf16.msra.mxu0 %v1233
    %3345 = vmatpush.bf16.msra.mxu0 %v1225
    %3346 = vmatmul.bf16.gmra.mxu0 %v3283
    %v3347 = vpop.f32.mrf.mxu0
    %v3348 = vadd.f32 %v3335, %v3347
    %v3349 = vpop.f32.mrf.mxu0
    %3350 = vdwg.mxu0
    %3351 = vmatpush.bf16.msra.mxu0 %v1218
    %3352 = vmatpush.bf16.msra.mxu0 %v1210
    %3353 = vmatpush.bf16.msra.mxu0 %v1202
    %3354 = vmatpush.bf16.msra.mxu0 %v1194
    %3355 = vmatpush.bf16.msra.mxu0 %v1186
    %3356 = vmatpush.bf16.msra.mxu0 %v1178
    %3357 = vmatpush.bf16.msra.mxu0 %v1170
    %3358 = vmatpush.bf16.msra.mxu0 %v1162
    %3359 = vmatmul.bf16.gmra.mxu0 %v3282
    %v3360 = vpop.f32.mrf.mxu0
    %v3361 = vadd.f32 0.0, %v3360
    %v3362 = vpop.f32.mrf.mxu0
    %3363 = vdwg.mxu0
    %3364 = vmatpush.bf16.msra.mxu0 %v1282
    %3365 = vmatpush.bf16.msra.mxu0 %v1274
    %3366 = vmatpush.bf16.msra.mxu0 %v1266
    %3367 = vmatpush.bf16.msra.mxu0 %v1258
    %3368 = vmatpush.bf16.msra.mxu0 %v1250
    %3369 = vmatpush.bf16.msra.mxu0 %v1242
    %3370 = vmatpush.bf16.msra.mxu0 %v1234
    %3371 = vmatpush.bf16.msra.mxu0 %v1226
    %3372 = vmatmul.bf16.gmra.mxu0 %v3283
    %v3373 = vpop.f32.mrf.mxu0
    %v3374 = vadd.f32 %v3361, %v3373
    %v3375 = vpop.f32.mrf.mxu0
    %3376 = vdwg.mxu0
    %3377 = vmatpush.bf16.msra.mxu0 %v1219
    %3378 = vmatpush.bf16.msra.mxu0 %v1211
    %3379 = vmatpush.bf16.msra.mxu0 %v1203
    %3380 = vmatpush.bf16.msra.mxu0 %v1195
    %3381 = vmatpush.bf16.msra.mxu0 %v1187
    %3382 = vmatpush.bf16.msra.mxu0 %v1179
    %3383 = vmatpush.bf16.msra.mxu0 %v1171
    %3384 = vmatpush.bf16.msra.mxu0 %v1163
    %3385 = vmatmul.bf16.gmra.mxu0 %v3282
    %v3386 = vpop.f32.mrf.mxu0
    %v3387 = vadd.f32 0.0, %v3386
    %v3388 = vpop.f32.mrf.mxu0
    %3389 = vdwg.mxu0
    %3390 = vmatpush.bf16.msra.mxu0 %v1283
    %3391 = vmatpush.bf16.msra.mxu0 %v1275
    %3392 = vmatpush.bf16.msra.mxu0 %v1267
    %3393 = vmatpush.bf16.msra.mxu0 %v1259
    %3394 = vmatpush.bf16.msra.mxu0 %v1251
    %3395 = vmatpush.bf16.msra.mxu0 %v1243
    %3396 = vmatpush.bf16.msra.mxu0 %v1235
    %3397 = vmatpush.bf16.msra.mxu0 %v1227
    %3398 = vmatmul.bf16.gmra.mxu0 %v3283
    %v3399 = vpop.f32.mrf.mxu0
    %v3400 = vadd.f32 %v3387, %v3399
    %v3401 = vpop.f32.mrf.mxu0
    %3402 = vdwg.mxu0
    %3403 = vmatpush.bf16.msra.mxu0 %v1220
    %3404 = vmatpush.bf16.msra.mxu0 %v1212
    %3405 = vmatpush.bf16.msra.mxu0 %v1204
    %3406 = vmatpush.bf16.msra.mxu0 %v1196
    %3407 = vmatpush.bf16.msra.mxu0 %v1188
    %3408 = vmatpush.bf16.msra.mxu0 %v1180
    %3409 = vmatpush.bf16.msra.mxu0 %v1172
    %3410 = vmatpush.bf16.msra.mxu0 %v1164
    %3411 = vmatmul.bf16.gmra.mxu0 %v3282
    %v3412 = vpop.f32.mrf.mxu0
    %v3413 = vadd.f32 0.0, %v3412
    %v3414 = vpop.f32.mrf.mxu0
    %3415 = vdwg.mxu0
    %3416 = vmatpush.bf16.msra.mxu0 %v1284
    %3417 = vmatpush.bf16.msra.mxu0 %v1276
    %3418 = vmatpush.bf16.msra.mxu0 %v1268
    %3419 = vmatpush.bf16.msra.mxu0 %v1260
    %3420 = vmatpush.bf16.msra.mxu0 %v1252
    %3421 = vmatpush.bf16.msra.mxu0 %v1244
    %3422 = vmatpush.bf16.msra.mxu0 %v1236
    %3423 = vmatpush.bf16.msra.mxu0 %v1228
    %3424 = vmatmul.bf16.gmra.mxu0 %v3283
    %v3425 = vpop.f32.mrf.mxu0
    %v3426 = vadd.f32 %v3413, %v3425
    %v3427 = vpop.f32.mrf.mxu0
    %3428 = vdwg.mxu0
    %3429 = vmatpush.bf16.msra.mxu0 %v1221
    %3430 = vmatpush.bf16.msra.mxu0 %v1213
    %3431 = vmatpush.bf16.msra.mxu0 %v1205
    %3432 = vmatpush.bf16.msra.mxu0 %v1197
    %3433 = vmatpush.bf16.msra.mxu0 %v1189
    %3434 = vmatpush.bf16.msra.mxu0 %v1181
    %3435 = vmatpush.bf16.msra.mxu0 %v1173
    %3436 = vmatpush.bf16.msra.mxu0 %v1165
    %3437 = vmatmul.bf16.gmra.mxu0 %v3282
    %v3438 = vpop.f32.mrf.mxu0
    %v3439 = vadd.f32 0.0, %v3438
    %v3440 = vpop.f32.mrf.mxu0
    %3441 = vdwg.mxu0
    %3442 = vmatpush.bf16.msra.mxu0 %v1285
    %3443 = vmatpush.bf16.msra.mxu0 %v1277
    %3444 = vmatpush.bf16.msra.mxu0 %v1269
    %3445 = vmatpush.bf16.msra.mxu0 %v1261
    %3446 = vmatpush.bf16.msra.mxu0 %v1253
    %3447 = vmatpush.bf16.msra.mxu0 %v1245
    %3448 = vmatpush.bf16.msra.mxu0 %v1237
    %3449 = vmatpush.bf16.msra.mxu0 %v1229
    %3450 = vmatmul.bf16.gmra.mxu0 %v3283
    %v3451 = vpop.f32.mrf.mxu0
    %v3452 = vadd.f32 %v3439, %v3451
    %v3453 = vpop.f32.mrf.mxu0
    %3454 = vdwg.mxu0
    %3455 = vmatpush.bf16.msra.mxu0 %v1222
    %3456 = vmatpush.bf16.msra.mxu0 %v1214
    %3457 = vmatpush.bf16.msra.mxu0 %v1206
    %3458 = vmatpush.bf16.msra.mxu0 %v1198
    %3459 = vmatpush.bf16.msra.mxu0 %v1190
    %3460 = vmatpush.bf16.msra.mxu0 %v1182
    %3461 = vmatpush.bf16.msra.mxu0 %v1174
    %3462 = vmatpush.bf16.msra.mxu0 %v1166
    %3463 = vmatmul.bf16.gmra.mxu0 %v3282
    %v3464 = vpop.f32.mrf.mxu0
    %v3465 = vadd.f32 0.0, %v3464
    %v3466 = vpop.f32.mrf.mxu0
    %3467 = vdwg.mxu0
    %3468 = vmatpush.bf16.msra.mxu0 %v1286
    %3469 = vmatpush.bf16.msra.mxu0 %v1278
    %3470 = vmatpush.bf16.msra.mxu0 %v1270
    %3471 = vmatpush.bf16.msra.mxu0 %v1262
    %3472 = vmatpush.bf16.msra.mxu0 %v1254
    %3473 = vmatpush.bf16.msra.mxu0 %v1246
    %3474 = vmatpush.bf16.msra.mxu0 %v1238
    %3475 = vmatpush.bf16.msra.mxu0 %v1230
    %3476 = vmatmul.bf16.gmra.mxu0 %v3283
    %v3477 = vpop.f32.mrf.mxu0
    %v3478 = vadd.f32 %v3465, %v3477
    %v3479 = vpop.f32.mrf.mxu0
    %3480 = vdwg.mxu0
    %3481 = vmatpush.bf16.msra.mxu0 %v1223
    %3482 = vmatpush.bf16.msra.mxu0 %v1215
    %3483 = vmatpush.bf16.msra.mxu0 %v1207
    %3484 = vmatpush.bf16.msra.mxu0 %v1199
    %3485 = vmatpush.bf16.msra.mxu0 %v1191
    %3486 = vmatpush.bf16.msra.mxu0 %v1183
    %3487 = vmatpush.bf16.msra.mxu0 %v1175
    %3488 = vmatpush.bf16.msra.mxu0 %v1167
    %3489 = vmatmul.bf16.gmra.mxu0 %v3282
    %v3490 = vpop.f32.mrf.mxu0
    %v3491 = vadd.f32 0.0, %v3490
    %v3492 = vpop.f32.mrf.mxu0
    %3493 = vdwg.mxu0
    %3494 = vmatpush.bf16.msra.mxu0 %v1287
    %3495 = vmatpush.bf16.msra.mxu0 %v1279
    %3496 = vmatpush.bf16.msra.mxu0 %v1271
    %3497 = vmatpush.bf16.msra.mxu0 %v1263
    %3498 = vmatpush.bf16.msra.mxu0 %v1255
    %3499 = vmatpush.bf16.msra.mxu0 %v1247
    %3500 = vmatpush.bf16.msra.mxu0 %v1239
    %3501 = vmatpush.bf16.msra.mxu0 %v1231
    %3502 = vmatmul.bf16.gmra.mxu0 %v3283
    %v3503 = vpop.f32.mrf.mxu0
    %v3504 = vadd.f32 %v3491, %v3503
    %v3505 = vpop.f32.mrf.mxu0
    %3506 = vdwg.mxu0
    %v3507 = vadd.f32 %v3291, %v3322
    %v3508 = vadd.f32 %v3292, %v3348
    %v3509 = vadd.f32 %v3293, %v3374
    %v3510 = vadd.f32 %v3294, %v3400
    %v3511 = vadd.f32 %v3295, %v3426
    %v3512 = vadd.f32 %v3296, %v3452
    %v3513 = vadd.f32 %v3297, %v3478
    %v3514 = vadd.f32 %v3298, %v3504
    %v3515 = vmul.f32 %v3507, 0.5
    %v3516 = vmul.f32 %v3508, 0.5
    %v3517 = vtanh.pop %v3515
    %v3518 = vtanh.pop %v3516
    %v3519 = vmul.f32 %v3517, 0.5
    %v3520 = vmul.f32 %v3518, 0.5
    %v3521 = vadd.f32 %v3519, 0.5
    %v3522 = vadd.f32 %v3520, 0.5
    %v3523 = vmul.f32 %v3509, 0.5
    %v3524 = vmul.f32 %v3510, 0.5
    %v3525 = vtanh.pop %v3523
    %v3526 = vtanh.pop %v3524
    %v3527 = vmul.f32 %v3525, 0.5
    %v3528 = vmul.f32 %v3526, 0.5
    %v3529 = vadd.f32 %v3527, 0.5
    %v3530 = vadd.f32 %v3528, 0.5
    %v3531 = vtanh.pop %v3511
    %v3532 = vtanh.pop %v3512
    %v3533 = vmul.f32 %v3513, 0.5
    %v3534 = vmul.f32 %v3514, 0.5
    %v3535 = vtanh.pop %v3533
    %v3536 = vtanh.pop %v3534
    %v3537 = vmul.f32 %v3535, 0.5
    %v3538 = vmul.f32 %v3536, 0.5
    %v3539 = vadd.f32 %v3537, 0.5
    %v3540 = vadd.f32 %v3538, 0.5
    %v3541 = vmul.f32 %v3529, %v3276
    %v3542 = vmul.f32 %v3530, %v3277
    %v3543 = vmul.f32 %v3521, %v3531
    %v3544 = vmul.f32 %v3522, %v3532
    %v3545 = vadd.f32 %v3541, %v3543
    %v3546 = vadd.f32 %v3542, %v3544
    %v3547 = vtanh.pop %v3545
    %v3548 = vtanh.pop %v3546
    %v3549 = vmul.f32 %v3539, %v3547
    %v3550 = vmul.f32 %v3540, %v3548
    %v3551 = vpack.c.bf16 %v3550, %v3549
    %3552 = vst [vmem:[#allocation3] sm:$0xff] %v3551
    %3553 = vst [vmem:[#allocation4] sm:$0xff] %v3545
    %3554 = vst [vmem:[#allocation4 + $0x8] sm:$0xff] %v3546
    // Predicated region
    $region42: #{jcs_lite_forward.1} parent=1 // pred_check
      %p3555 = pneg %p69
    $region43: #{jcs_lite_forward.1} parent=1 // pred_check_branch
      %3557 = sbr.rel (%p3555) target = $region45
    $region44: #{jcs_lite_forward.1} parent=1 // pred_region
      %v3558 = vld [vmem:[#allocation3] sm:$0xff]
      %v3559 = vld [vmem:[%s4] sm:$0xf]
      %v3560 = vld [vmem:[%s4 + $0x4] sm:$0xf]
      %v3561 = vld [vmem:[%s4 + $0x8] sm:$0xf]
      %v3562 = vld [vmem:[%s4 + $0xc] sm:$0xf]
      %v3563 = vld [vmem:[%s4 + $0x10] sm:$0xf]
      %v3564 = vld [vmem:[%s4 + $0x14] sm:$0xf]
      %v3565 = vld [vmem:[%s4 + $0x18] sm:$0xf]
      %v3566 = vld [vmem:[%s4 + $0x1c] sm:$0xf]
      %v3567 = vld [vmem:[%s4 + $0x20] sm:$0xf]
      %v3568 = vld [vmem:[%s4 + $0x24] sm:$0xf]
      %v3569 = vld [vmem:[%s4 + $0x28] sm:$0xf]
      %v3570 = vld [vmem:[%s4 + $0x2c] sm:$0xf]
      %v3571 = vld [vmem:[%s4 + $0x30] sm:$0xf]
      %v3572 = vld [vmem:[%s4 + $0x34] sm:$0xf]
      %v3573 = vld [vmem:[%s4 + $0x38] sm:$0xf]
      %v3574 = vld [vmem:[%s4 + $0x3c] sm:$0xf]
      %v3575 = vld [vmem:[%s4 + $0x40] sm:$0xf]
      %v3576 = vld [vmem:[%s4 + $0x44] sm:$0xf]
      %v3577 = vld [vmem:[%s4 + $0x48] sm:$0xf]
      %v3578 = vld [vmem:[%s4 + $0x4c] sm:$0xf]
      %v3579 = vld [vmem:[%s4 + $0x50] sm:$0xf]
      %v3580 = vld [vmem:[%s4 + $0x54] sm:$0xf]
      %v3581 = vld [vmem:[%s4 + $0x58] sm:$0xf]
      %v3582 = vld [vmem:[%s4 + $0x5c] sm:$0xf]
      %v3583 = vld [vmem:[%s4 + $0x60] sm:$0xf]
      %v3584 = vld [vmem:[%s4 + $0x64] sm:$0xf]
      %v3585 = vld [vmem:[%s4 + $0x68] sm:$0xf]
      %v3586 = vld [vmem:[%s4 + $0x6c] sm:$0xf]
      %v3587 = vld [vmem:[%s4 + $0x70] sm:$0xf]
      %v3588 = vld [vmem:[%s4 + $0x74] sm:$0xf]
      %v3589 = vld [vmem:[%s4 + $0x78] sm:$0xf]
      %v3590 = vld [vmem:[%s4 + $0x7c] sm:$0xf]
      %v3591 = vld [vmem:[%s5] sm:$0x1]
      %v3593 = vperm.slane %v3591, 0
      %v3596 = vunpack.c.l.b16 %v3558
      %v3597 = vunpack.c.h.b16 %v3558
      %v3598 = vpack.c.b16 %v3596, %v3596
      %v3599 = vpack.c.b16 %v3597, %v3597
      %v3634 = vunpack.c.l.b16 %v3559
      %v3635 = vunpack.c.l.b16 %v3560
      %v3636 = vunpack.c.l.b16 %v3561
      %v3637 = vunpack.c.l.b16 %v3562
      %v3638 = vunpack.c.l.b16 %v3563
      %v3639 = vunpack.c.l.b16 %v3564
      %v3640 = vunpack.c.l.b16 %v3565
      %v3641 = vunpack.c.l.b16 %v3566
      %v3642 = vunpack.c.l.b16 %v3567
      %v3643 = vunpack.c.l.b16 %v3568
      %v3644 = vunpack.c.l.b16 %v3569
      %v3645 = vunpack.c.l.b16 %v3570
      %v3646 = vunpack.c.l.b16 %v3571
      %v3647 = vunpack.c.l.b16 %v3572
      %v3648 = vunpack.c.l.b16 %v3573
      %v3649 = vunpack.c.l.b16 %v3574
      %v3650 = vunpack.c.l.b16 %v3575
      %v3651 = vunpack.c.l.b16 %v3576
      %v3652 = vunpack.c.l.b16 %v3577
      %v3653 = vunpack.c.l.b16 %v3578
      %v3654 = vunpack.c.l.b16 %v3579
      %v3655 = vunpack.c.l.b16 %v3580
      %v3656 = vunpack.c.l.b16 %v3581
      %v3657 = vunpack.c.l.b16 %v3582
      %v3658 = vunpack.c.l.b16 %v3583
      %v3659 = vunpack.c.l.b16 %v3584
      %v3660 = vunpack.c.l.b16 %v3585
      %v3661 = vunpack.c.l.b16 %v3586
      %v3662 = vunpack.c.l.b16 %v3587
      %v3663 = vunpack.c.l.b16 %v3588
      %v3664 = vunpack.c.l.b16 %v3589
      %v3665 = vunpack.c.l.b16 %v3590
      %v3666 = vpack.c.b16 %v3635, %v3634
      %v3667 = vpack.c.b16 %v3637, %v3636
      %v3668 = vpack.c.b16 %v3639, %v3638
      %v3669 = vpack.c.b16 %v3641, %v3640
      %v3670 = vpack.c.b16 %v3643, %v3642
      %v3671 = vpack.c.b16 %v3645, %v3644
      %v3672 = vpack.c.b16 %v3647, %v3646
      %v3673 = vpack.c.b16 %v3649, %v3648
      %v3674 = vpack.c.b16 %v3651, %v3650
      %v3675 = vpack.c.b16 %v3653, %v3652
      %v3676 = vpack.c.b16 %v3655, %v3654
      %v3677 = vpack.c.b16 %v3657, %v3656
      %v3678 = vpack.c.b16 %v3659, %v3658
      %v3679 = vpack.c.b16 %v3661, %v3660
      %v3680 = vpack.c.b16 %v3663, %v3662
      %v3681 = vpack.c.b16 %v3665, %v3664
      %3698 = vmatpush.bf16.msra.mxu0 %v3673
      %3699 = vmatpush.bf16.msra.mxu0 %v3672
      %3700 = vmatpush.bf16.msra.mxu0 %v3671
      %3701 = vmatpush.bf16.msra.mxu0 %v3670
      %3702 = vmatpush.bf16.msra.mxu0 %v3669
      %3703 = vmatpush.bf16.msra.mxu0 %v3668
      %3704 = vmatpush.bf16.msra.mxu0 %v3667
      %3705 = vmatpush.bf16.msra.mxu0 %v3666
      %3706 = vmatmul.bf16.gmra.mxu0 %v3598
      %v3707 = vpop.f32.mrf.mxu0
      %v3708 = vadd.f32 %v3593, %v3707
      %v3709 = vpop.f32.mrf.mxu0
      %3710 = vdwg.mxu0
      %3711 = vmatpush.bf16.msra.mxu0 %v3681
      %3712 = vmatpush.bf16.msra.mxu0 %v3680
      %3713 = vmatpush.bf16.msra.mxu0 %v3679
      %3714 = vmatpush.bf16.msra.mxu0 %v3678
      %3715 = vmatpush.bf16.msra.mxu0 %v3677
      %3716 = vmatpush.bf16.msra.mxu0 %v3676
      %3717 = vmatpush.bf16.msra.mxu0 %v3675
      %3718 = vmatpush.bf16.msra.mxu0 %v3674
      %3719 = vmatmul.bf16.gmra.mxu0 %v3599
      %v3720 = vpop.f32.mrf.mxu0
      %v3721 = vadd.f32 %v3708, %v3720
      %v3722 = vpop.f32.mrf.mxu0
      %3723 = vdwg.mxu0
      %3724 = vst [vmem:[%s6] sm:$0xff] %v3721
    $region45: #{jcs_lite_forward.1} parent=1 // pred_fallthru
      _
    // Predicated region
    $region46: #{jcs_lite_forward.1} parent=1 // pred_check
      _
    $region47: #{jcs_lite_forward.1} parent=1 // pred_check_branch
      %3726 = sbr.rel (0) target = $region49
    $region48: #{jcs_lite_forward.1} parent=1 // pred_region
      _
    $region49: #{jcs_lite_forward.1} parent=1 // pred_fallthru
      _
    // Predicated region
    $region50: #{jcs_lite_forward.1} parent=1 // pred_check
      _
    $region51: #{jcs_lite_forward.1} parent=1 // pred_check_branch
      %3728 = sbr.rel (0) target = $region53
    $region52: #{jcs_lite_forward.1} parent=1 // pred_region
      _
    $region53: #{jcs_lite_forward.1} parent=1 // pred_fallthru
      _
    %3729 = vsyncpa [#allocation6], 1
    %3730 = vsyncpa [#allocation8], 1

</llo_original>
